<compile_context>
chip_gen: v7x
topology: tpu7x:2x2x1
jax: 0.10.0
libtpu: 0.0.40
codegen_flags: <defaults>
</compile_context>

<pallas_src>
import functools

import jax
import jax.numpy as jnp
from jax import lax
from jax.experimental import pallas as pl
from jax.experimental.pallas import tpu as pltpu


def _round_up(x: int, m: int) -> int:
    return (x + m - 1) // m * m


def _emb_ln_kernel(ids_ref,          # SMEM scalar-prefetch: (n_pad,) int32 token ids
                   tt_ref,           # VMEM (TM, 1) int32 token-type ids for this tile
                   word_hbm_ref,     # HBM  (V, H)  word-embedding table (pl.ANY)
                   type_ref,         # VMEM (T, H)  token-type table (resident)
                   gb_ref,           # VMEM (2, H)  [gamma; beta]      (resident)
                   out_ref,          # VMEM (TM, H) output tile
                   wbuf,             # VMEM (TM, H) scratch: gathered word rows
                   sems,             # DMA semaphores, shape (nchunks,)
                   *, eps: float, tm: int, nchunks: int):
    h = out_ref.shape[-1]
    ch = tm // nchunks
    base = pl.program_id(0) * tm

    # ---- 1) Issue all row-gather DMAs; chunk c's rows signal sems[c]. ------
    # All SMEM id reads happen here, before any .wait().
    for c in range(nchunks):                                    # static, small
        lo = c * ch

        def issue(r, carry, lo=lo, c=c):
            row = lo + r
            tok = ids_ref[base + row]
            pltpu.make_async_copy(
                word_hbm_ref.at[pl.ds(tok, 1), :],
                wbuf.at[pl.ds(row, 1), :],
                sems.at[c],
            ).start()
            return carry

        lax.fori_loop(0, ch, issue, 0, unroll=min(8, ch))

    # ---- 2) Token-type contribution + LN constants (overlaps the gathers) --
    tvals = type_ref[...].astype(jnp.float32)                   # (T, H), tiny
    n_types = tvals.shape[0]
    if n_types == 1:
        type_x = tvals                                          # (1,H) broadcasts
    elif n_types == 2:
        tt_f = tt_ref[...].astype(jnp.float32)                  # (TM, 1)
        type_x = tvals[0:1, :] + tt_f * (tvals[1:2, :] - tvals[0:1, :])
    else:
        tt = tt_ref[...]                                        # (TM, 1) int32
        type_x = jnp.where(tt == 0, tvals[0:1, :], jnp.zeros((), jnp.float32))
        for t in range(1, n_types):                             # T tiny & static
            type_x = jnp.where(tt == t, tvals[t:t + 1, :], type_x)

    gamma = gb_ref[0:1, :].astype(jnp.float32)                  # (1, H)
    beta = gb_ref[1:2, :].astype(jnp.float32)                   # (1, H)
    inv_h = 1.0 / float(h)

    # ---- 3) Per chunk: one aggregate wait, then add + LayerNorm + store. ---
    # While chunk c is being normalized, chunks c+1.. are still in flight.
    for c in range(nchunks):                                    # static, small
        lo = c * ch
        pltpu.make_async_copy(
            word_hbm_ref.at[pl.ds(0, ch), :],                   # size-only desc
            wbuf.at[pl.ds(lo, ch), :],
            sems.at[c],
        ).wait()

        tx = type_x if type_x.shape[0] == 1 else type_x[lo:lo + ch, :]
        x = wbuf[pl.ds(lo, ch), :].astype(jnp.float32) + tx     # (ch, H)

        mean = jnp.sum(x, axis=-1, keepdims=True) * inv_h
        xc = x - mean
        var = jnp.sum(xc * xc, axis=-1, keepdims=True) * inv_h
        y = xc * lax.rsqrt(var + eps) * gamma + beta
        out_ref[pl.ds(lo, ch), :] = y.astype(out_ref.dtype)     # lane-dense store


def bert_rope_embedding(input_ids, token_type_ids,
                        word_emb, type_emb, gamma, beta,
                        *, eps: float = 1e-12, block_tokens: int = 1024,
                        out_dtype=None):
    """input_ids/token_type_ids: int32 [B, S]; returns [B, S, H] (table dtype)."""
    B, S = input_ids.shape
    V, H = word_emb.shape
    assert H % 128 == 0, "hidden_size must be a multiple of 128 (lane width)"

    out_dtype = word_emb.dtype if out_dtype is None else out_dtype
    n_tok = B * S

    # Pick TM: prefer a multiple of 8 that divides B*S (no padding -> no
    # post-kernel slice copy); otherwise fall back to padding.
    cap = max(8, min(block_tokens, _round_up(n_tok, 8)))
    cap -= cap % 8
    tm = None
    for cand in range(cap, 7, -8):
        if n_tok % cand == 0:
            tm = cand
            break
    if tm is None:
        tm = cap
    n_pad = _round_up(n_tok, tm)
    grid = n_pad // tm

    # Number of gather chunks per tile (intra-step pipeline depth).
    nchunks = 1
    for cand in (8, 4, 2):
        if tm % (cand * 8) == 0:
            nchunks = cand
            break

    ids_flat = input_ids.reshape(n_tok).astype(jnp.int32)
    if token_type_ids is None:
        tt_flat = jnp.zeros((n_tok,), jnp.int32)
    else:
        tt_flat = token_type_ids.reshape(n_tok).astype(jnp.int32)
    if type_emb is None:
        type_emb = jnp.zeros((1, H), word_emb.dtype)

    pad = n_pad - n_tok
    if pad:
        ids_flat = jnp.pad(ids_flat, (0, pad))   # pad with id 0 (valid row)
        tt_flat = jnp.pad(tt_flat, (0, pad))
    tt_col = tt_flat.reshape(n_pad, 1)
    # TODO(synk): for very large B*S, chunk the SMEM id prefetch (1-D SMEM pads
    # to next_pow2(4*n_pad) bytes and can exceed SMEM capacity).

    gb = jnp.stack([gamma.reshape(H), beta.reshape(H)], axis=0)   # (2, H)
    T = type_emb.shape[0]

    # VMEM budget: wbuf + output double-buffer + small resident tables.
    isz_w = jnp.dtype(word_emb.dtype).itemsize
    isz_o = jnp.dtype(out_dtype).itemsize
    isz_t = jnp.dtype(type_emb.dtype).itemsize
    isz_g = jnp.dtype(gb.dtype).itemsize
    est = (tm * H * isz_w              # gathered-row scratch
           + 2 * tm * H * isz_o        # output double-buffer
           + 2 * tm * 4                # token-type id tiles
           + 2 * T * H * isz_t         # resident type table
           + 2 * 2 * H * isz_g)        # resident gamma/beta
    vmem_limit = int(min(64 << 20, max(16 << 20, 2 * est)))

    grid_spec = pltpu.PrefetchScalarGridSpec(
        num_scalar_prefetch=1,                   # token ids land in SMEM
        grid=(grid,),
        in_specs=[
            pl.BlockSpec((tm, 1), lambda i, ids: (i, 0)),    # token-type ids tile
            pl.BlockSpec(memory_space=pl.ANY),               # word table stays in HBM
            pl.BlockSpec((T, H), lambda i, ids: (0, 0)),     # type table resident
            pl.BlockSpec((2, H), lambda i, ids: (0, 0)),     # [gamma; beta] resident
        ],
        out_specs=pl.BlockSpec((tm, H), lambda i, ids: (i, 0)),
        scratch_shapes=[
            pltpu.VMEM((tm, H), word_emb.dtype),             # gathered word rows
            pltpu.SemaphoreType.DMA((nchunks,)),             # per-chunk gather sems
        ],
    )

    out_flat = pl.pallas_call(
        functools.partial(_emb_ln_kernel, eps=eps, tm=tm, nchunks=nchunks),
        grid_spec=grid_spec,
        out_shape=jax.ShapeDtypeStruct((n_pad, H), out_dtype),
        compiler_params=pltpu.CompilerParams(
            dimension_semantics=("parallel",),   # disjoint tiles, no cross-step state
            vmem_limit_bytes=vmem_limit),
    )(ids_flat, tt_col, word_emb, type_emb, gb)

    if pad:
        out_flat = out_flat[:n_tok]
    return out_flat.reshape(B, S, H)


def _reference(input_ids, token_type_ids, word_emb, type_emb, gamma, beta, eps):
    x = word_emb[input_ids] + type_emb[token_type_ids]
    mean = jnp.mean(x, axis=-1, keepdims=True)
    var = jnp.mean((x - mean) ** 2, axis=-1, keepdims=True)
    return (x - mean) * lax.rsqrt(var + eps) * gamma + beta


if __name__ == "__main__":
    # Small, module-consistent config.
    vocab_size = 64
    type_vocab_size = 2
    hidden_size = 128          # lane-width aligned
    layer_norm_eps = 1e-12
    batch, seq = 2, 32

    key = jax.random.PRNGKey(0)
    k_ids, k_tt, k_w, k_t, k_g, k_b = jax.random.split(key, 6)

    input_ids = jax.random.randint(k_ids, (batch, seq), 0, vocab_size, jnp.int32)
    token_type_ids = jax.random.randint(k_tt, (batch, seq), 0, type_vocab_size,
                                        jnp.int32)

    word_emb = jax.random.normal(k_w, (vocab_size, hidden_size), jnp.float32) * 0.02
    type_emb = jax.random.normal(k_t, (type_vocab_size, hidden_size), jnp.float32) * 0.02
    gamma = 1.0 + 0.01 * jax.random.normal(k_g, (hidden_size,), jnp.float32)
    beta = 0.01 * jax.random.normal(k_b, (hidden_size,), jnp.float32)

    # block_tokens=32 -> tm=32 (divides B*S=64, so no padding/no slice copy),
    # grid=2, and 4 chunks of 8 rows per tile (exercises the chunked pipeline).
    out = bert_rope_embedding(input_ids, token_type_ids,
                              word_emb, type_emb, gamma, beta,
                              eps=layer_norm_eps, block_tokens=32)
    out = jax.block_until_ready(out)

    ref = _reference(input_ids, token_type_ids, word_emb, type_emb,
                     gamma, beta, layer_norm_eps)
    assert out.shape == (batch, seq, hidden_size)
    assert out.dtype == word_emb.dtype
    assert jnp.allclose(out.astype(jnp.float32), ref, atol=1e-4, rtol=1e-4), \
        "mismatch vs reference"

    print("KERNEL_OK")
</pallas_src>

<mosaic_0001>
module attributes {stable_mosaic.version = 11 : i64} {
  func.func @_emb_ln_kernel(%arg0: i32, %arg1: memref<64xi32, #tpu.memory_space<smem>>, %arg2: memref<32x1xi32, #tpu.memory_space<vmem>>, %arg3: memref<64x128xf32, #tpu.memory_space<any>>, %arg4: memref<2x128xf32, #tpu.memory_space<vmem>>, %arg5: memref<2x128xf32, #tpu.memory_space<vmem>>, %arg6: memref<32x128xf32, #tpu.memory_space<vmem>>, %arg7: memref<32x128xf32, #tpu.memory_space<vmem>>, %arg8: memref<4x!tpu.dma_semaphore, #tpu.memory_space<semaphore_mem>>) attributes {dimension_semantics = [#tpu.dimension_semantics<parallel>], iteration_bounds = array<i64: 2>, scalar_prefetch = 1 : i64, scratch_operands = 2 : i64, tpu.core_type = #tpu.core_type<tc>, window_params = [{transform_indices = @transform_0, window_bounds = array<i64: 32, 1>}, {}, {pipeline_mode = #tpu.pipeline_mode<synchronous>, transform_indices = @transform_2, window_bounds = array<i64: 2, 128>}, {pipeline_mode = #tpu.pipeline_mode<synchronous>, transform_indices = @transform_3, window_bounds = array<i64: 2, 128>}, {transform_indices = @transform_4, window_bounds = array<i64: 32, 128>}]} {
    %c32_i32 = arith.constant 32 : i32
    %0 = arith.muli %arg0, %c32_i32 : i32
    %c0_i32 = arith.constant 0 : i32
    %c0_i32_0 = arith.constant 0 : i32
    %1 = arith.addi %c0_i32_0, %c0_i32 : i32
    %2 = arith.addi %0, %1 : i32
    %3 = arith.index_cast %2 : i32 to index
    %4 = memref.load %arg1[%3] : memref<64xi32, #tpu.memory_space<smem>>
    %c0_i32_1 = arith.constant 0 : i32
    %c0_i32_2 = arith.constant 0 : i32
    %5 = tpu.memref_slice %arg3[%4, %c0_i32_2] : memref<64x128xf32, #tpu.memory_space<any>> -> memref<1x128xf32, #tpu.memory_space<any>>
    %c0_i32_3 = arith.constant 0 : i32
    %6 = tpu.memref_slice %arg7[%1, %c0_i32_3] : memref<32x128xf32, #tpu.memory_space<vmem>> -> memref<1x128xf32, #tpu.memory_space<vmem>>
    %7 = tpu.memref_slice %arg8[%c0_i32_1] : memref<4x!tpu.dma_semaphore, #tpu.memory_space<semaphore_mem>> -> memref<1x!tpu.dma_semaphore, #tpu.memory_space<semaphore_mem>>
    %8 = tpu.memref_squeeze %7 : memref<1x!tpu.dma_semaphore, #tpu.memory_space<semaphore_mem>> -> memref<!tpu.dma_semaphore, #tpu.memory_space<semaphore_mem>>
    tpu.enqueue_dma source(%5 : memref<1x128xf32, #tpu.memory_space<any>>) target(%6 : memref<1x128xf32, #tpu.memory_space<vmem>>) target_semaphore(%8 : memref<!tpu.dma_semaphore, #tpu.memory_space<semaphore_mem>>)
    %c1_i32 = arith.constant 1 : i32
    %c0_i32_4 = arith.constant 0 : i32
    %9 = arith.addi %c0_i32_4, %c1_i32 : i32
    %10 = arith.addi %0, %9 : i32
    %11 = arith.index_cast %10 : i32 to index
    %12 = memref.load %arg1[%11] : memref<64xi32, #tpu.memory_space<smem>>
    %c0_i32_5 = arith.constant 0 : i32
    %c0_i32_6 = arith.constant 0 : i32
    %13 = tpu.memref_slice %arg3[%12, %c0_i32_6] : memref<64x128xf32, #tpu.memory_space<any>> -> memref<1x128xf32, #tpu.memory_space<any>>
    %c0_i32_7 = arith.constant 0 : i32
    %14 = tpu.memref_slice %arg7[%9, %c0_i32_7] : memref<32x128xf32, #tpu.memory_space<vmem>> -> memref<1x128xf32, #tpu.memory_space<vmem>>
    %15 = tpu.memref_slice %arg8[%c0_i32_5] : memref<4x!tpu.dma_semaphore, #tpu.memory_space<semaphore_mem>> -> memref<1x!tpu.dma_semaphore, #tpu.memory_space<semaphore_mem>>
    %16 = tpu.memref_squeeze %15 : memref<1x!tpu.dma_semaphore, #tpu.memory_space<semaphore_mem>> -> memref<!tpu.dma_semaphore, #tpu.memory_space<semaphore_mem>>
    tpu.enqueue_dma source(%13 : memref<1x128xf32, #tpu.memory_space<any>>) target(%14 : memref<1x128xf32, #tpu.memory_space<vmem>>) target_semaphore(%16 : memref<!tpu.dma_semaphore, #tpu.memory_space<semaphore_mem>>)
    %c2_i32 = arith.constant 2 : i32
    %c0_i32_8 = arith.constant 0 : i32
    %17 = arith.addi %c0_i32_8, %c2_i32 : i32
    %18 = arith.addi %0, %17 : i32
    %19 = arith.index_cast %18 : i32 to index
    %20 = memref.load %arg1[%19] : memref<64xi32, #tpu.memory_space<smem>>
    %c0_i32_9 = arith.constant 0 : i32
    %c0_i32_10 = arith.constant 0 : i32
    %21 = tpu.memref_slice %arg3[%20, %c0_i32_10] : memref<64x128xf32, #tpu.memory_space<any>> -> memref<1x128xf32, #tpu.memory_space<any>>
    %c0_i32_11 = arith.constant 0 : i32
    %22 = tpu.memref_slice %arg7[%17, %c0_i32_11] : memref<32x128xf32, #tpu.memory_space<vmem>> -> memref<1x128xf32, #tpu.memory_space<vmem>>
    %23 = tpu.memref_slice %arg8[%c0_i32_9] : memref<4x!tpu.dma_semaphore, #tpu.memory_space<semaphore_mem>> -> memref<1x!tpu.dma_semaphore, #tpu.memory_space<semaphore_mem>>
    %24 = tpu.memref_squeeze %23 : memref<1x!tpu.dma_semaphore, #tpu.memory_space<semaphore_mem>> -> memref<!tpu.dma_semaphore, #tpu.memory_space<semaphore_mem>>
    tpu.enqueue_dma source(%21 : memref<1x128xf32, #tpu.memory_space<any>>) target(%22 : memref<1x128xf32, #tpu.memory_space<vmem>>) target_semaphore(%24 : memref<!tpu.dma_semaphore, #tpu.memory_space<semaphore_mem>>)
    %c3_i32 = arith.constant 3 : i32
    %c0_i32_12 = arith.constant 0 : i32
    %25 = arith.addi %c0_i32_12, %c3_i32 : i32
    %26 = arith.addi %0, %25 : i32
    %27 = arith.index_cast %26 : i32 to index
    %28 = memref.load %arg1[%27] : memref<64xi32, #tpu.memory_space<smem>>
    %c0_i32_13 = arith.constant 0 : i32
    %c0_i32_14 = arith.constant 0 : i32
    %29 = tpu.memref_slice %arg3[%28, %c0_i32_14] : memref<64x128xf32, #tpu.memory_space<any>> -> memref<1x128xf32, #tpu.memory_space<any>>
    %c0_i32_15 = arith.constant 0 : i32
    %30 = tpu.memref_slice %arg7[%25, %c0_i32_15] : memref<32x128xf32, #tpu.memory_space<vmem>> -> memref<1x128xf32, #tpu.memory_space<vmem>>
    %31 = tpu.memref_slice %arg8[%c0_i32_13] : memref<4x!tpu.dma_semaphore, #tpu.memory_space<semaphore_mem>> -> memref<1x!tpu.dma_semaphore, #tpu.memory_space<semaphore_mem>>
    %32 = tpu.memref_squeeze %31 : memref<1x!tpu.dma_semaphore, #tpu.memory_space<semaphore_mem>> -> memref<!tpu.dma_semaphore, #tpu.memory_space<semaphore_mem>>
    tpu.enqueue_dma source(%29 : memref<1x128xf32, #tpu.memory_space<any>>) target(%30 : memref<1x128xf32, #tpu.memory_space<vmem>>) target_semaphore(%32 : memref<!tpu.dma_semaphore, #tpu.memory_space<semaphore_mem>>)
    %c4_i32 = arith.constant 4 : i32
    %c0_i32_16 = arith.constant 0 : i32
    %33 = arith.addi %c0_i32_16, %c4_i32 : i32
    %34 = arith.addi %0, %33 : i32
    %35 = arith.index_cast %34 : i32 to index
    %36 = memref.load %arg1[%35] : memref<64xi32, #tpu.memory_space<smem>>
    %c0_i32_17 = arith.constant 0 : i32
    %c0_i32_18 = arith.constant 0 : i32
    %37 = tpu.memref_slice %arg3[%36, %c0_i32_18] : memref<64x128xf32, #tpu.memory_space<any>> -> memref<1x128xf32, #tpu.memory_space<any>>
    %c0_i32_19 = arith.constant 0 : i32
    %38 = tpu.memref_slice %arg7[%33, %c0_i32_19] : memref<32x128xf32, #tpu.memory_space<vmem>> -> memref<1x128xf32, #tpu.memory_space<vmem>>
    %39 = tpu.memref_slice %arg8[%c0_i32_17] : memref<4x!tpu.dma_semaphore, #tpu.memory_space<semaphore_mem>> -> memref<1x!tpu.dma_semaphore, #tpu.memory_space<semaphore_mem>>
    %40 = tpu.memref_squeeze %39 : memref<1x!tpu.dma_semaphore, #tpu.memory_space<semaphore_mem>> -> memref<!tpu.dma_semaphore, #tpu.memory_space<semaphore_mem>>
    tpu.enqueue_dma source(%37 : memref<1x128xf32, #tpu.memory_space<any>>) target(%38 : memref<1x128xf32, #tpu.memory_space<vmem>>) target_semaphore(%40 : memref<!tpu.dma_semaphore, #tpu.memory_space<semaphore_mem>>)
    %c5_i32 = arith.constant 5 : i32
    %c0_i32_20 = arith.constant 0 : i32
    %41 = arith.addi %c0_i32_20, %c5_i32 : i32
    %42 = arith.addi %0, %41 : i32
    %43 = arith.index_cast %42 : i32 to index
    %44 = memref.load %arg1[%43] : memref<64xi32, #tpu.memory_space<smem>>
    %c0_i32_21 = arith.constant 0 : i32
    %c0_i32_22 = arith.constant 0 : i32
    %45 = tpu.memref_slice %arg3[%44, %c0_i32_22] : memref<64x128xf32, #tpu.memory_space<any>> -> memref<1x128xf32, #tpu.memory_space<any>>
    %c0_i32_23 = arith.constant 0 : i32
    %46 = tpu.memref_slice %arg7[%41, %c0_i32_23] : memref<32x128xf32, #tpu.memory_space<vmem>> -> memref<1x128xf32, #tpu.memory_space<vmem>>
    %47 = tpu.memref_slice %arg8[%c0_i32_21] : memref<4x!tpu.dma_semaphore, #tpu.memory_space<semaphore_mem>> -> memref<1x!tpu.dma_semaphore, #tpu.memory_space<semaphore_mem>>
    %48 = tpu.memref_squeeze %47 : memref<1x!tpu.dma_semaphore, #tpu.memory_space<semaphore_mem>> -> memref<!tpu.dma_semaphore, #tpu.memory_space<semaphore_mem>>
    tpu.enqueue_dma source(%45 : memref<1x128xf32, #tpu.memory_space<any>>) target(%46 : memref<1x128xf32, #tpu.memory_space<vmem>>) target_semaphore(%48 : memref<!tpu.dma_semaphore, #tpu.memory_space<semaphore_mem>>)
    %c6_i32 = arith.constant 6 : i32
    %c0_i32_24 = arith.constant 0 : i32
    %49 = arith.addi %c0_i32_24, %c6_i32 : i32
    %50 = arith.addi %0, %49 : i32
    %51 = arith.index_cast %50 : i32 to index
    %52 = memref.load %arg1[%51] : memref<64xi32, #tpu.memory_space<smem>>
    %c0_i32_25 = arith.constant 0 : i32
    %c0_i32_26 = arith.constant 0 : i32
    %53 = tpu.memref_slice %arg3[%52, %c0_i32_26] : memref<64x128xf32, #tpu.memory_space<any>> -> memref<1x128xf32, #tpu.memory_space<any>>
    %c0_i32_27 = arith.constant 0 : i32
    %54 = tpu.memref_slice %arg7[%49, %c0_i32_27] : memref<32x128xf32, #tpu.memory_space<vmem>> -> memref<1x128xf32, #tpu.memory_space<vmem>>
    %55 = tpu.memref_slice %arg8[%c0_i32_25] : memref<4x!tpu.dma_semaphore, #tpu.memory_space<semaphore_mem>> -> memref<1x!tpu.dma_semaphore, #tpu.memory_space<semaphore_mem>>
    %56 = tpu.memref_squeeze %55 : memref<1x!tpu.dma_semaphore, #tpu.memory_space<semaphore_mem>> -> memref<!tpu.dma_semaphore, #tpu.memory_space<semaphore_mem>>
    tpu.enqueue_dma source(%53 : memref<1x128xf32, #tpu.memory_space<any>>) target(%54 : memref<1x128xf32, #tpu.memory_space<vmem>>) target_semaphore(%56 : memref<!tpu.dma_semaphore, #tpu.memory_space<semaphore_mem>>)
    %c7_i32 = arith.constant 7 : i32
    %c0_i32_28 = arith.constant 0 : i32
    %57 = arith.addi %c0_i32_28, %c7_i32 : i32
    %58 = arith.addi %0, %57 : i32
    %59 = arith.index_cast %58 : i32 to index
    %60 = memref.load %arg1[%59] : memref<64xi32, #tpu.memory_space<smem>>
    %c0_i32_29 = arith.constant 0 : i32
    %c0_i32_30 = arith.constant 0 : i32
    %61 = tpu.memref_slice %arg3[%60, %c0_i32_30] : memref<64x128xf32, #tpu.memory_space<any>> -> memref<1x128xf32, #tpu.memory_space<any>>
    %c0_i32_31 = arith.constant 0 : i32
    %62 = tpu.memref_slice %arg7[%57, %c0_i32_31] : memref<32x128xf32, #tpu.memory_space<vmem>> -> memref<1x128xf32, #tpu.memory_space<vmem>>
    %63 = tpu.memref_slice %arg8[%c0_i32_29] : memref<4x!tpu.dma_semaphore, #tpu.memory_space<semaphore_mem>> -> memref<1x!tpu.dma_semaphore, #tpu.memory_space<semaphore_mem>>
    %64 = tpu.memref_squeeze %63 : memref<1x!tpu.dma_semaphore, #tpu.memory_space<semaphore_mem>> -> memref<!tpu.dma_semaphore, #tpu.memory_space<semaphore_mem>>
    tpu.enqueue_dma source(%61 : memref<1x128xf32, #tpu.memory_space<any>>) target(%62 : memref<1x128xf32, #tpu.memory_space<vmem>>) target_semaphore(%64 : memref<!tpu.dma_semaphore, #tpu.memory_space<semaphore_mem>>)
    %c8_i32 = arith.constant 8 : i32
    %c0_i32_32 = arith.constant 0 : i32
    %c8_i32_33 = arith.constant 8 : i32
    %65 = arith.addi %c8_i32_33, %c0_i32_32 : i32
    %66 = arith.addi %0, %65 : i32
    %67 = arith.index_cast %66 : i32 to index
    %68 = memref.load %arg1[%67] : memref<64xi32, #tpu.memory_space<smem>>
    %c1_i32_34 = arith.constant 1 : i32
    %c0_i32_35 = arith.constant 0 : i32
    %69 = tpu.memref_slice %arg3[%68, %c0_i32_35] : memref<64x128xf32, #tpu.memory_space<any>> -> memref<1x128xf32, #tpu.memory_space<any>>
    %c0_i32_36 = arith.constant 0 : i32
    %70 = tpu.memref_slice %arg7[%65, %c0_i32_36] : memref<32x128xf32, #tpu.memory_space<vmem>> -> memref<1x128xf32, #tpu.memory_space<vmem>>
    %71 = tpu.memref_slice %arg8[%c1_i32_34] : memref<4x!tpu.dma_semaphore, #tpu.memory_space<semaphore_mem>> -> memref<1x!tpu.dma_semaphore, #tpu.memory_space<semaphore_mem>>
    %72 = tpu.memref_squeeze %71 : memref<1x!tpu.dma_semaphore, #tpu.memory_space<semaphore_mem>> -> memref<!tpu.dma_semaphore, #tpu.memory_space<semaphore_mem>>
    tpu.enqueue_dma source(%69 : memref<1x128xf32, #tpu.memory_space<any>>) target(%70 : memref<1x128xf32, #tpu.memory_space<vmem>>) target_semaphore(%72 : memref<!tpu.dma_semaphore, #tpu.memory_space<semaphore_mem>>)
    %c1_i32_37 = arith.constant 1 : i32
    %c8_i32_38 = arith.constant 8 : i32
    %73 = arith.addi %c8_i32_38, %c1_i32_37 : i32
    %74 = arith.addi %0, %73 : i32
    %75 = arith.index_cast %74 : i32 to index
    %76 = memref.load %arg1[%75] : memref<64xi32, #tpu.memory_space<smem>>
    %c1_i32_39 = arith.constant 1 : i32
    %c0_i32_40 = arith.constant 0 : i32
    %77 = tpu.memref_slice %arg3[%76, %c0_i32_40] : memref<64x128xf32, #tpu.memory_space<any>> -> memref<1x128xf32, #tpu.memory_space<any>>
    %c0_i32_41 = arith.constant 0 : i32
    %78 = tpu.memref_slice %arg7[%73, %c0_i32_41] : memref<32x128xf32, #tpu.memory_space<vmem>> -> memref<1x128xf32, #tpu.memory_space<vmem>>
    %79 = tpu.memref_slice %arg8[%c1_i32_39] : memref<4x!tpu.dma_semaphore, #tpu.memory_space<semaphore_mem>> -> memref<1x!tpu.dma_semaphore, #tpu.memory_space<semaphore_mem>>
    %80 = tpu.memref_squeeze %79 : memref<1x!tpu.dma_semaphore, #tpu.memory_space<semaphore_mem>> -> memref<!tpu.dma_semaphore, #tpu.memory_space<semaphore_mem>>
    tpu.enqueue_dma source(%77 : memref<1x128xf32, #tpu.memory_space<any>>) target(%78 : memref<1x128xf32, #tpu.memory_space<vmem>>) target_semaphore(%80 : memref<!tpu.dma_semaphore, #tpu.memory_space<semaphore_mem>>)
    %c2_i32_42 = arith.constant 2 : i32
    %c8_i32_43 = arith.constant 8 : i32
    %81 = arith.addi %c8_i32_43, %c2_i32_42 : i32
    %82 = arith.addi %0, %81 : i32
    %83 = arith.index_cast %82 : i32 to index
    %84 = memref.load %arg1[%83] : memref<64xi32, #tpu.memory_space<smem>>
    %c1_i32_44 = arith.constant 1 : i32
    %c0_i32_45 = arith.constant 0 : i32
    %85 = tpu.memref_slice %arg3[%84, %c0_i32_45] : memref<64x128xf32, #tpu.memory_space<any>> -> memref<1x128xf32, #tpu.memory_space<any>>
    %c0_i32_46 = arith.constant 0 : i32
    %86 = tpu.memref_slice %arg7[%81, %c0_i32_46] : memref<32x128xf32, #tpu.memory_space<vmem>> -> memref<1x128xf32, #tpu.memory_space<vmem>>
    %87 = tpu.memref_slice %arg8[%c1_i32_44] : memref<4x!tpu.dma_semaphore, #tpu.memory_space<semaphore_mem>> -> memref<1x!tpu.dma_semaphore, #tpu.memory_space<semaphore_mem>>
    %88 = tpu.memref_squeeze %87 : memref<1x!tpu.dma_semaphore, #tpu.memory_space<semaphore_mem>> -> memref<!tpu.dma_semaphore, #tpu.memory_space<semaphore_mem>>
    tpu.enqueue_dma source(%85 : memref<1x128xf32, #tpu.memory_space<any>>) target(%86 : memref<1x128xf32, #tpu.memory_space<vmem>>) target_semaphore(%88 : memref<!tpu.dma_semaphore, #tpu.memory_space<semaphore_mem>>)
    %c3_i32_47 = arith.constant 3 : i32
    %c8_i32_48 = arith.constant 8 : i32
    %89 = arith.addi %c8_i32_48, %c3_i32_47 : i32
    %90 = arith.addi %0, %89 : i32
    %91 = arith.index_cast %90 : i32 to index
    %92 = memref.load %arg1[%91] : memref<64xi32, #tpu.memory_space<smem>>
    %c1_i32_49 = arith.constant 1 : i32
    %c0_i32_50 = arith.constant 0 : i32
    %93 = tpu.memref_slice %arg3[%92, %c0_i32_50] : memref<64x128xf32, #tpu.memory_space<any>> -> memref<1x128xf32, #tpu.memory_space<any>>
    %c0_i32_51 = arith.constant 0 : i32
    %94 = tpu.memref_slice %arg7[%89, %c0_i32_51] : memref<32x128xf32, #tpu.memory_space<vmem>> -> memref<1x128xf32, #tpu.memory_space<vmem>>
    %95 = tpu.memref_slice %arg8[%c1_i32_49] : memref<4x!tpu.dma_semaphore, #tpu.memory_space<semaphore_mem>> -> memref<1x!tpu.dma_semaphore, #tpu.memory_space<semaphore_mem>>
    %96 = tpu.memref_squeeze %95 : memref<1x!tpu.dma_semaphore, #tpu.memory_space<semaphore_mem>> -> memref<!tpu.dma_semaphore, #tpu.memory_space<semaphore_mem>>
    tpu.enqueue_dma source(%93 : memref<1x128xf32, #tpu.memory_space<any>>) target(%94 : memref<1x128xf32, #tpu.memory_space<vmem>>) target_semaphore(%96 : memref<!tpu.dma_semaphore, #tpu.memory_space<semaphore_mem>>)
    %c4_i32_52 = arith.constant 4 : i32
    %c8_i32_53 = arith.constant 8 : i32
    %97 = arith.addi %c8_i32_53, %c4_i32_52 : i32
    %98 = arith.addi %0, %97 : i32
    %99 = arith.index_cast %98 : i32 to index
    %100 = memref.load %arg1[%99] : memref<64xi32, #tpu.memory_space<smem>>
    %c1_i32_54 = arith.constant 1 : i32
    %c0_i32_55 = arith.constant 0 : i32
    %101 = tpu.memref_slice %arg3[%100, %c0_i32_55] : memref<64x128xf32, #tpu.memory_space<any>> -> memref<1x128xf32, #tpu.memory_space<any>>
    %c0_i32_56 = arith.constant 0 : i32
    %102 = tpu.memref_slice %arg7[%97, %c0_i32_56] : memref<32x128xf32, #tpu.memory_space<vmem>> -> memref<1x128xf32, #tpu.memory_space<vmem>>
    %103 = tpu.memref_slice %arg8[%c1_i32_54] : memref<4x!tpu.dma_semaphore, #tpu.memory_space<semaphore_mem>> -> memref<1x!tpu.dma_semaphore, #tpu.memory_space<semaphore_mem>>
    %104 = tpu.memref_squeeze %103 : memref<1x!tpu.dma_semaphore, #tpu.memory_space<semaphore_mem>> -> memref<!tpu.dma_semaphore, #tpu.memory_space<semaphore_mem>>
    tpu.enqueue_dma source(%101 : memref<1x128xf32, #tpu.memory_space<any>>) target(%102 : memref<1x128xf32, #tpu.memory_space<vmem>>) target_semaphore(%104 : memref<!tpu.dma_semaphore, #tpu.memory_space<semaphore_mem>>)
    %c5_i32_57 = arith.constant 5 : i32
    %c8_i32_58 = arith.constant 8 : i32
    %105 = arith.addi %c8_i32_58, %c5_i32_57 : i32
    %106 = arith.addi %0, %105 : i32
    %107 = arith.index_cast %106 : i32 to index
    %108 = memref.load %arg1[%107] : memref<64xi32, #tpu.memory_space<smem>>
    %c1_i32_59 = arith.constant 1 : i32
    %c0_i32_60 = arith.constant 0 : i32
    %109 = tpu.memref_slice %arg3[%108, %c0_i32_60] : memref<64x128xf32, #tpu.memory_space<any>> -> memref<1x128xf32, #tpu.memory_space<any>>
    %c0_i32_61 = arith.constant 0 : i32
    %110 = tpu.memref_slice %arg7[%105, %c0_i32_61] : memref<32x128xf32, #tpu.memory_space<vmem>> -> memref<1x128xf32, #tpu.memory_space<vmem>>
    %111 = tpu.memref_slice %arg8[%c1_i32_59] : memref<4x!tpu.dma_semaphore, #tpu.memory_space<semaphore_mem>> -> memref<1x!tpu.dma_semaphore, #tpu.memory_space<semaphore_mem>>
    %112 = tpu.memref_squeeze %111 : memref<1x!tpu.dma_semaphore, #tpu.memory_space<semaphore_mem>> -> memref<!tpu.dma_semaphore, #tpu.memory_space<semaphore_mem>>
    tpu.enqueue_dma source(%109 : memref<1x128xf32, #tpu.memory_space<any>>) target(%110 : memref<1x128xf32, #tpu.memory_space<vmem>>) target_semaphore(%112 : memref<!tpu.dma_semaphore, #tpu.memory_space<semaphore_mem>>)
    %c6_i32_62 = arith.constant 6 : i32
    %c8_i32_63 = arith.constant 8 : i32
    %113 = arith.addi %c8_i32_63, %c6_i32_62 : i32
    %114 = arith.addi %0, %113 : i32
    %115 = arith.index_cast %114 : i32 to index
    %116 = memref.load %arg1[%115] : memref<64xi32, #tpu.memory_space<smem>>
    %c1_i32_64 = arith.constant 1 : i32
    %c0_i32_65 = arith.constant 0 : i32
    %117 = tpu.memref_slice %arg3[%116, %c0_i32_65] : memref<64x128xf32, #tpu.memory_space<any>> -> memref<1x128xf32, #tpu.memory_space<any>>
    %c0_i32_66 = arith.constant 0 : i32
    %118 = tpu.memref_slice %arg7[%113, %c0_i32_66] : memref<32x128xf32, #tpu.memory_space<vmem>> -> memref<1x128xf32, #tpu.memory_space<vmem>>
    %119 = tpu.memref_slice %arg8[%c1_i32_64] : memref<4x!tpu.dma_semaphore, #tpu.memory_space<semaphore_mem>> -> memref<1x!tpu.dma_semaphore, #tpu.memory_space<semaphore_mem>>
    %120 = tpu.memref_squeeze %119 : memref<1x!tpu.dma_semaphore, #tpu.memory_space<semaphore_mem>> -> memref<!tpu.dma_semaphore, #tpu.memory_space<semaphore_mem>>
    tpu.enqueue_dma source(%117 : memref<1x128xf32, #tpu.memory_space<any>>) target(%118 : memref<1x128xf32, #tpu.memory_space<vmem>>) target_semaphore(%120 : memref<!tpu.dma_semaphore, #tpu.memory_space<semaphore_mem>>)
    %c7_i32_67 = arith.constant 7 : i32
    %c8_i32_68 = arith.constant 8 : i32
    %121 = arith.addi %c8_i32_68, %c7_i32_67 : i32
    %122 = arith.addi %0, %121 : i32
    %123 = arith.index_cast %122 : i32 to index
    %124 = memref.load %arg1[%123] : memref<64xi32, #tpu.memory_space<smem>>
    %c1_i32_69 = arith.constant 1 : i32
    %c0_i32_70 = arith.constant 0 : i32
    %125 = tpu.memref_slice %arg3[%124, %c0_i32_70] : memref<64x128xf32, #tpu.memory_space<any>> -> memref<1x128xf32, #tpu.memory_space<any>>
    %c0_i32_71 = arith.constant 0 : i32
    %126 = tpu.memref_slice %arg7[%121, %c0_i32_71] : memref<32x128xf32, #tpu.memory_space<vmem>> -> memref<1x128xf32, #tpu.memory_space<vmem>>
    %127 = tpu.memref_slice %arg8[%c1_i32_69] : memref<4x!tpu.dma_semaphore, #tpu.memory_space<semaphore_mem>> -> memref<1x!tpu.dma_semaphore, #tpu.memory_space<semaphore_mem>>
    %128 = tpu.memref_squeeze %127 : memref<1x!tpu.dma_semaphore, #tpu.memory_space<semaphore_mem>> -> memref<!tpu.dma_semaphore, #tpu.memory_space<semaphore_mem>>
    tpu.enqueue_dma source(%125 : memref<1x128xf32, #tpu.memory_space<any>>) target(%126 : memref<1x128xf32, #tpu.memory_space<vmem>>) target_semaphore(%128 : memref<!tpu.dma_semaphore, #tpu.memory_space<semaphore_mem>>)
    %c8_i32_72 = arith.constant 8 : i32
    %c0_i32_73 = arith.constant 0 : i32
    %c16_i32 = arith.constant 16 : i32
    %129 = arith.addi %c16_i32, %c0_i32_73 : i32
    %130 = arith.addi %0, %129 : i32
    %131 = arith.index_cast %130 : i32 to index
    %132 = memref.load %arg1[%131] : memref<64xi32, #tpu.memory_space<smem>>
    %c2_i32_74 = arith.constant 2 : i32
    %c0_i32_75 = arith.constant 0 : i32
    %133 = tpu.memref_slice %arg3[%132, %c0_i32_75] : memref<64x128xf32, #tpu.memory_space<any>> -> memref<1x128xf32, #tpu.memory_space<any>>
    %c0_i32_76 = arith.constant 0 : i32
    %134 = tpu.memref_slice %arg7[%129, %c0_i32_76] : memref<32x128xf32, #tpu.memory_space<vmem>> -> memref<1x128xf32, #tpu.memory_space<vmem>>
    %135 = tpu.memref_slice %arg8[%c2_i32_74] : memref<4x!tpu.dma_semaphore, #tpu.memory_space<semaphore_mem>> -> memref<1x!tpu.dma_semaphore, #tpu.memory_space<semaphore_mem>>
    %136 = tpu.memref_squeeze %135 : memref<1x!tpu.dma_semaphore, #tpu.memory_space<semaphore_mem>> -> memref<!tpu.dma_semaphore, #tpu.memory_space<semaphore_mem>>
    tpu.enqueue_dma source(%133 : memref<1x128xf32, #tpu.memory_space<any>>) target(%134 : memref<1x128xf32, #tpu.memory_space<vmem>>) target_semaphore(%136 : memref<!tpu.dma_semaphore, #tpu.memory_space<semaphore_mem>>)
    %c1_i32_77 = arith.constant 1 : i32
    %c16_i32_78 = arith.constant 16 : i32
    %137 = arith.addi %c16_i32_78, %c1_i32_77 : i32
    %138 = arith.addi %0, %137 : i32
    %139 = arith.index_cast %138 : i32 to index
    %140 = memref.load %arg1[%139] : memref<64xi32, #tpu.memory_space<smem>>
    %c2_i32_79 = arith.constant 2 : i32
    %c0_i32_80 = arith.constant 0 : i32
    %141 = tpu.memref_slice %arg3[%140, %c0_i32_80] : memref<64x128xf32, #tpu.memory_space<any>> -> memref<1x128xf32, #tpu.memory_space<any>>
    %c0_i32_81 = arith.constant 0 : i32
    %142 = tpu.memref_slice %arg7[%137, %c0_i32_81] : memref<32x128xf32, #tpu.memory_space<vmem>> -> memref<1x128xf32, #tpu.memory_space<vmem>>
    %143 = tpu.memref_slice %arg8[%c2_i32_79] : memref<4x!tpu.dma_semaphore, #tpu.memory_space<semaphore_mem>> -> memref<1x!tpu.dma_semaphore, #tpu.memory_space<semaphore_mem>>
    %144 = tpu.memref_squeeze %143 : memref<1x!tpu.dma_semaphore, #tpu.memory_space<semaphore_mem>> -> memref<!tpu.dma_semaphore, #tpu.memory_space<semaphore_mem>>
    tpu.enqueue_dma source(%141 : memref<1x128xf32, #tpu.memory_space<any>>) target(%142 : memref<1x128xf32, #tpu.memory_space<vmem>>) target_semaphore(%144 : memref<!tpu.dma_semaphore, #tpu.memory_space<semaphore_mem>>)
    %c2_i32_82 = arith.constant 2 : i32
    %c16_i32_83 = arith.constant 16 : i32
    %145 = arith.addi %c16_i32_83, %c2_i32_82 : i32
    %146 = arith.addi %0, %145 : i32
    %147 = arith.index_cast %146 : i32 to index
    %148 = memref.load %arg1[%147] : memref<64xi32, #tpu.memory_space<smem>>
    %c2_i32_84 = arith.constant 2 : i32
    %c0_i32_85 = arith.constant 0 : i32
    %149 = tpu.memref_slice %arg3[%148, %c0_i32_85] : memref<64x128xf32, #tpu.memory_space<any>> -> memref<1x128xf32, #tpu.memory_space<any>>
    %c0_i32_86 = arith.constant 0 : i32
    %150 = tpu.memref_slice %arg7[%145, %c0_i32_86] : memref<32x128xf32, #tpu.memory_space<vmem>> -> memref<1x128xf32, #tpu.memory_space<vmem>>
    %151 = tpu.memref_slice %arg8[%c2_i32_84] : memref<4x!tpu.dma_semaphore, #tpu.memory_space<semaphore_mem>> -> memref<1x!tpu.dma_semaphore, #tpu.memory_space<semaphore_mem>>
    %152 = tpu.memref_squeeze %151 : memref<1x!tpu.dma_semaphore, #tpu.memory_space<semaphore_mem>> -> memref<!tpu.dma_semaphore, #tpu.memory_space<semaphore_mem>>
    tpu.enqueue_dma source(%149 : memref<1x128xf32, #tpu.memory_space<any>>) target(%150 : memref<1x128xf32, #tpu.memory_space<vmem>>) target_semaphore(%152 : memref<!tpu.dma_semaphore, #tpu.memory_space<semaphore_mem>>)
    %c3_i32_87 = arith.constant 3 : i32
    %c16_i32_88 = arith.constant 16 : i32
    %153 = arith.addi %c16_i32_88, %c3_i32_87 : i32
    %154 = arith.addi %0, %153 : i32
    %155 = arith.index_cast %154 : i32 to index
    %156 = memref.load %arg1[%155] : memref<64xi32, #tpu.memory_space<smem>>
    %c2_i32_89 = arith.constant 2 : i32
    %c0_i32_90 = arith.constant 0 : i32
    %157 = tpu.memref_slice %arg3[%156, %c0_i32_90] : memref<64x128xf32, #tpu.memory_space<any>> -> memref<1x128xf32, #tpu.memory_space<any>>
    %c0_i32_91 = arith.constant 0 : i32
    %158 = tpu.memref_slice %arg7[%153, %c0_i32_91] : memref<32x128xf32, #tpu.memory_space<vmem>> -> memref<1x128xf32, #tpu.memory_space<vmem>>
    %159 = tpu.memref_slice %arg8[%c2_i32_89] : memref<4x!tpu.dma_semaphore, #tpu.memory_space<semaphore_mem>> -> memref<1x!tpu.dma_semaphore, #tpu.memory_space<semaphore_mem>>
    %160 = tpu.memref_squeeze %159 : memref<1x!tpu.dma_semaphore, #tpu.memory_space<semaphore_mem>> -> memref<!tpu.dma_semaphore, #tpu.memory_space<semaphore_mem>>
    tpu.enqueue_dma source(%157 : memref<1x128xf32, #tpu.memory_space<any>>) target(%158 : memref<1x128xf32, #tpu.memory_space<vmem>>) target_semaphore(%160 : memref<!tpu.dma_semaphore, #tpu.memory_space<semaphore_mem>>)
    %c4_i32_92 = arith.constant 4 : i32
    %c16_i32_93 = arith.constant 16 : i32
    %161 = arith.addi %c16_i32_93, %c4_i32_92 : i32
    %162 = arith.addi %0, %161 : i32
    %163 = arith.index_cast %162 : i32 to index
    %164 = memref.load %arg1[%163] : memref<64xi32, #tpu.memory_space<smem>>
    %c2_i32_94 = arith.constant 2 : i32
    %c0_i32_95 = arith.constant 0 : i32
    %165 = tpu.memref_slice %arg3[%164, %c0_i32_95] : memref<64x128xf32, #tpu.memory_space<any>> -> memref<1x128xf32, #tpu.memory_space<any>>
    %c0_i32_96 = arith.constant 0 : i32
    %166 = tpu.memref_slice %arg7[%161, %c0_i32_96] : memref<32x128xf32, #tpu.memory_space<vmem>> -> memref<1x128xf32, #tpu.memory_space<vmem>>
    %167 = tpu.memref_slice %arg8[%c2_i32_94] : memref<4x!tpu.dma_semaphore, #tpu.memory_space<semaphore_mem>> -> memref<1x!tpu.dma_semaphore, #tpu.memory_space<semaphore_mem>>
    %168 = tpu.memref_squeeze %167 : memref<1x!tpu.dma_semaphore, #tpu.memory_space<semaphore_mem>> -> memref<!tpu.dma_semaphore, #tpu.memory_space<semaphore_mem>>
    tpu.enqueue_dma source(%165 : memref<1x128xf32, #tpu.memory_space<any>>) target(%166 : memref<1x128xf32, #tpu.memory_space<vmem>>) target_semaphore(%168 : memref<!tpu.dma_semaphore, #tpu.memory_space<semaphore_mem>>)
    %c5_i32_97 = arith.constant 5 : i32
    %c16_i32_98 = arith.constant 16 : i32
    %169 = arith.addi %c16_i32_98, %c5_i32_97 : i32
    %170 = arith.addi %0, %169 : i32
    %171 = arith.index_cast %170 : i32 to index
    %172 = memref.load %arg1[%171] : memref<64xi32, #tpu.memory_space<smem>>
    %c2_i32_99 = arith.constant 2 : i32
    %c0_i32_100 = arith.constant 0 : i32
    %173 = tpu.memref_slice %arg3[%172, %c0_i32_100] : memref<64x128xf32, #tpu.memory_space<any>> -> memref<1x128xf32, #tpu.memory_space<any>>
    %c0_i32_101 = arith.constant 0 : i32
    %174 = tpu.memref_slice %arg7[%169, %c0_i32_101] : memref<32x128xf32, #tpu.memory_space<vmem>> -> memref<1x128xf32, #tpu.memory_space<vmem>>
    %175 = tpu.memref_slice %arg8[%c2_i32_99] : memref<4x!tpu.dma_semaphore, #tpu.memory_space<semaphore_mem>> -> memref<1x!tpu.dma_semaphore, #tpu.memory_space<semaphore_mem>>
    %176 = tpu.memref_squeeze %175 : memref<1x!tpu.dma_semaphore, #tpu.memory_space<semaphore_mem>> -> memref<!tpu.dma_semaphore, #tpu.memory_space<semaphore_mem>>
    tpu.enqueue_dma source(%173 : memref<1x128xf32, #tpu.memory_space<any>>) target(%174 : memref<1x128xf32, #tpu.memory_space<vmem>>) target_semaphore(%176 : memref<!tpu.dma_semaphore, #tpu.memory_space<semaphore_mem>>)
    %c6_i32_102 = arith.constant 6 : i32
    %c16_i32_103 = arith.constant 16 : i32
    %177 = arith.addi %c16_i32_103, %c6_i32_102 : i32
    %178 = arith.addi %0, %177 : i32
    %179 = arith.index_cast %178 : i32 to index
    %180 = memref.load %arg1[%179] : memref<64xi32, #tpu.memory_space<smem>>
    %c2_i32_104 = arith.constant 2 : i32
    %c0_i32_105 = arith.constant 0 : i32
    %181 = tpu.memref_slice %arg3[%180, %c0_i32_105] : memref<64x128xf32, #tpu.memory_space<any>> -> memref<1x128xf32, #tpu.memory_space<any>>
    %c0_i32_106 = arith.constant 0 : i32
    %182 = tpu.memref_slice %arg7[%177, %c0_i32_106] : memref<32x128xf32, #tpu.memory_space<vmem>> -> memref<1x128xf32, #tpu.memory_space<vmem>>
    %183 = tpu.memref_slice %arg8[%c2_i32_104] : memref<4x!tpu.dma_semaphore, #tpu.memory_space<semaphore_mem>> -> memref<1x!tpu.dma_semaphore, #tpu.memory_space<semaphore_mem>>
    %184 = tpu.memref_squeeze %183 : memref<1x!tpu.dma_semaphore, #tpu.memory_space<semaphore_mem>> -> memref<!tpu.dma_semaphore, #tpu.memory_space<semaphore_mem>>
    tpu.enqueue_dma source(%181 : memref<1x128xf32, #tpu.memory_space<any>>) target(%182 : memref<1x128xf32, #tpu.memory_space<vmem>>) target_semaphore(%184 : memref<!tpu.dma_semaphore, #tpu.memory_space<semaphore_mem>>)
    %c7_i32_107 = arith.constant 7 : i32
    %c16_i32_108 = arith.constant 16 : i32
    %185 = arith.addi %c16_i32_108, %c7_i32_107 : i32
    %186 = arith.addi %0, %185 : i32
    %187 = arith.index_cast %186 : i32 to index
    %188 = memref.load %arg1[%187] : memref<64xi32, #tpu.memory_space<smem>>
    %c2_i32_109 = arith.constant 2 : i32
    %c0_i32_110 = arith.constant 0 : i32
    %189 = tpu.memref_slice %arg3[%188, %c0_i32_110] : memref<64x128xf32, #tpu.memory_space<any>> -> memref<1x128xf32, #tpu.memory_space<any>>
    %c0_i32_111 = arith.constant 0 : i32
    %190 = tpu.memref_slice %arg7[%185, %c0_i32_111] : memref<32x128xf32, #tpu.memory_space<vmem>> -> memref<1x128xf32, #tpu.memory_space<vmem>>
    %191 = tpu.memref_slice %arg8[%c2_i32_109] : memref<4x!tpu.dma_semaphore, #tpu.memory_space<semaphore_mem>> -> memref<1x!tpu.dma_semaphore, #tpu.memory_space<semaphore_mem>>
    %192 = tpu.memref_squeeze %191 : memref<1x!tpu.dma_semaphore, #tpu.memory_space<semaphore_mem>> -> memref<!tpu.dma_semaphore, #tpu.memory_space<semaphore_mem>>
    tpu.enqueue_dma source(%189 : memref<1x128xf32, #tpu.memory_space<any>>) target(%190 : memref<1x128xf32, #tpu.memory_space<vmem>>) target_semaphore(%192 : memref<!tpu.dma_semaphore, #tpu.memory_space<semaphore_mem>>)
    %c8_i32_112 = arith.constant 8 : i32
    %c0_i32_113 = arith.constant 0 : i32
    %c24_i32 = arith.constant 24 : i32
    %193 = arith.addi %c24_i32, %c0_i32_113 : i32
    %194 = arith.addi %0, %193 : i32
    %195 = arith.index_cast %194 : i32 to index
    %196 = memref.load %arg1[%195] : memref<64xi32, #tpu.memory_space<smem>>
    %c3_i32_114 = arith.constant 3 : i32
    %c0_i32_115 = arith.constant 0 : i32
    %197 = tpu.memref_slice %arg3[%196, %c0_i32_115] : memref<64x128xf32, #tpu.memory_space<any>> -> memref<1x128xf32, #tpu.memory_space<any>>
    %c0_i32_116 = arith.constant 0 : i32
    %198 = tpu.memref_slice %arg7[%193, %c0_i32_116] : memref<32x128xf32, #tpu.memory_space<vmem>> -> memref<1x128xf32, #tpu.memory_space<vmem>>
    %199 = tpu.memref_slice %arg8[%c3_i32_114] : memref<4x!tpu.dma_semaphore, #tpu.memory_space<semaphore_mem>> -> memref<1x!tpu.dma_semaphore, #tpu.memory_space<semaphore_mem>>
    %200 = tpu.memref_squeeze %199 : memref<1x!tpu.dma_semaphore, #tpu.memory_space<semaphore_mem>> -> memref<!tpu.dma_semaphore, #tpu.memory_space<semaphore_mem>>
    tpu.enqueue_dma source(%197 : memref<1x128xf32, #tpu.memory_space<any>>) target(%198 : memref<1x128xf32, #tpu.memory_space<vmem>>) target_semaphore(%200 : memref<!tpu.dma_semaphore, #tpu.memory_space<semaphore_mem>>)
    %c1_i32_117 = arith.constant 1 : i32
    %c24_i32_118 = arith.constant 24 : i32
    %201 = arith.addi %c24_i32_118, %c1_i32_117 : i32
    %202 = arith.addi %0, %201 : i32
    %203 = arith.index_cast %202 : i32 to index
    %204 = memref.load %arg1[%203] : memref<64xi32, #tpu.memory_space<smem>>
    %c3_i32_119 = arith.constant 3 : i32
    %c0_i32_120 = arith.constant 0 : i32
    %205 = tpu.memref_slice %arg3[%204, %c0_i32_120] : memref<64x128xf32, #tpu.memory_space<any>> -> memref<1x128xf32, #tpu.memory_space<any>>
    %c0_i32_121 = arith.constant 0 : i32
    %206 = tpu.memref_slice %arg7[%201, %c0_i32_121] : memref<32x128xf32, #tpu.memory_space<vmem>> -> memref<1x128xf32, #tpu.memory_space<vmem>>
    %207 = tpu.memref_slice %arg8[%c3_i32_119] : memref<4x!tpu.dma_semaphore, #tpu.memory_space<semaphore_mem>> -> memref<1x!tpu.dma_semaphore, #tpu.memory_space<semaphore_mem>>
    %208 = tpu.memref_squeeze %207 : memref<1x!tpu.dma_semaphore, #tpu.memory_space<semaphore_mem>> -> memref<!tpu.dma_semaphore, #tpu.memory_space<semaphore_mem>>
    tpu.enqueue_dma source(%205 : memref<1x128xf32, #tpu.memory_space<any>>) target(%206 : memref<1x128xf32, #tpu.memory_space<vmem>>) target_semaphore(%208 : memref<!tpu.dma_semaphore, #tpu.memory_space<semaphore_mem>>)
    %c2_i32_122 = arith.constant 2 : i32
    %c24_i32_123 = arith.constant 24 : i32
    %209 = arith.addi %c24_i32_123, %c2_i32_122 : i32
    %210 = arith.addi %0, %209 : i32
    %211 = arith.index_cast %210 : i32 to index
    %212 = memref.load %arg1[%211] : memref<64xi32, #tpu.memory_space<smem>>
    %c3_i32_124 = arith.constant 3 : i32
    %c0_i32_125 = arith.constant 0 : i32
    %213 = tpu.memref_slice %arg3[%212, %c0_i32_125] : memref<64x128xf32, #tpu.memory_space<any>> -> memref<1x128xf32, #tpu.memory_space<any>>
    %c0_i32_126 = arith.constant 0 : i32
    %214 = tpu.memref_slice %arg7[%209, %c0_i32_126] : memref<32x128xf32, #tpu.memory_space<vmem>> -> memref<1x128xf32, #tpu.memory_space<vmem>>
    %215 = tpu.memref_slice %arg8[%c3_i32_124] : memref<4x!tpu.dma_semaphore, #tpu.memory_space<semaphore_mem>> -> memref<1x!tpu.dma_semaphore, #tpu.memory_space<semaphore_mem>>
    %216 = tpu.memref_squeeze %215 : memref<1x!tpu.dma_semaphore, #tpu.memory_space<semaphore_mem>> -> memref<!tpu.dma_semaphore, #tpu.memory_space<semaphore_mem>>
    tpu.enqueue_dma source(%213 : memref<1x128xf32, #tpu.memory_space<any>>) target(%214 : memref<1x128xf32, #tpu.memory_space<vmem>>) target_semaphore(%216 : memref<!tpu.dma_semaphore, #tpu.memory_space<semaphore_mem>>)
    %c3_i32_127 = arith.constant 3 : i32
    %c24_i32_128 = arith.constant 24 : i32
    %217 = arith.addi %c24_i32_128, %c3_i32_127 : i32
    %218 = arith.addi %0, %217 : i32
    %219 = arith.index_cast %218 : i32 to index
    %220 = memref.load %arg1[%219] : memref<64xi32, #tpu.memory_space<smem>>
    %c3_i32_129 = arith.constant 3 : i32
    %c0_i32_130 = arith.constant 0 : i32
    %221 = tpu.memref_slice %arg3[%220, %c0_i32_130] : memref<64x128xf32, #tpu.memory_space<any>> -> memref<1x128xf32, #tpu.memory_space<any>>
    %c0_i32_131 = arith.constant 0 : i32
    %222 = tpu.memref_slice %arg7[%217, %c0_i32_131] : memref<32x128xf32, #tpu.memory_space<vmem>> -> memref<1x128xf32, #tpu.memory_space<vmem>>
    %223 = tpu.memref_slice %arg8[%c3_i32_129] : memref<4x!tpu.dma_semaphore, #tpu.memory_space<semaphore_mem>> -> memref<1x!tpu.dma_semaphore, #tpu.memory_space<semaphore_mem>>
    %224 = tpu.memref_squeeze %223 : memref<1x!tpu.dma_semaphore, #tpu.memory_space<semaphore_mem>> -> memref<!tpu.dma_semaphore, #tpu.memory_space<semaphore_mem>>
    tpu.enqueue_dma source(%221 : memref<1x128xf32, #tpu.memory_space<any>>) target(%222 : memref<1x128xf32, #tpu.memory_space<vmem>>) target_semaphore(%224 : memref<!tpu.dma_semaphore, #tpu.memory_space<semaphore_mem>>)
    %c4_i32_132 = arith.constant 4 : i32
    %c24_i32_133 = arith.constant 24 : i32
    %225 = arith.addi %c24_i32_133, %c4_i32_132 : i32
    %226 = arith.addi %0, %225 : i32
    %227 = arith.index_cast %226 : i32 to index
    %228 = memref.load %arg1[%227] : memref<64xi32, #tpu.memory_space<smem>>
    %c3_i32_134 = arith.constant 3 : i32
    %c0_i32_135 = arith.constant 0 : i32
    %229 = tpu.memref_slice %arg3[%228, %c0_i32_135] : memref<64x128xf32, #tpu.memory_space<any>> -> memref<1x128xf32, #tpu.memory_space<any>>
    %c0_i32_136 = arith.constant 0 : i32
    %230 = tpu.memref_slice %arg7[%225, %c0_i32_136] : memref<32x128xf32, #tpu.memory_space<vmem>> -> memref<1x128xf32, #tpu.memory_space<vmem>>
    %231 = tpu.memref_slice %arg8[%c3_i32_134] : memref<4x!tpu.dma_semaphore, #tpu.memory_space<semaphore_mem>> -> memref<1x!tpu.dma_semaphore, #tpu.memory_space<semaphore_mem>>
    %232 = tpu.memref_squeeze %231 : memref<1x!tpu.dma_semaphore, #tpu.memory_space<semaphore_mem>> -> memref<!tpu.dma_semaphore, #tpu.memory_space<semaphore_mem>>
    tpu.enqueue_dma source(%229 : memref<1x128xf32, #tpu.memory_space<any>>) target(%230 : memref<1x128xf32, #tpu.memory_space<vmem>>) target_semaphore(%232 : memref<!tpu.dma_semaphore, #tpu.memory_space<semaphore_mem>>)
    %c5_i32_137 = arith.constant 5 : i32
    %c24_i32_138 = arith.constant 24 : i32
    %233 = arith.addi %c24_i32_138, %c5_i32_137 : i32
    %234 = arith.addi %0, %233 : i32
    %235 = arith.index_cast %234 : i32 to index
    %236 = memref.load %arg1[%235] : memref<64xi32, #tpu.memory_space<smem>>
    %c3_i32_139 = arith.constant 3 : i32
    %c0_i32_140 = arith.constant 0 : i32
    %237 = tpu.memref_slice %arg3[%236, %c0_i32_140] : memref<64x128xf32, #tpu.memory_space<any>> -> memref<1x128xf32, #tpu.memory_space<any>>
    %c0_i32_141 = arith.constant 0 : i32
    %238 = tpu.memref_slice %arg7[%233, %c0_i32_141] : memref<32x128xf32, #tpu.memory_space<vmem>> -> memref<1x128xf32, #tpu.memory_space<vmem>>
    %239 = tpu.memref_slice %arg8[%c3_i32_139] : memref<4x!tpu.dma_semaphore, #tpu.memory_space<semaphore_mem>> -> memref<1x!tpu.dma_semaphore, #tpu.memory_space<semaphore_mem>>
    %240 = tpu.memref_squeeze %239 : memref<1x!tpu.dma_semaphore, #tpu.memory_space<semaphore_mem>> -> memref<!tpu.dma_semaphore, #tpu.memory_space<semaphore_mem>>
    tpu.enqueue_dma source(%237 : memref<1x128xf32, #tpu.memory_space<any>>) target(%238 : memref<1x128xf32, #tpu.memory_space<vmem>>) target_semaphore(%240 : memref<!tpu.dma_semaphore, #tpu.memory_space<semaphore_mem>>)
    %c6_i32_142 = arith.constant 6 : i32
    %c24_i32_143 = arith.constant 24 : i32
    %241 = arith.addi %c24_i32_143, %c6_i32_142 : i32
    %242 = arith.addi %0, %241 : i32
    %243 = arith.index_cast %242 : i32 to index
    %244 = memref.load %arg1[%243] : memref<64xi32, #tpu.memory_space<smem>>
    %c3_i32_144 = arith.constant 3 : i32
    %c0_i32_145 = arith.constant 0 : i32
    %245 = tpu.memref_slice %arg3[%244, %c0_i32_145] : memref<64x128xf32, #tpu.memory_space<any>> -> memref<1x128xf32, #tpu.memory_space<any>>
    %c0_i32_146 = arith.constant 0 : i32
    %246 = tpu.memref_slice %arg7[%241, %c0_i32_146] : memref<32x128xf32, #tpu.memory_space<vmem>> -> memref<1x128xf32, #tpu.memory_space<vmem>>
    %247 = tpu.memref_slice %arg8[%c3_i32_144] : memref<4x!tpu.dma_semaphore, #tpu.memory_space<semaphore_mem>> -> memref<1x!tpu.dma_semaphore, #tpu.memory_space<semaphore_mem>>
    %248 = tpu.memref_squeeze %247 : memref<1x!tpu.dma_semaphore, #tpu.memory_space<semaphore_mem>> -> memref<!tpu.dma_semaphore, #tpu.memory_space<semaphore_mem>>
    tpu.enqueue_dma source(%245 : memref<1x128xf32, #tpu.memory_space<any>>) target(%246 : memref<1x128xf32, #tpu.memory_space<vmem>>) target_semaphore(%248 : memref<!tpu.dma_semaphore, #tpu.memory_space<semaphore_mem>>)
    %c7_i32_147 = arith.constant 7 : i32
    %c24_i32_148 = arith.constant 24 : i32
    %249 = arith.addi %c24_i32_148, %c7_i32_147 : i32
    %250 = arith.addi %0, %249 : i32
    %251 = arith.index_cast %250 : i32 to index
    %252 = memref.load %arg1[%251] : memref<64xi32, #tpu.memory_space<smem>>
    %c3_i32_149 = arith.constant 3 : i32
    %c0_i32_150 = arith.constant 0 : i32
    %253 = tpu.memref_slice %arg3[%252, %c0_i32_150] : memref<64x128xf32, #tpu.memory_space<any>> -> memref<1x128xf32, #tpu.memory_space<any>>
    %c0_i32_151 = arith.constant 0 : i32
    %254 = tpu.memref_slice %arg7[%249, %c0_i32_151] : memref<32x128xf32, #tpu.memory_space<vmem>> -> memref<1x128xf32, #tpu.memory_space<vmem>>
    %255 = tpu.memref_slice %arg8[%c3_i32_149] : memref<4x!tpu.dma_semaphore, #tpu.memory_space<semaphore_mem>> -> memref<1x!tpu.dma_semaphore, #tpu.memory_space<semaphore_mem>>
    %256 = tpu.memref_squeeze %255 : memref<1x!tpu.dma_semaphore, #tpu.memory_space<semaphore_mem>> -> memref<!tpu.dma_semaphore, #tpu.memory_space<semaphore_mem>>
    tpu.enqueue_dma source(%253 : memref<1x128xf32, #tpu.memory_space<any>>) target(%254 : memref<1x128xf32, #tpu.memory_space<vmem>>) target_semaphore(%256 : memref<!tpu.dma_semaphore, #tpu.memory_space<semaphore_mem>>)
    %c8_i32_152 = arith.constant 8 : i32
    %c0 = arith.constant 0 : index
    %c0_153 = arith.constant 0 : index
    %257 = vector.load %arg4[%c0, %c0_153] : memref<2x128xf32, #tpu.memory_space<vmem>>, vector<2x128xf32>
    %c0_154 = arith.constant 0 : index
    %c0_155 = arith.constant 0 : index
    %258 = vector.load %arg2[%c0_154, %c0_155] : memref<32x1xi32, #tpu.memory_space<vmem>>, vector<32x1xi32>
    %259 = arith.sitofp %258 : vector<32x1xi32> to vector<32x1xf32>
    %260 = vector.extract_strided_slice %257 {offsets = [0, 0], sizes = [1, 128], strides = [1, 1]} : vector<2x128xf32> to vector<1x128xf32>
    %261 = vector.extract_strided_slice %257 {offsets = [1, 0], sizes = [1, 128], strides = [1, 1]} : vector<2x128xf32> to vector<1x128xf32>
    %262 = vector.extract_strided_slice %257 {offsets = [0, 0], sizes = [1, 128], strides = [1, 1]} : vector<2x128xf32> to vector<1x128xf32>
    %263 = arith.subf %261, %262 : vector<1x128xf32>
    %264 = vector.broadcast %259 : vector<32x1xf32> to vector<32x128xf32>
    %265 = vector.broadcast %263 : vector<1x128xf32> to vector<32x128xf32>
    %266 = arith.mulf %264, %265 : vector<32x128xf32>
    %267 = vector.broadcast %260 : vector<1x128xf32> to vector<32x128xf32>
    %268 = arith.addf %267, %266 : vector<32x128xf32>
    %c0_156 = arith.constant 0 : index
    %c0_157 = arith.constant 0 : index
    %269 = vector.load %arg5[%c0_156, %c0_157] : memref<2x128xf32, #tpu.memory_space<vmem>>, vector<1x128xf32>
    %c1 = arith.constant 1 : index
    %c0_158 = arith.constant 0 : index
    %270 = vector.load %arg5[%c1, %c0_158] : memref<2x128xf32, #tpu.memory_space<vmem>>, vector<1x128xf32>
    %c0_i32_159 = arith.constant 0 : i32
    %c0_i32_160 = arith.constant 0 : i32
    %c0_i32_161 = arith.constant 0 : i32
    %271 = tpu.memref_slice %arg3[%c0_i32_160, %c0_i32_161] : memref<64x128xf32, #tpu.memory_space<any>> -> memref<8x128xf32, #tpu.memory_space<any>>
    %c0_i32_162 = arith.constant 0 : i32
    %c0_i32_163 = arith.constant 0 : i32
    %272 = tpu.memref_slice %arg7[%c0_i32_162, %c0_i32_163] : memref<32x128xf32, #tpu.memory_space<vmem>> -> memref<8x128xf32, #tpu.memory_space<vmem>>
    %273 = tpu.memref_slice %arg8[%c0_i32_159] : memref<4x!tpu.dma_semaphore, #tpu.memory_space<semaphore_mem>> -> memref<1x!tpu.dma_semaphore, #tpu.memory_space<semaphore_mem>>
    %274 = tpu.memref_squeeze %273 : memref<1x!tpu.dma_semaphore, #tpu.memory_space<semaphore_mem>> -> memref<!tpu.dma_semaphore, #tpu.memory_space<semaphore_mem>>
    tpu.wait_dma2 semaphore(%274 : memref<!tpu.dma_semaphore, #tpu.memory_space<semaphore_mem>>) src(%271 : memref<8x128xf32, #tpu.memory_space<any>>) dst(%272 : memref<8x128xf32, #tpu.memory_space<vmem>>)
    %275 = vector.extract_strided_slice %268 {offsets = [0, 0], sizes = [8, 128], strides = [1, 1]} : vector<32x128xf32> to vector<8x128xf32>
    %c0_164 = arith.constant 0 : index
    %c0_165 = arith.constant 0 : index
    %276 = vector.load %arg7[%c0_164, %c0_165] : memref<32x128xf32, #tpu.memory_space<vmem>>, vector<8x128xf32>
    %277 = arith.addf %276, %275 : vector<8x128xf32>
    %cst = arith.constant dense<0.000000e+00> : vector<8xf32>
    %278 = vector.multi_reduction <add>, %277, %cst [1] : vector<8x128xf32> to vector<8xf32>
    %279 = vector.shape_cast %278 : vector<8xf32> to vector<8x1xf32>
    %cst_166 = arith.constant 7.812500e-03 : f32
    %280 = vector.broadcast %cst_166 : f32 to vector<8x1xf32>
    %281 = arith.mulf %279, %280 : vector<8x1xf32>
    %282 = vector.broadcast %281 : vector<8x1xf32> to vector<8x128xf32>
    %283 = arith.subf %277, %282 : vector<8x128xf32>
    %284 = arith.mulf %283, %283 : vector<8x128xf32>
    %cst_167 = arith.constant dense<0.000000e+00> : vector<8xf32>
    %285 = vector.multi_reduction <add>, %284, %cst_167 [1] : vector<8x128xf32> to vector<8xf32>
    %286 = vector.shape_cast %285 : vector<8xf32> to vector<8x1xf32>
    %cst_168 = arith.constant 7.812500e-03 : f32
    %287 = vector.broadcast %cst_168 : f32 to vector<8x1xf32>
    %288 = arith.mulf %286, %287 : vector<8x1xf32>
    %cst_169 = arith.constant 9.99999996E-13 : f32
    %289 = vector.broadcast %cst_169 : f32 to vector<8x1xf32>
    %290 = arith.addf %288, %289 : vector<8x1xf32>
    %291 = math.rsqrt %290 : vector<8x1xf32>
    %292 = vector.broadcast %291 : vector<8x1xf32> to vector<8x128xf32>
    %293 = arith.mulf %283, %292 : vector<8x128xf32>
    %294 = vector.broadcast %269 : vector<1x128xf32> to vector<8x128xf32>
    %295 = arith.mulf %293, %294 : vector<8x128xf32>
    %296 = vector.broadcast %270 : vector<1x128xf32> to vector<8x128xf32>
    %297 = arith.addf %295, %296 : vector<8x128xf32>
    %c0_170 = arith.constant 0 : index
    %c0_171 = arith.constant 0 : index
    %298 = vector.load %arg6[%c0_170, %c0_171] : memref<32x128xf32, #tpu.memory_space<vmem>>, vector<8x128xf32>
    tpu.vector_store %arg6[%c0_170, %c0_171], %297 {strides = array<i32>} : memref<32x128xf32, #tpu.memory_space<vmem>>, vector<8x128xf32>,
    %c1_i32_172 = arith.constant 1 : i32
    %c0_i32_173 = arith.constant 0 : i32
    %c0_i32_174 = arith.constant 0 : i32
    %299 = tpu.memref_slice %arg3[%c0_i32_173, %c0_i32_174] : memref<64x128xf32, #tpu.memory_space<any>> -> memref<8x128xf32, #tpu.memory_space<any>>
    %c8_i32_175 = arith.constant 8 : i32
    %c0_i32_176 = arith.constant 0 : i32
    %300 = tpu.memref_slice %arg7[%c8_i32_175, %c0_i32_176] : memref<32x128xf32, #tpu.memory_space<vmem>> -> memref<8x128xf32, #tpu.memory_space<vmem>>
    %301 = tpu.memref_slice %arg8[%c1_i32_172] : memref<4x!tpu.dma_semaphore, #tpu.memory_space<semaphore_mem>> -> memref<1x!tpu.dma_semaphore, #tpu.memory_space<semaphore_mem>>
    %302 = tpu.memref_squeeze %301 : memref<1x!tpu.dma_semaphore, #tpu.memory_space<semaphore_mem>> -> memref<!tpu.dma_semaphore, #tpu.memory_space<semaphore_mem>>
    tpu.wait_dma2 semaphore(%302 : memref<!tpu.dma_semaphore, #tpu.memory_space<semaphore_mem>>) src(%299 : memref<8x128xf32, #tpu.memory_space<any>>) dst(%300 : memref<8x128xf32, #tpu.memory_space<vmem>>)
    %303 = vector.extract_strided_slice %268 {offsets = [8, 0], sizes = [8, 128], strides = [1, 1]} : vector<32x128xf32> to vector<8x128xf32>
    %c8 = arith.constant 8 : index
    %c0_177 = arith.constant 0 : index
    %304 = vector.load %arg7[%c8, %c0_177] : memref<32x128xf32, #tpu.memory_space<vmem>>, vector<8x128xf32>
    %305 = arith.addf %304, %303 : vector<8x128xf32>
    %cst_178 = arith.constant dense<0.000000e+00> : vector<8xf32>
    %306 = vector.multi_reduction <add>, %305, %cst_178 [1] : vector<8x128xf32> to vector<8xf32>
    %307 = vector.shape_cast %306 : vector<8xf32> to vector<8x1xf32>
    %cst_179 = arith.constant 7.812500e-03 : f32
    %308 = vector.broadcast %cst_179 : f32 to vector<8x1xf32>
    %309 = arith.mulf %307, %308 : vector<8x1xf32>
    %310 = vector.broadcast %309 : vector<8x1xf32> to vector<8x128xf32>
    %311 = arith.subf %305, %310 : vector<8x128xf32>
    %312 = arith.mulf %311, %311 : vector<8x128xf32>
    %cst_180 = arith.constant dense<0.000000e+00> : vector<8xf32>
    %313 = vector.multi_reduction <add>, %312, %cst_180 [1] : vector<8x128xf32> to vector<8xf32>
    %314 = vector.shape_cast %313 : vector<8xf32> to vector<8x1xf32>
    %cst_181 = arith.constant 7.812500e-03 : f32
    %315 = vector.broadcast %cst_181 : f32 to vector<8x1xf32>
    %316 = arith.mulf %314, %315 : vector<8x1xf32>
    %cst_182 = arith.constant 9.99999996E-13 : f32
    %317 = vector.broadcast %cst_182 : f32 to vector<8x1xf32>
    %318 = arith.addf %316, %317 : vector<8x1xf32>
    %319 = math.rsqrt %318 : vector<8x1xf32>
    %320 = vector.broadcast %319 : vector<8x1xf32> to vector<8x128xf32>
    %321 = arith.mulf %311, %320 : vector<8x128xf32>
    %322 = vector.broadcast %269 : vector<1x128xf32> to vector<8x128xf32>
    %323 = arith.mulf %321, %322 : vector<8x128xf32>
    %324 = vector.broadcast %270 : vector<1x128xf32> to vector<8x128xf32>
    %325 = arith.addf %323, %324 : vector<8x128xf32>
    %c8_183 = arith.constant 8 : index
    %c0_184 = arith.constant 0 : index
    %326 = vector.load %arg6[%c8_183, %c0_184] : memref<32x128xf32, #tpu.memory_space<vmem>>, vector<8x128xf32>
    tpu.vector_store %arg6[%c8_183, %c0_184], %325 {strides = array<i32>} : memref<32x128xf32, #tpu.memory_space<vmem>>, vector<8x128xf32>,
    %c2_i32_185 = arith.constant 2 : i32
    %c0_i32_186 = arith.constant 0 : i32
    %c0_i32_187 = arith.constant 0 : i32
    %327 = tpu.memref_slice %arg3[%c0_i32_186, %c0_i32_187] : memref<64x128xf32, #tpu.memory_space<any>> -> memref<8x128xf32, #tpu.memory_space<any>>
    %c16_i32_188 = arith.constant 16 : i32
    %c0_i32_189 = arith.constant 0 : i32
    %328 = tpu.memref_slice %arg7[%c16_i32_188, %c0_i32_189] : memref<32x128xf32, #tpu.memory_space<vmem>> -> memref<8x128xf32, #tpu.memory_space<vmem>>
    %329 = tpu.memref_slice %arg8[%c2_i32_185] : memref<4x!tpu.dma_semaphore, #tpu.memory_space<semaphore_mem>> -> memref<1x!tpu.dma_semaphore, #tpu.memory_space<semaphore_mem>>
    %330 = tpu.memref_squeeze %329 : memref<1x!tpu.dma_semaphore, #tpu.memory_space<semaphore_mem>> -> memref<!tpu.dma_semaphore, #tpu.memory_space<semaphore_mem>>
    tpu.wait_dma2 semaphore(%330 : memref<!tpu.dma_semaphore, #tpu.memory_space<semaphore_mem>>) src(%327 : memref<8x128xf32, #tpu.memory_space<any>>) dst(%328 : memref<8x128xf32, #tpu.memory_space<vmem>>)
    %331 = vector.extract_strided_slice %268 {offsets = [16, 0], sizes = [8, 128], strides = [1, 1]} : vector<32x128xf32> to vector<8x128xf32>
    %c16 = arith.constant 16 : index
    %c0_190 = arith.constant 0 : index
    %332 = vector.load %arg7[%c16, %c0_190] : memref<32x128xf32, #tpu.memory_space<vmem>>, vector<8x128xf32>
    %333 = arith.addf %332, %331 : vector<8x128xf32>
    %cst_191 = arith.constant dense<0.000000e+00> : vector<8xf32>
    %334 = vector.multi_reduction <add>, %333, %cst_191 [1] : vector<8x128xf32> to vector<8xf32>
    %335 = vector.shape_cast %334 : vector<8xf32> to vector<8x1xf32>
    %cst_192 = arith.constant 7.812500e-03 : f32
    %336 = vector.broadcast %cst_192 : f32 to vector<8x1xf32>
    %337 = arith.mulf %335, %336 : vector<8x1xf32>
    %338 = vector.broadcast %337 : vector<8x1xf32> to vector<8x128xf32>
    %339 = arith.subf %333, %338 : vector<8x128xf32>
    %340 = arith.mulf %339, %339 : vector<8x128xf32>
    %cst_193 = arith.constant dense<0.000000e+00> : vector<8xf32>
    %341 = vector.multi_reduction <add>, %340, %cst_193 [1] : vector<8x128xf32> to vector<8xf32>
    %342 = vector.shape_cast %341 : vector<8xf32> to vector<8x1xf32>
    %cst_194 = arith.constant 7.812500e-03 : f32
    %343 = vector.broadcast %cst_194 : f32 to vector<8x1xf32>
    %344 = arith.mulf %342, %343 : vector<8x1xf32>
    %cst_195 = arith.constant 9.99999996E-13 : f32
    %345 = vector.broadcast %cst_195 : f32 to vector<8x1xf32>
    %346 = arith.addf %344, %345 : vector<8x1xf32>
    %347 = math.rsqrt %346 : vector<8x1xf32>
    %348 = vector.broadcast %347 : vector<8x1xf32> to vector<8x128xf32>
    %349 = arith.mulf %339, %348 : vector<8x128xf32>
    %350 = vector.broadcast %269 : vector<1x128xf32> to vector<8x128xf32>
    %351 = arith.mulf %349, %350 : vector<8x128xf32>
    %352 = vector.broadcast %270 : vector<1x128xf32> to vector<8x128xf32>
    %353 = arith.addf %351, %352 : vector<8x128xf32>
    %c16_196 = arith.constant 16 : index
    %c0_197 = arith.constant 0 : index
    %354 = vector.load %arg6[%c16_196, %c0_197] : memref<32x128xf32, #tpu.memory_space<vmem>>, vector<8x128xf32>
    tpu.vector_store %arg6[%c16_196, %c0_197], %353 {strides = array<i32>} : memref<32x128xf32, #tpu.memory_space<vmem>>, vector<8x128xf32>,
    %c3_i32_198 = arith.constant 3 : i32
    %c0_i32_199 = arith.constant 0 : i32
    %c0_i32_200 = arith.constant 0 : i32
    %355 = tpu.memref_slice %arg3[%c0_i32_199, %c0_i32_200] : memref<64x128xf32, #tpu.memory_space<any>> -> memref<8x128xf32, #tpu.memory_space<any>>
    %c24_i32_201 = arith.constant 24 : i32
    %c0_i32_202 = arith.constant 0 : i32
    %356 = tpu.memref_slice %arg7[%c24_i32_201, %c0_i32_202] : memref<32x128xf32, #tpu.memory_space<vmem>> -> memref<8x128xf32, #tpu.memory_space<vmem>>
    %357 = tpu.memref_slice %arg8[%c3_i32_198] : memref<4x!tpu.dma_semaphore, #tpu.memory_space<semaphore_mem>> -> memref<1x!tpu.dma_semaphore, #tpu.memory_space<semaphore_mem>>
    %358 = tpu.memref_squeeze %357 : memref<1x!tpu.dma_semaphore, #tpu.memory_space<semaphore_mem>> -> memref<!tpu.dma_semaphore, #tpu.memory_space<semaphore_mem>>
    tpu.wait_dma2 semaphore(%358 : memref<!tpu.dma_semaphore, #tpu.memory_space<semaphore_mem>>) src(%355 : memref<8x128xf32, #tpu.memory_space<any>>) dst(%356 : memref<8x128xf32, #tpu.memory_space<vmem>>)
    %359 = vector.extract_strided_slice %268 {offsets = [24, 0], sizes = [8, 128], strides = [1, 1]} : vector<32x128xf32> to vector<8x128xf32>
    %c24 = arith.constant 24 : index
    %c0_203 = arith.constant 0 : index
    %360 = vector.load %arg7[%c24, %c0_203] : memref<32x128xf32, #tpu.memory_space<vmem>>, vector<8x128xf32>
    %361 = arith.addf %360, %359 : vector<8x128xf32>
    %cst_204 = arith.constant dense<0.000000e+00> : vector<8xf32>
    %362 = vector.multi_reduction <add>, %361, %cst_204 [1] : vector<8x128xf32> to vector<8xf32>
    %363 = vector.shape_cast %362 : vector<8xf32> to vector<8x1xf32>
    %cst_205 = arith.constant 7.812500e-03 : f32
    %364 = vector.broadcast %cst_205 : f32 to vector<8x1xf32>
    %365 = arith.mulf %363, %364 : vector<8x1xf32>
    %366 = vector.broadcast %365 : vector<8x1xf32> to vector<8x128xf32>
    %367 = arith.subf %361, %366 : vector<8x128xf32>
    %368 = arith.mulf %367, %367 : vector<8x128xf32>
    %cst_206 = arith.constant dense<0.000000e+00> : vector<8xf32>
    %369 = vector.multi_reduction <add>, %368, %cst_206 [1] : vector<8x128xf32> to vector<8xf32>
    %370 = vector.shape_cast %369 : vector<8xf32> to vector<8x1xf32>
    %cst_207 = arith.constant 7.812500e-03 : f32
    %371 = vector.broadcast %cst_207 : f32 to vector<8x1xf32>
    %372 = arith.mulf %370, %371 : vector<8x1xf32>
    %cst_208 = arith.constant 9.99999996E-13 : f32
    %373 = vector.broadcast %cst_208 : f32 to vector<8x1xf32>
    %374 = arith.addf %372, %373 : vector<8x1xf32>
    %375 = math.rsqrt %374 : vector<8x1xf32>
    %376 = vector.broadcast %375 : vector<8x1xf32> to vector<8x128xf32>
    %377 = arith.mulf %367, %376 : vector<8x128xf32>
    %378 = vector.broadcast %269 : vector<1x128xf32> to vector<8x128xf32>
    %379 = arith.mulf %377, %378 : vector<8x128xf32>
    %380 = vector.broadcast %270 : vector<1x128xf32> to vector<8x128xf32>
    %381 = arith.addf %379, %380 : vector<8x128xf32>
    %c24_209 = arith.constant 24 : index
    %c0_210 = arith.constant 0 : index
    %382 = vector.load %arg6[%c24_209, %c0_210] : memref<32x128xf32, #tpu.memory_space<vmem>>, vector<8x128xf32>
    tpu.vector_store %arg6[%c24_209, %c0_210], %381 {strides = array<i32>} : memref<32x128xf32, #tpu.memory_space<vmem>>, vector<8x128xf32>,
    return
  }
  func.func @transform_0(%arg0: i32, %arg1: memref<64xi32, #tpu.memory_space<smem>>) -> (i32, i32) {
    %c0_i32 = arith.constant 0 : i32
    %c0_i32_0 = arith.constant 0 : i32
    return %arg0, %c0_i32 : i32, i32
  }
  func.func @transform_2(%arg0: i32, %arg1: memref<64xi32, #tpu.memory_space<smem>>) -> (i32, i32) {
    %c0_i32 = arith.constant 0 : i32
    %c0_i32_0 = arith.constant 0 : i32
    %c0_i32_1 = arith.constant 0 : i32
    return %c0_i32, %c0_i32_0 : i32, i32
  }
  func.func @transform_3(%arg0: i32, %arg1: memref<64xi32, #tpu.memory_space<smem>>) -> (i32, i32) {
    %c0_i32 = arith.constant 0 : i32
    %c0_i32_0 = arith.constant 0 : i32
    %c0_i32_1 = arith.constant 0 : i32
    return %c0_i32, %c0_i32_0 : i32, i32
  }
  func.func @transform_4(%arg0: i32, %arg1: memref<64xi32, #tpu.memory_space<smem>>) -> (i32, i32) {
    %c0_i32 = arith.constant 0 : i32
    %c0_i32_0 = arith.constant 0 : i32
    return %arg0, %c0_i32 : i32, i32
  }
}

</mosaic_0001>

<llo_original>
// kernel: tpu_custom_call.1
$region0: #{tpu_custom_call.1}
  #allocation0 [shape = 'u32[]', space=smem, size = 0x4, offset = 0x4, fixed_abs, tag = 'smem constant byte address 0x4 - core index']
  #allocation1 [shape = 'u32[144,128]{1,0:T(1,128)}', space=vmem, size = 0x12000, scoped, tag = 'internal scratch']
  #allocation2 [shape = 'f32[32,128]{1,0:T(8,128)}', space=vmem, size = 0x4000, scoped, tag = 'scratch operand']
  #allocation3 [shape = 's32[4]{0}', space=sflag, size = 0x10, scoped, tag = 'scratch operand']
  #allocation4 [shape = 's32[1]{0}', space=sflag, size = 0x4, scoped, tag = 'scoped memory for tpu_custom_call.1']
  #allocation5 [shape = 'u8[512]{0}', space=smem, size = 0x200, scoped, tag = 'prefetched SMEM operand 0']
  #allocation8 [shape = 's32[]', space=sflag, size = 0x4, offset = 0, fixed_abs, tag = 'sflag constant byte address 0x0 - dummy sync flag']
  #allocation9 [shape = 's32[]', space=sflag, size = 0x4, offset = 0, fixed_abs, tag = 'sflag constant byte address 0x0 - dummy sync flag']
  #allocation10 [shape = 's32[]', space=sflag, size = 0x4, offset = 0, fixed_abs, tag = 'sflag constant byte address 0x0 - dummy sync flag']
  #allocation11 [shape = 's32[]', space=sflag, size = 0x4, offset = 0, fixed_abs, tag = 'sflag constant byte address 0x0 - dummy sync flag']
  #allocation12 [shape = 's32[]', space=sflag, size = 0x4, offset = 0, fixed_abs, tag = 'sflag constant byte address 0x0 - dummy sync flag']
  #allocation13 [shape = 's32[]', space=sflag, size = 0x4, offset = 0, fixed_abs, tag = 'sflag constant byte address 0x0 - dummy sync flag']
  #allocation14 [shape = 's32[]', space=sflag, size = 0x4, offset = 0, fixed_abs, tag = 'sflag constant byte address 0x0 - dummy sync flag']
  #allocation15 [shape = 's32[]', space=sflag, size = 0x4, offset = 0, fixed_abs, tag = 'sflag constant byte address 0x0 - dummy sync flag']
  #allocation16 [shape = 's32[]', space=sflag, size = 0x4, offset = 0, fixed_abs, tag = 'sflag constant byte address 0x0 - dummy sync flag']
  #allocation17 [shape = 's32[]', space=sflag, size = 0x4, offset = 0, fixed_abs, tag = 'sflag constant byte address 0x0 - dummy sync flag']
  #allocation18 [shape = 's32[]', space=sflag, size = 0x4, offset = 0, fixed_abs, tag = 'sflag constant byte address 0x0 - dummy sync flag']
  #allocation19 [shape = 's32[]', space=sflag, size = 0x4, offset = 0, fixed_abs, tag = 'sflag constant byte address 0x0 - dummy sync flag']
  #allocation20 [shape = 's32[]', space=sflag, size = 0x4, offset = 0, fixed_abs, tag = 'sflag constant byte address 0x0 - dummy sync flag']
  #allocation21 [shape = 's32[]', space=sflag, size = 0x4, offset = 0, fixed_abs, tag = 'sflag constant byte address 0x0 - dummy sync flag']
  #allocation22 [shape = 's32[]', space=sflag, size = 0x4, offset = 0, fixed_abs, tag = 'sflag constant byte address 0x0 - dummy sync flag']
  #allocation23 [shape = 's32[]', space=sflag, size = 0x4, offset = 0, fixed_abs, tag = 'sflag constant byte address 0x0 - dummy sync flag']
  #allocation24 [shape = 's32[]', space=sflag, size = 0x4, offset = 0, fixed_abs, tag = 'sflag constant byte address 0x0 - dummy sync flag']
  #allocation25 [shape = 's32[]', space=sflag, size = 0x4, offset = 0, fixed_abs, tag = 'sflag constant byte address 0x0 - dummy sync flag']
  #allocation26 [shape = 's32[]', space=sflag, size = 0x4, offset = 0, fixed_abs, tag = 'sflag constant byte address 0x0 - dummy sync flag']
  #allocation27 [shape = 's32[]', space=sflag, size = 0x4, offset = 0, fixed_abs, tag = 'sflag constant byte address 0x0 - dummy sync flag']
  #allocation28 [shape = 's32[]', space=sflag, size = 0x4, offset = 0, fixed_abs, tag = 'sflag constant byte address 0x0 - dummy sync flag']
  #allocation29 [shape = 's32[]', space=sflag, size = 0x4, offset = 0, fixed_abs, tag = 'sflag constant byte address 0x0 - dummy sync flag']
  #allocation30 [shape = 's32[]', space=sflag, size = 0x4, offset = 0, fixed_abs, tag = 'sflag constant byte address 0x0 - dummy sync flag']
  #allocation31 [shape = 's32[]', space=sflag, size = 0x4, offset = 0, fixed_abs, tag = 'sflag constant byte address 0x0 - dummy sync flag']
  #allocation32 [shape = 's32[]', space=sflag, size = 0x4, offset = 0, fixed_abs, tag = 'sflag constant byte address 0x0 - dummy sync flag']
  #allocation33 [shape = 's32[]', space=sflag, size = 0x4, offset = 0, fixed_abs, tag = 'sflag constant byte address 0x0 - dummy sync flag']
  #allocation34 [shape = 's32[]', space=sflag, size = 0x4, offset = 0, fixed_abs, tag = 'sflag constant byte address 0x0 - dummy sync flag']
  #allocation35 [shape = 's32[]', space=sflag, size = 0x4, offset = 0, fixed_abs, tag = 'sflag constant byte address 0x0 - dummy sync flag']
  #allocation36 [shape = 's32[]', space=sflag, size = 0x4, offset = 0, fixed_abs, tag = 'sflag constant byte address 0x0 - dummy sync flag']
  #allocation37 [shape = 's32[]', space=sflag, size = 0x4, offset = 0, fixed_abs, tag = 'sflag constant byte address 0x0 - dummy sync flag']
  #allocation38 [shape = 's32[]', space=sflag, size = 0x4, offset = 0, fixed_abs, tag = 'sflag constant byte address 0x0 - dummy sync flag']
  #allocation39 [shape = 's32[]', space=sflag, size = 0x4, offset = 0, fixed_abs, tag = 'sflag constant byte address 0x0 - dummy sync flag']
  %s0 = inlined_call_operand.vmem [shape: s32[64], index: 0, kind: input, shape index: {}]
  %s1 = inlined_call_operand.vmem [shape: s32[64,1], index: 1, kind: input, shape index: {}]
  %s2 = inlined_call_operand.vmem [shape: f32[64,128], index: 2, kind: input, shape index: {}]
  %s3 = inlined_call_operand.vmem [shape: f32[2,128], index: 3, kind: input, shape index: {}]
  %s4 = inlined_call_operand.vmem [shape: f32[2,128], index: 4, kind: input, shape index: {}]
  %s5 = inlined_call_operand.hbm [shape: f32[64,128], index: 5, kind: output, shape index: {}]
  %s6 = sld [smem:[#allocation0]]
  $region1005: #{tpu_custom_call.1} parent=0
    _
  %s8 = ssub.s32 1, %s6
  %s9 = scalar_select 0, %s8, %s6
  %s10 = sshll.u32 %s0, 4
  %s11 = int_to_ptr.vmem [resolvable:$true] %s10
  %13 = dma.vmem_to_smem %s11, 16, [#allocation5], [#allocation4]
  %14 = dma.done [#allocation4], 16
  %15 = sfence
  $region1: #{tpu_custom_call.1} parent=0
    #allocation6 [shape = 'u8[32768]{0}', space=vmem, size = 0x8000, scoped, tag = 'output window, operand 0']
    #allocation7 [shape = 's32[2]{0}', space=sflag, size = 0x8, scoped, tag = 'scoped memory for tpu_custom_call.1']
    %16 = vsyncpa [#allocation7], 0
    %s17 = scalar_lea.sflag [#allocation7], 1
    %18 = vsyncpa %s17, 0
    loop: start=0, step=1, limit=4
    $region2: #{tpu_custom_call.1} parent=1 // loop_pre_header
      _
    $region3: #{tpu_custom_call.1} parent=1 // loop_header
      %s20 = sphi 0, %s24
      %p21 = scmp.ge.s32.totalorder %s20, 4
      %s30 = sphi 0, %s32
      %s33 = sphi 0, %s30
      %s34 = sphi 0, %s33
      %s50 = sphi 0, %s34
      %s54 = sphi 0, %s54
      %s56 = sphi 0, %s54
      %s57 = sphi 0, %s56
      %s71 = sphi 0, %s57
      %s75 = sphi 0, %s75
      %s77 = sphi 0, %s75
      %s78 = sphi 0, %s77
      %s92 = sphi 0, %s78
      %s98 = sphi 0, %s100
      %s101 = sphi 0, %s98
      %s102 = sphi 0, %s101
      %s118 = sphi 0, %s102
    $region4: #{tpu_custom_call.1} parent=1 // loop_header_branch
      %23 = sbr.rel (%p21) target = $region8
    $region5: #{tpu_custom_call.1} parent=1 // loop_body
      %s25 = ssub.s32 %s20, 1
      %s26 = ssub.s32 %s20, 2
      %s27 = sadd.s32 %s20, 1
      %s28 = ssub.s32 %s20, %s27
      %p29 = scmp.eq.s32.totalorder %s28, 0
      %s31 = sadd.s32 %s30, 1
      %s32 = scalar_select %p29, %s30, %s31
      %p35 = pneg %p29
      %p36 = scmp.eq.s32.totalorder %s20, 1
      %p37 = por %p35, %p36
      %p38 = scmp.ne.s32.totalorder %s30, %s33
      %p39 = scmp.eq.s32.totalorder %s20, 0
      %p40 = por %p38, %p39
      %p41 = scmp.ne.s32.totalorder %s30, %s33
      %p42 = scmp.eq.s32.totalorder %s25, 1
      %p43 = por %p41, %p42
      %p44 = scmp.ne.s32.totalorder %s33, %s34
      %p45 = scmp.eq.s32.totalorder %s25, 0
      %p46 = por %p44, %p45
      %p47 = scmp.ne.s32.totalorder %s33, %s34
      %p48 = scmp.eq.s32.totalorder %s26, 1
      %p49 = por %p47, %p48
      %p51 = scmp.ne.s32.totalorder %s34, %s50
      %p52 = scmp.eq.s32.totalorder %s26, 0
      %p53 = por %p51, %p52
      %s55 = sadd.s32 %s54, 1
      %p58 = scmp.eq.s32.totalorder %s20, 1
      %p59 = scmp.ne.s32.totalorder %s54, %s56
      %p60 = scmp.eq.s32.totalorder %s20, 0
      %p61 = por %p59, %p60
      %p62 = scmp.ne.s32.totalorder %s54, %s56
      %p63 = scmp.eq.s32.totalorder %s25, 1
      %p64 = por %p62, %p63
      %p65 = scmp.ne.s32.totalorder %s56, %s57
      %p66 = scmp.eq.s32.totalorder %s25, 0
      %p67 = por %p65, %p66
      %p68 = scmp.ne.s32.totalorder %s56, %s57
      %p69 = scmp.eq.s32.totalorder %s26, 1
      %p70 = por %p68, %p69
      %p72 = scmp.ne.s32.totalorder %s57, %s71
      %p73 = scmp.eq.s32.totalorder %s26, 0
      %p74 = por %p72, %p73
      %s76 = sadd.s32 %s75, 1
      %p79 = scmp.eq.s32.totalorder %s20, 1
      %p80 = scmp.ne.s32.totalorder %s75, %s77
      %p81 = scmp.eq.s32.totalorder %s20, 0
      %p82 = por %p80, %p81
      %p83 = scmp.ne.s32.totalorder %s75, %s77
      %p84 = scmp.eq.s32.totalorder %s25, 1
      %p85 = por %p83, %p84
      %p86 = scmp.ne.s32.totalorder %s77, %s78
      %p87 = scmp.eq.s32.totalorder %s25, 0
      %p88 = por %p86, %p87
      %p89 = scmp.ne.s32.totalorder %s77, %s78
      %p90 = scmp.eq.s32.totalorder %s26, 1
      %p91 = por %p89, %p90
      %p93 = scmp.ne.s32.totalorder %s78, %s92
      %p94 = scmp.eq.s32.totalorder %s26, 0
      %p95 = por %p93, %p94
      %s96 = ssub.s32 %s20, %s27
      %p97 = scmp.eq.s32.totalorder %s96, 0
      %s99 = sadd.s32 %s98, 1
      %s100 = scalar_select %p97, %s98, %s99
      %p103 = pneg %p97
      %p104 = scmp.eq.s32.totalorder %s20, 1
      %p105 = por %p103, %p104
      %p106 = scmp.ne.s32.totalorder %s98, %s101
      %p107 = scmp.eq.s32.totalorder %s20, 0
      %p108 = por %p106, %p107
      %p109 = scmp.ne.s32.totalorder %s98, %s101
      %p110 = scmp.eq.s32.totalorder %s25, 1
      %p111 = por %p109, %p110
      %p112 = scmp.ne.s32.totalorder %s101, %s102
      %p113 = scmp.eq.s32.totalorder %s25, 0
      %p114 = por %p112, %p113
      %p115 = scmp.ne.s32.totalorder %s101, %s102
      %p116 = scmp.eq.s32.totalorder %s26, 1
      %p117 = por %p115, %p116
      %p119 = scmp.ne.s32.totalorder %s102, %s118
      %p120 = scmp.eq.s32.totalorder %s26, 0
      %p121 = por %p119, %p120
      %p122 = scmp.le.s32.totalorder 1, %s20
      %p123 = scmp.lt.s32.totalorder %s20, 3
      %p124 = pnand %p122, %p123
      %p125 = pneg %p124
      // Predicated region
      $region9: #{tpu_custom_call.1} parent=5 // pred_check
        _
      $region10: #{tpu_custom_call.1} parent=5 // pred_check_branch
        %127 = sbr.rel (%p124) target = $region12
      $region11: #{tpu_custom_call.1} parent=5 // pred_region
        %s128 = ssub.s32 %s20, 1
        // Predicated region
        $region13: #{tpu_custom_call.1} parent=11 // pred_check
          %p129 = pneg %p67
        $region14: #{tpu_custom_call.1} parent=11 // pred_check_branch
          %131 = sbr.rel (%p129) target = $region16
        $region15: #{tpu_custom_call.1} parent=11 // pred_region
          _
        $region16: #{tpu_custom_call.1} parent=11 // pred_fallthru
          _
        // Predicated region
        $region17: #{tpu_custom_call.1} parent=11 // pred_check
          %p132 = pneg %p88
        $region18: #{tpu_custom_call.1} parent=11 // pred_check_branch
          %134 = sbr.rel (%p132) target = $region20
        $region19: #{tpu_custom_call.1} parent=11 // pred_region
          _
        $region20: #{tpu_custom_call.1} parent=11 // pred_fallthru
          _
      $region12: #{tpu_custom_call.1} parent=5 // pred_fallthru
        _
      %p135 = scmp.lt.s32.totalorder %s20, 2
      // Predicated region
      $region21: #{tpu_custom_call.1} parent=5 // pred_check
        %p136 = pneg %p135
      $region22: #{tpu_custom_call.1} parent=5 // pred_check_branch
        %138 = sbr.rel (%p136) target = $region24
      $region23: #{tpu_custom_call.1} parent=5 // pred_region
        // Predicated region
        $region25: #{tpu_custom_call.1} parent=23 // pred_check
          %p139 = pneg %p40
        $region26: #{tpu_custom_call.1} parent=23 // pred_check_branch
          %141 = sbr.rel (%p139) target = $region28
        $region27: #{tpu_custom_call.1} parent=23 // pred_region
          %s142 = smul.u32 4, %s20
          %p143 = scmp.lt.s32.totalorder %s142, 7
          %s144 = scalar_select %p143, %s142, 7
          %s145 = smul.addr %s144, 8
          %s146 = scalar_lea.vmem %s1, %s145
          %s147 = smul.u32 4, %s20
        $region28: #{tpu_custom_call.1} parent=23 // pred_fallthru
          _
      $region24: #{tpu_custom_call.1} parent=5 // pred_fallthru
        _
      %p148 = scmp.le.s32.totalorder 1, %s20
      %p149 = scmp.lt.s32.totalorder %s20, 3
      %p150 = pnand %p148, %p149
      %p151 = pneg %p150
      // Predicated region
      $region29: #{tpu_custom_call.1} parent=5 // pred_check
        _
      $region30: #{tpu_custom_call.1} parent=5 // pred_check_branch
        %153 = sbr.rel (%p150) target = $region32
      $region31: #{tpu_custom_call.1} parent=5 // pred_region
        %s154 = ssub.s32 %s20, 1
        %s155 = smul.u32 4, %s25
        %p156 = scmp.lt.s32.totalorder %s155, 7
        %s157 = scalar_select %p156, %s155, 7
        %s158 = smul.addr %s157, 8
        %s159 = scalar_lea.vmem %s1, %s158
        %p160 = pneg %p46
        %p161 = pneg %p43
        %p162 = pneg %p67
        %p163 = pneg %p64
        %p164 = pneg %p88
        %p165 = pneg %p85
        %p166 = pneg %p114
        %p167 = pneg %p111
        %s168 = sand.u32 %s101, 1
        %s169 = scalar_lea.sflag [#allocation7], %s168
        %s170 = sand.u32 %s101, 1
        %s171 = smul.addr %s170, 32
        %s172 = scalar_lea.vmem [#allocation6], %s171
        %s173 = smul.u32 4, %s25
        %p174 = scmp.lt.s32.totalorder %s173, 7
        %s175 = scalar_select %p174, %s173, 7
        %s176 = smul.addr %s175, 8
        %s177 = scalar_lea.vmem %s1, %s176
        %s178 = smul.u32 4, %s25
        %s179 = smul.u32 4, %s25
        %s180 = smul.u32 %s25, 32
        %s181 = sld [smem:[#allocation5 + %s180]]
        %s182 = scalar_lea.vmem %s2, %s181
        %p184 = scmp.lt.u32.totalorder 1, 8
        %p185 = pneg %p184
        // Predicated region
        $region33: #{tpu_custom_call.1} parent=31 // pred_check
          _
        $region34: #{tpu_custom_call.1} parent=31 // pred_check_branch
          %187 = sbr.rel (%p184) target = $region36
        $region35: #{tpu_custom_call.1} parent=31 // pred_region
          %s202 = sand.u32 1, 7
          %p203 = scmp.eq.s32.totalorder %s202, 0
          %p204 = pneg %p203
          // Predicated region
          $region48: #{tpu_custom_call.1} parent=35 // pred_check
            _
          $region49: #{tpu_custom_call.1} parent=35 // pred_check_branch
            %206 = sbr.rel (%p203) target = $region51
          $region50: #{tpu_custom_call.1} parent=35 // pred_region
            %s207 = sand.u32 1, 7
            %s208 = ssub.s32 1, %s207
            %s209 = scalar_lea.vmem %s182, %s208
            %s210 = ssub.s32 1, %s207
            %s211 = scalar_lea.vmem [#allocation2], %s210
            %s212 = sshllo.u32 0, %s207
            loop: start=0, step=1, limit=1
            $region52: #{tpu_custom_call.1} parent=50 // loop_pre_header
              _
            $region53: #{tpu_custom_call.1} parent=50 // loop_header
              %s214 = sphi 0, %s218
              %p215 = scmp.ge.s32.totalorder %s214, 1
              %s219 = sphi %s209, %s209
              %s220 = sphi %s211, %s211
            $region54: #{tpu_custom_call.1} parent=50 // loop_header_branch
              %217 = sbr.rel (%p215) target = $region58
            $region55: #{tpu_custom_call.1} parent=50 // loop_body
              %v221 = vld [vmem:[%s219] sm:%s212]
              %222 = vst [vmem:[%s220] sm:%s212] %v221
            $region56: #{tpu_custom_call.1} parent=50 // loop_footer
              %s218 = sadd.s32 1, %s214
            $region57: #{tpu_custom_call.1} parent=50 // loop_footer_branch
              %213 = sbr.rel target = $region53
            $region58: #{tpu_custom_call.1} parent=50 // loop_exit
              _
          $region51: #{tpu_custom_call.1} parent=35 // pred_fallthru
            _
        $region36: #{tpu_custom_call.1} parent=31 // pred_fallthru
          _
        // Predicated region
        $region37: #{tpu_custom_call.1} parent=31 // pred_check
          %p188 = pneg %p184
        $region38: #{tpu_custom_call.1} parent=31 // pred_check_branch
          %190 = sbr.rel (%p188) target = $region40
        $region39: #{tpu_custom_call.1} parent=31 // pred_region
          %s191 = sshllo.u32 0, 1
          loop: start=0, step=1, limit=1
          $region41: #{tpu_custom_call.1} parent=39 // loop_pre_header
            _
          $region42: #{tpu_custom_call.1} parent=39 // loop_header
            %s193 = sphi 0, %s197
            %p194 = scmp.ge.s32.totalorder %s193, 1
            %s198 = sphi %s182, %s182
            %s199 = sphi [#allocation2], [#allocation2]
          $region43: #{tpu_custom_call.1} parent=39 // loop_header_branch
            %196 = sbr.rel (%p194) target = $region47
          $region44: #{tpu_custom_call.1} parent=39 // loop_body
            %v200 = vld [vmem:[%s198] sm:%s191]
            %201 = vst [vmem:[%s199] sm:%s191] %v200
          $region45: #{tpu_custom_call.1} parent=39 // loop_footer
            %s197 = sadd.s32 1, %s193
          $region46: #{tpu_custom_call.1} parent=39 // loop_footer_branch
            %192 = sbr.rel target = $region42
          $region47: #{tpu_custom_call.1} parent=39 // loop_exit
            _
        $region40: #{tpu_custom_call.1} parent=31 // pred_fallthru
          _
        // Predicated region
        $region59: #{tpu_custom_call.1} parent=31 // pred_check
          _
        $region60: #{tpu_custom_call.1} parent=31 // pred_check_branch
          %225 = sbr.rel (0) target = $region62
        $region61: #{tpu_custom_call.1} parent=31 // pred_region
          %226 = vsyncadd [#allocation3], 16
        $region62: #{tpu_custom_call.1} parent=31 // pred_fallthru
          _
        %s227 = sadd.s32 %s180, 1
        %s228 = sld [smem:[#allocation5 + %s227]]
        %s229 = scalar_lea.vmem %s2, %s228
        %s230 = scalar_lea.vmem [#allocation2], 1
        %p232 = scmp.lt.u32.totalorder 1, 8
        %p233 = pneg %p232
        // Predicated region
        $region63: #{tpu_custom_call.1} parent=31 // pred_check
          _
        $region64: #{tpu_custom_call.1} parent=31 // pred_check_branch
          %235 = sbr.rel (%p232) target = $region66
        $region65: #{tpu_custom_call.1} parent=31 // pred_region
          %s250 = sand.u32 1, 7
          %p251 = scmp.eq.s32.totalorder %s250, 0
          %p252 = pneg %p251
          // Predicated region
          $region78: #{tpu_custom_call.1} parent=65 // pred_check
            _
          $region79: #{tpu_custom_call.1} parent=65 // pred_check_branch
            %254 = sbr.rel (%p251) target = $region81
          $region80: #{tpu_custom_call.1} parent=65 // pred_region
            %s255 = sand.u32 1, 7
            %s256 = ssub.s32 1, %s255
            %s257 = scalar_lea.vmem %s229, %s256
            %s258 = ssub.s32 1, %s255
            %s259 = scalar_lea.vmem %s230, %s258 [#allocation2]
            %s260 = sshllo.u32 0, %s255
            loop: start=0, step=1, limit=1
            $region82: #{tpu_custom_call.1} parent=80 // loop_pre_header
              _
            $region83: #{tpu_custom_call.1} parent=80 // loop_header
              %s262 = sphi 0, %s266
              %p263 = scmp.ge.s32.totalorder %s262, 1
              %s267 = sphi %s257, %s257
              %s268 = sphi %s259, %s259
            $region84: #{tpu_custom_call.1} parent=80 // loop_header_branch
              %265 = sbr.rel (%p263) target = $region88
            $region85: #{tpu_custom_call.1} parent=80 // loop_body
              %v269 = vld [vmem:[%s267] sm:%s260]
              %270 = vst [vmem:[%s268] sm:%s260] %v269
            $region86: #{tpu_custom_call.1} parent=80 // loop_footer
              %s266 = sadd.s32 1, %s262
            $region87: #{tpu_custom_call.1} parent=80 // loop_footer_branch
              %261 = sbr.rel target = $region83
            $region88: #{tpu_custom_call.1} parent=80 // loop_exit
              _
          $region81: #{tpu_custom_call.1} parent=65 // pred_fallthru
            _
        $region66: #{tpu_custom_call.1} parent=31 // pred_fallthru
          _
        // Predicated region
        $region67: #{tpu_custom_call.1} parent=31 // pred_check
          %p236 = pneg %p232
        $region68: #{tpu_custom_call.1} parent=31 // pred_check_branch
          %238 = sbr.rel (%p236) target = $region70
        $region69: #{tpu_custom_call.1} parent=31 // pred_region
          %s239 = sshllo.u32 0, 1
          loop: start=0, step=1, limit=1
          $region71: #{tpu_custom_call.1} parent=69 // loop_pre_header
            _
          $region72: #{tpu_custom_call.1} parent=69 // loop_header
            %s241 = sphi 0, %s245
            %p242 = scmp.ge.s32.totalorder %s241, 1
            %s246 = sphi %s229, %s229
            %s247 = sphi %s230, %s230
          $region73: #{tpu_custom_call.1} parent=69 // loop_header_branch
            %244 = sbr.rel (%p242) target = $region77
          $region74: #{tpu_custom_call.1} parent=69 // loop_body
            %v248 = vld [vmem:[%s246] sm:%s239]
            %249 = vst [vmem:[%s247] sm:%s239] %v248
          $region75: #{tpu_custom_call.1} parent=69 // loop_footer
            %s245 = sadd.s32 1, %s241
          $region76: #{tpu_custom_call.1} parent=69 // loop_footer_branch
            %240 = sbr.rel target = $region72
          $region77: #{tpu_custom_call.1} parent=69 // loop_exit
            _
        $region70: #{tpu_custom_call.1} parent=31 // pred_fallthru
          _
        // Predicated region
        $region89: #{tpu_custom_call.1} parent=31 // pred_check
          _
        $region90: #{tpu_custom_call.1} parent=31 // pred_check_branch
          %273 = sbr.rel (0) target = $region92
        $region91: #{tpu_custom_call.1} parent=31 // pred_region
          %274 = vsyncadd [#allocation3], 16
        $region92: #{tpu_custom_call.1} parent=31 // pred_fallthru
          _
        %s275 = sadd.s32 %s180, 2
        %s276 = sld [smem:[#allocation5 + %s275]]
        %s277 = scalar_lea.vmem %s2, %s276
        %s278 = scalar_lea.vmem [#allocation2], 2
        %p280 = scmp.lt.u32.totalorder 1, 8
        %p281 = pneg %p280
        // Predicated region
        $region93: #{tpu_custom_call.1} parent=31 // pred_check
          _
        $region94: #{tpu_custom_call.1} parent=31 // pred_check_branch
          %283 = sbr.rel (%p280) target = $region96
        $region95: #{tpu_custom_call.1} parent=31 // pred_region
          %s298 = sand.u32 1, 7
          %p299 = scmp.eq.s32.totalorder %s298, 0
          %p300 = pneg %p299
          // Predicated region
          $region108: #{tpu_custom_call.1} parent=95 // pred_check
            _
          $region109: #{tpu_custom_call.1} parent=95 // pred_check_branch
            %302 = sbr.rel (%p299) target = $region111
          $region110: #{tpu_custom_call.1} parent=95 // pred_region
            %s303 = sand.u32 1, 7
            %s304 = ssub.s32 1, %s303
            %s305 = scalar_lea.vmem %s277, %s304
            %s306 = ssub.s32 1, %s303
            %s307 = scalar_lea.vmem %s278, %s306 [#allocation2]
            %s308 = sshllo.u32 0, %s303
            loop: start=0, step=1, limit=1
            $region112: #{tpu_custom_call.1} parent=110 // loop_pre_header
              _
            $region113: #{tpu_custom_call.1} parent=110 // loop_header
              %s310 = sphi 0, %s314
              %p311 = scmp.ge.s32.totalorder %s310, 1
              %s315 = sphi %s305, %s305
              %s316 = sphi %s307, %s307
            $region114: #{tpu_custom_call.1} parent=110 // loop_header_branch
              %313 = sbr.rel (%p311) target = $region118
            $region115: #{tpu_custom_call.1} parent=110 // loop_body
              %v317 = vld [vmem:[%s315] sm:%s308]
              %318 = vst [vmem:[%s316] sm:%s308] %v317
            $region116: #{tpu_custom_call.1} parent=110 // loop_footer
              %s314 = sadd.s32 1, %s310
            $region117: #{tpu_custom_call.1} parent=110 // loop_footer_branch
              %309 = sbr.rel target = $region113
            $region118: #{tpu_custom_call.1} parent=110 // loop_exit
              _
          $region111: #{tpu_custom_call.1} parent=95 // pred_fallthru
            _
        $region96: #{tpu_custom_call.1} parent=31 // pred_fallthru
          _
        // Predicated region
        $region97: #{tpu_custom_call.1} parent=31 // pred_check
          %p284 = pneg %p280
        $region98: #{tpu_custom_call.1} parent=31 // pred_check_branch
          %286 = sbr.rel (%p284) target = $region100
        $region99: #{tpu_custom_call.1} parent=31 // pred_region
          %s287 = sshllo.u32 0, 1
          loop: start=0, step=1, limit=1
          $region101: #{tpu_custom_call.1} parent=99 // loop_pre_header
            _
          $region102: #{tpu_custom_call.1} parent=99 // loop_header
            %s289 = sphi 0, %s293
            %p290 = scmp.ge.s32.totalorder %s289, 1
            %s294 = sphi %s277, %s277
            %s295 = sphi %s278, %s278
          $region103: #{tpu_custom_call.1} parent=99 // loop_header_branch
            %292 = sbr.rel (%p290) target = $region107
          $region104: #{tpu_custom_call.1} parent=99 // loop_body
            %v296 = vld [vmem:[%s294] sm:%s287]
            %297 = vst [vmem:[%s295] sm:%s287] %v296
          $region105: #{tpu_custom_call.1} parent=99 // loop_footer
            %s293 = sadd.s32 1, %s289
          $region106: #{tpu_custom_call.1} parent=99 // loop_footer_branch
            %288 = sbr.rel target = $region102
          $region107: #{tpu_custom_call.1} parent=99 // loop_exit
            _
        $region100: #{tpu_custom_call.1} parent=31 // pred_fallthru
          _
        // Predicated region
        $region119: #{tpu_custom_call.1} parent=31 // pred_check
          _
        $region120: #{tpu_custom_call.1} parent=31 // pred_check_branch
          %321 = sbr.rel (0) target = $region122
        $region121: #{tpu_custom_call.1} parent=31 // pred_region
          %322 = vsyncadd [#allocation3], 16
        $region122: #{tpu_custom_call.1} parent=31 // pred_fallthru
          _
        %s323 = sadd.s32 %s180, 3
        %s324 = sld [smem:[#allocation5 + %s323]]
        %s325 = scalar_lea.vmem %s2, %s324
        %s326 = scalar_lea.vmem [#allocation2], 3
        %p328 = scmp.lt.u32.totalorder 1, 8
        %p329 = pneg %p328
        // Predicated region
        $region123: #{tpu_custom_call.1} parent=31 // pred_check
          _
        $region124: #{tpu_custom_call.1} parent=31 // pred_check_branch
          %331 = sbr.rel (%p328) target = $region126
        $region125: #{tpu_custom_call.1} parent=31 // pred_region
          %s346 = sand.u32 1, 7
          %p347 = scmp.eq.s32.totalorder %s346, 0
          %p348 = pneg %p347
          // Predicated region
          $region138: #{tpu_custom_call.1} parent=125 // pred_check
            _
          $region139: #{tpu_custom_call.1} parent=125 // pred_check_branch
            %350 = sbr.rel (%p347) target = $region141
          $region140: #{tpu_custom_call.1} parent=125 // pred_region
            %s351 = sand.u32 1, 7
            %s352 = ssub.s32 1, %s351
            %s353 = scalar_lea.vmem %s325, %s352
            %s354 = ssub.s32 1, %s351
            %s355 = scalar_lea.vmem %s326, %s354 [#allocation2]
            %s356 = sshllo.u32 0, %s351
            loop: start=0, step=1, limit=1
            $region142: #{tpu_custom_call.1} parent=140 // loop_pre_header
              _
            $region143: #{tpu_custom_call.1} parent=140 // loop_header
              %s358 = sphi 0, %s362
              %p359 = scmp.ge.s32.totalorder %s358, 1
              %s363 = sphi %s353, %s353
              %s364 = sphi %s355, %s355
            $region144: #{tpu_custom_call.1} parent=140 // loop_header_branch
              %361 = sbr.rel (%p359) target = $region148
            $region145: #{tpu_custom_call.1} parent=140 // loop_body
              %v365 = vld [vmem:[%s363] sm:%s356]
              %366 = vst [vmem:[%s364] sm:%s356] %v365
            $region146: #{tpu_custom_call.1} parent=140 // loop_footer
              %s362 = sadd.s32 1, %s358
            $region147: #{tpu_custom_call.1} parent=140 // loop_footer_branch
              %357 = sbr.rel target = $region143
            $region148: #{tpu_custom_call.1} parent=140 // loop_exit
              _
          $region141: #{tpu_custom_call.1} parent=125 // pred_fallthru
            _
        $region126: #{tpu_custom_call.1} parent=31 // pred_fallthru
          _
        // Predicated region
        $region127: #{tpu_custom_call.1} parent=31 // pred_check
          %p332 = pneg %p328
        $region128: #{tpu_custom_call.1} parent=31 // pred_check_branch
          %334 = sbr.rel (%p332) target = $region130
        $region129: #{tpu_custom_call.1} parent=31 // pred_region
          %s335 = sshllo.u32 0, 1
          loop: start=0, step=1, limit=1
          $region131: #{tpu_custom_call.1} parent=129 // loop_pre_header
            _
          $region132: #{tpu_custom_call.1} parent=129 // loop_header
            %s337 = sphi 0, %s341
            %p338 = scmp.ge.s32.totalorder %s337, 1
            %s342 = sphi %s325, %s325
            %s343 = sphi %s326, %s326
          $region133: #{tpu_custom_call.1} parent=129 // loop_header_branch
            %340 = sbr.rel (%p338) target = $region137
          $region134: #{tpu_custom_call.1} parent=129 // loop_body
            %v344 = vld [vmem:[%s342] sm:%s335]
            %345 = vst [vmem:[%s343] sm:%s335] %v344
          $region135: #{tpu_custom_call.1} parent=129 // loop_footer
            %s341 = sadd.s32 1, %s337
          $region136: #{tpu_custom_call.1} parent=129 // loop_footer_branch
            %336 = sbr.rel target = $region132
          $region137: #{tpu_custom_call.1} parent=129 // loop_exit
            _
        $region130: #{tpu_custom_call.1} parent=31 // pred_fallthru
          _
        // Predicated region
        $region149: #{tpu_custom_call.1} parent=31 // pred_check
          _
        $region150: #{tpu_custom_call.1} parent=31 // pred_check_branch
          %369 = sbr.rel (0) target = $region152
        $region151: #{tpu_custom_call.1} parent=31 // pred_region
          %370 = vsyncadd [#allocation3], 16
        $region152: #{tpu_custom_call.1} parent=31 // pred_fallthru
          _
        %s371 = sadd.s32 %s180, 4
        %s372 = sld [smem:[#allocation5 + %s371]]
        %s373 = scalar_lea.vmem %s2, %s372
        %s374 = scalar_lea.vmem [#allocation2], 4
        %p376 = scmp.lt.u32.totalorder 1, 8
        %p377 = pneg %p376
        // Predicated region
        $region153: #{tpu_custom_call.1} parent=31 // pred_check
          _
        $region154: #{tpu_custom_call.1} parent=31 // pred_check_branch
          %379 = sbr.rel (%p376) target = $region156
        $region155: #{tpu_custom_call.1} parent=31 // pred_region
          %s394 = sand.u32 1, 7
          %p395 = scmp.eq.s32.totalorder %s394, 0
          %p396 = pneg %p395
          // Predicated region
          $region168: #{tpu_custom_call.1} parent=155 // pred_check
            _
          $region169: #{tpu_custom_call.1} parent=155 // pred_check_branch
            %398 = sbr.rel (%p395) target = $region171
          $region170: #{tpu_custom_call.1} parent=155 // pred_region
            %s399 = sand.u32 1, 7
            %s400 = ssub.s32 1, %s399
            %s401 = scalar_lea.vmem %s373, %s400
            %s402 = ssub.s32 1, %s399
            %s403 = scalar_lea.vmem %s374, %s402 [#allocation2]
            %s404 = sshllo.u32 0, %s399
            loop: start=0, step=1, limit=1
            $region172: #{tpu_custom_call.1} parent=170 // loop_pre_header
              _
            $region173: #{tpu_custom_call.1} parent=170 // loop_header
              %s406 = sphi 0, %s410
              %p407 = scmp.ge.s32.totalorder %s406, 1
              %s411 = sphi %s401, %s401
              %s412 = sphi %s403, %s403
            $region174: #{tpu_custom_call.1} parent=170 // loop_header_branch
              %409 = sbr.rel (%p407) target = $region178
            $region175: #{tpu_custom_call.1} parent=170 // loop_body
              %v413 = vld [vmem:[%s411] sm:%s404]
              %414 = vst [vmem:[%s412] sm:%s404] %v413
            $region176: #{tpu_custom_call.1} parent=170 // loop_footer
              %s410 = sadd.s32 1, %s406
            $region177: #{tpu_custom_call.1} parent=170 // loop_footer_branch
              %405 = sbr.rel target = $region173
            $region178: #{tpu_custom_call.1} parent=170 // loop_exit
              _
          $region171: #{tpu_custom_call.1} parent=155 // pred_fallthru
            _
        $region156: #{tpu_custom_call.1} parent=31 // pred_fallthru
          _
        // Predicated region
        $region157: #{tpu_custom_call.1} parent=31 // pred_check
          %p380 = pneg %p376
        $region158: #{tpu_custom_call.1} parent=31 // pred_check_branch
          %382 = sbr.rel (%p380) target = $region160
        $region159: #{tpu_custom_call.1} parent=31 // pred_region
          %s383 = sshllo.u32 0, 1
          loop: start=0, step=1, limit=1
          $region161: #{tpu_custom_call.1} parent=159 // loop_pre_header
            _
          $region162: #{tpu_custom_call.1} parent=159 // loop_header
            %s385 = sphi 0, %s389
            %p386 = scmp.ge.s32.totalorder %s385, 1
            %s390 = sphi %s373, %s373
            %s391 = sphi %s374, %s374
          $region163: #{tpu_custom_call.1} parent=159 // loop_header_branch
            %388 = sbr.rel (%p386) target = $region167
          $region164: #{tpu_custom_call.1} parent=159 // loop_body
            %v392 = vld [vmem:[%s390] sm:%s383]
            %393 = vst [vmem:[%s391] sm:%s383] %v392
          $region165: #{tpu_custom_call.1} parent=159 // loop_footer
            %s389 = sadd.s32 1, %s385
          $region166: #{tpu_custom_call.1} parent=159 // loop_footer_branch
            %384 = sbr.rel target = $region162
          $region167: #{tpu_custom_call.1} parent=159 // loop_exit
            _
        $region160: #{tpu_custom_call.1} parent=31 // pred_fallthru
          _
        // Predicated region
        $region179: #{tpu_custom_call.1} parent=31 // pred_check
          _
        $region180: #{tpu_custom_call.1} parent=31 // pred_check_branch
          %417 = sbr.rel (0) target = $region182
        $region181: #{tpu_custom_call.1} parent=31 // pred_region
          %418 = vsyncadd [#allocation3], 16
        $region182: #{tpu_custom_call.1} parent=31 // pred_fallthru
          _
        %s419 = sadd.s32 %s180, 5
        %s420 = sld [smem:[#allocation5 + %s419]]
        %s421 = scalar_lea.vmem %s2, %s420
        %s422 = scalar_lea.vmem [#allocation2], 5
        %p424 = scmp.lt.u32.totalorder 1, 8
        %p425 = pneg %p424
        // Predicated region
        $region183: #{tpu_custom_call.1} parent=31 // pred_check
          _
        $region184: #{tpu_custom_call.1} parent=31 // pred_check_branch
          %427 = sbr.rel (%p424) target = $region186
        $region185: #{tpu_custom_call.1} parent=31 // pred_region
          %s442 = sand.u32 1, 7
          %p443 = scmp.eq.s32.totalorder %s442, 0
          %p444 = pneg %p443
          // Predicated region
          $region198: #{tpu_custom_call.1} parent=185 // pred_check
            _
          $region199: #{tpu_custom_call.1} parent=185 // pred_check_branch
            %446 = sbr.rel (%p443) target = $region201
          $region200: #{tpu_custom_call.1} parent=185 // pred_region
            %s447 = sand.u32 1, 7
            %s448 = ssub.s32 1, %s447
            %s449 = scalar_lea.vmem %s421, %s448
            %s450 = ssub.s32 1, %s447
            %s451 = scalar_lea.vmem %s422, %s450 [#allocation2]
            %s452 = sshllo.u32 0, %s447
            loop: start=0, step=1, limit=1
            $region202: #{tpu_custom_call.1} parent=200 // loop_pre_header
              _
            $region203: #{tpu_custom_call.1} parent=200 // loop_header
              %s454 = sphi 0, %s458
              %p455 = scmp.ge.s32.totalorder %s454, 1
              %s459 = sphi %s449, %s449
              %s460 = sphi %s451, %s451
            $region204: #{tpu_custom_call.1} parent=200 // loop_header_branch
              %457 = sbr.rel (%p455) target = $region208
            $region205: #{tpu_custom_call.1} parent=200 // loop_body
              %v461 = vld [vmem:[%s459] sm:%s452]
              %462 = vst [vmem:[%s460] sm:%s452] %v461
            $region206: #{tpu_custom_call.1} parent=200 // loop_footer
              %s458 = sadd.s32 1, %s454
            $region207: #{tpu_custom_call.1} parent=200 // loop_footer_branch
              %453 = sbr.rel target = $region203
            $region208: #{tpu_custom_call.1} parent=200 // loop_exit
              _
          $region201: #{tpu_custom_call.1} parent=185 // pred_fallthru
            _
        $region186: #{tpu_custom_call.1} parent=31 // pred_fallthru
          _
        // Predicated region
        $region187: #{tpu_custom_call.1} parent=31 // pred_check
          %p428 = pneg %p424
        $region188: #{tpu_custom_call.1} parent=31 // pred_check_branch
          %430 = sbr.rel (%p428) target = $region190
        $region189: #{tpu_custom_call.1} parent=31 // pred_region
          %s431 = sshllo.u32 0, 1
          loop: start=0, step=1, limit=1
          $region191: #{tpu_custom_call.1} parent=189 // loop_pre_header
            _
          $region192: #{tpu_custom_call.1} parent=189 // loop_header
            %s433 = sphi 0, %s437
            %p434 = scmp.ge.s32.totalorder %s433, 1
            %s438 = sphi %s421, %s421
            %s439 = sphi %s422, %s422
          $region193: #{tpu_custom_call.1} parent=189 // loop_header_branch
            %436 = sbr.rel (%p434) target = $region197
          $region194: #{tpu_custom_call.1} parent=189 // loop_body
            %v440 = vld [vmem:[%s438] sm:%s431]
            %441 = vst [vmem:[%s439] sm:%s431] %v440
          $region195: #{tpu_custom_call.1} parent=189 // loop_footer
            %s437 = sadd.s32 1, %s433
          $region196: #{tpu_custom_call.1} parent=189 // loop_footer_branch
            %432 = sbr.rel target = $region192
          $region197: #{tpu_custom_call.1} parent=189 // loop_exit
            _
        $region190: #{tpu_custom_call.1} parent=31 // pred_fallthru
          _
        // Predicated region
        $region209: #{tpu_custom_call.1} parent=31 // pred_check
          _
        $region210: #{tpu_custom_call.1} parent=31 // pred_check_branch
          %465 = sbr.rel (0) target = $region212
        $region211: #{tpu_custom_call.1} parent=31 // pred_region
          %466 = vsyncadd [#allocation3], 16
        $region212: #{tpu_custom_call.1} parent=31 // pred_fallthru
          _
        %s467 = sadd.s32 %s180, 6
        %s468 = sld [smem:[#allocation5 + %s467]]
        %s469 = scalar_lea.vmem %s2, %s468
        %s470 = scalar_lea.vmem [#allocation2], 6
        %p472 = scmp.lt.u32.totalorder 1, 8
        %p473 = pneg %p472
        // Predicated region
        $region213: #{tpu_custom_call.1} parent=31 // pred_check
          _
        $region214: #{tpu_custom_call.1} parent=31 // pred_check_branch
          %475 = sbr.rel (%p472) target = $region216
        $region215: #{tpu_custom_call.1} parent=31 // pred_region
          %s490 = sand.u32 1, 7
          %p491 = scmp.eq.s32.totalorder %s490, 0
          %p492 = pneg %p491
          // Predicated region
          $region228: #{tpu_custom_call.1} parent=215 // pred_check
            _
          $region229: #{tpu_custom_call.1} parent=215 // pred_check_branch
            %494 = sbr.rel (%p491) target = $region231
          $region230: #{tpu_custom_call.1} parent=215 // pred_region
            %s495 = sand.u32 1, 7
            %s496 = ssub.s32 1, %s495
            %s497 = scalar_lea.vmem %s469, %s496
            %s498 = ssub.s32 1, %s495
            %s499 = scalar_lea.vmem %s470, %s498 [#allocation2]
            %s500 = sshllo.u32 0, %s495
            loop: start=0, step=1, limit=1
            $region232: #{tpu_custom_call.1} parent=230 // loop_pre_header
              _
            $region233: #{tpu_custom_call.1} parent=230 // loop_header
              %s502 = sphi 0, %s506
              %p503 = scmp.ge.s32.totalorder %s502, 1
              %s507 = sphi %s497, %s497
              %s508 = sphi %s499, %s499
            $region234: #{tpu_custom_call.1} parent=230 // loop_header_branch
              %505 = sbr.rel (%p503) target = $region238
            $region235: #{tpu_custom_call.1} parent=230 // loop_body
              %v509 = vld [vmem:[%s507] sm:%s500]
              %510 = vst [vmem:[%s508] sm:%s500] %v509
            $region236: #{tpu_custom_call.1} parent=230 // loop_footer
              %s506 = sadd.s32 1, %s502
            $region237: #{tpu_custom_call.1} parent=230 // loop_footer_branch
              %501 = sbr.rel target = $region233
            $region238: #{tpu_custom_call.1} parent=230 // loop_exit
              _
          $region231: #{tpu_custom_call.1} parent=215 // pred_fallthru
            _
        $region216: #{tpu_custom_call.1} parent=31 // pred_fallthru
          _
        // Predicated region
        $region217: #{tpu_custom_call.1} parent=31 // pred_check
          %p476 = pneg %p472
        $region218: #{tpu_custom_call.1} parent=31 // pred_check_branch
          %478 = sbr.rel (%p476) target = $region220
        $region219: #{tpu_custom_call.1} parent=31 // pred_region
          %s479 = sshllo.u32 0, 1
          loop: start=0, step=1, limit=1
          $region221: #{tpu_custom_call.1} parent=219 // loop_pre_header
            _
          $region222: #{tpu_custom_call.1} parent=219 // loop_header
            %s481 = sphi 0, %s485
            %p482 = scmp.ge.s32.totalorder %s481, 1
            %s486 = sphi %s469, %s469
            %s487 = sphi %s470, %s470
          $region223: #{tpu_custom_call.1} parent=219 // loop_header_branch
            %484 = sbr.rel (%p482) target = $region227
          $region224: #{tpu_custom_call.1} parent=219 // loop_body
            %v488 = vld [vmem:[%s486] sm:%s479]
            %489 = vst [vmem:[%s487] sm:%s479] %v488
          $region225: #{tpu_custom_call.1} parent=219 // loop_footer
            %s485 = sadd.s32 1, %s481
          $region226: #{tpu_custom_call.1} parent=219 // loop_footer_branch
            %480 = sbr.rel target = $region222
          $region227: #{tpu_custom_call.1} parent=219 // loop_exit
            _
        $region220: #{tpu_custom_call.1} parent=31 // pred_fallthru
          _
        // Predicated region
        $region239: #{tpu_custom_call.1} parent=31 // pred_check
          _
        $region240: #{tpu_custom_call.1} parent=31 // pred_check_branch
          %513 = sbr.rel (0) target = $region242
        $region241: #{tpu_custom_call.1} parent=31 // pred_region
          %514 = vsyncadd [#allocation3], 16
        $region242: #{tpu_custom_call.1} parent=31 // pred_fallthru
          _
        %s515 = sadd.s32 %s180, 7
        %s516 = sld [smem:[#allocation5 + %s515]]
        %s517 = scalar_lea.vmem %s2, %s516
        %s518 = scalar_lea.vmem [#allocation2], 7
        %p520 = scmp.lt.u32.totalorder 1, 8
        %p521 = pneg %p520
        // Predicated region
        $region243: #{tpu_custom_call.1} parent=31 // pred_check
          _
        $region244: #{tpu_custom_call.1} parent=31 // pred_check_branch
          %523 = sbr.rel (%p520) target = $region246
        $region245: #{tpu_custom_call.1} parent=31 // pred_region
          %s538 = sand.u32 1, 7
          %p539 = scmp.eq.s32.totalorder %s538, 0
          %p540 = pneg %p539
          // Predicated region
          $region258: #{tpu_custom_call.1} parent=245 // pred_check
            _
          $region259: #{tpu_custom_call.1} parent=245 // pred_check_branch
            %542 = sbr.rel (%p539) target = $region261
          $region260: #{tpu_custom_call.1} parent=245 // pred_region
            %s543 = sand.u32 1, 7
            %s544 = ssub.s32 1, %s543
            %s545 = scalar_lea.vmem %s517, %s544
            %s546 = ssub.s32 1, %s543
            %s547 = scalar_lea.vmem %s518, %s546 [#allocation2]
            %s548 = sshllo.u32 0, %s543
            loop: start=0, step=1, limit=1
            $region262: #{tpu_custom_call.1} parent=260 // loop_pre_header
              _
            $region263: #{tpu_custom_call.1} parent=260 // loop_header
              %s550 = sphi 0, %s554
              %p551 = scmp.ge.s32.totalorder %s550, 1
              %s555 = sphi %s545, %s545
              %s556 = sphi %s547, %s547
            $region264: #{tpu_custom_call.1} parent=260 // loop_header_branch
              %553 = sbr.rel (%p551) target = $region268
            $region265: #{tpu_custom_call.1} parent=260 // loop_body
              %v557 = vld [vmem:[%s555] sm:%s548]
              %558 = vst [vmem:[%s556] sm:%s548] %v557
            $region266: #{tpu_custom_call.1} parent=260 // loop_footer
              %s554 = sadd.s32 1, %s550
            $region267: #{tpu_custom_call.1} parent=260 // loop_footer_branch
              %549 = sbr.rel target = $region263
            $region268: #{tpu_custom_call.1} parent=260 // loop_exit
              _
          $region261: #{tpu_custom_call.1} parent=245 // pred_fallthru
            _
        $region246: #{tpu_custom_call.1} parent=31 // pred_fallthru
          _
        // Predicated region
        $region247: #{tpu_custom_call.1} parent=31 // pred_check
          %p524 = pneg %p520
        $region248: #{tpu_custom_call.1} parent=31 // pred_check_branch
          %526 = sbr.rel (%p524) target = $region250
        $region249: #{tpu_custom_call.1} parent=31 // pred_region
          %s527 = sshllo.u32 0, 1
          loop: start=0, step=1, limit=1
          $region251: #{tpu_custom_call.1} parent=249 // loop_pre_header
            _
          $region252: #{tpu_custom_call.1} parent=249 // loop_header
            %s529 = sphi 0, %s533
            %p530 = scmp.ge.s32.totalorder %s529, 1
            %s534 = sphi %s517, %s517
            %s535 = sphi %s518, %s518
          $region253: #{tpu_custom_call.1} parent=249 // loop_header_branch
            %532 = sbr.rel (%p530) target = $region257
          $region254: #{tpu_custom_call.1} parent=249 // loop_body
            %v536 = vld [vmem:[%s534] sm:%s527]
            %537 = vst [vmem:[%s535] sm:%s527] %v536
          $region255: #{tpu_custom_call.1} parent=249 // loop_footer
            %s533 = sadd.s32 1, %s529
          $region256: #{tpu_custom_call.1} parent=249 // loop_footer_branch
            %528 = sbr.rel target = $region252
          $region257: #{tpu_custom_call.1} parent=249 // loop_exit
            _
        $region250: #{tpu_custom_call.1} parent=31 // pred_fallthru
          _
        // Predicated region
        $region269: #{tpu_custom_call.1} parent=31 // pred_check
          _
        $region270: #{tpu_custom_call.1} parent=31 // pred_check_branch
          %561 = sbr.rel (0) target = $region272
        $region271: #{tpu_custom_call.1} parent=31 // pred_region
          %562 = vsyncadd [#allocation3], 16
        $region272: #{tpu_custom_call.1} parent=31 // pred_fallthru
          _
        %s563 = sadd.s32 %s180, 8
        %s564 = sld [smem:[#allocation5 + %s563]]
        %s565 = scalar_lea.vmem %s2, %s564
        %s566 = scalar_lea.vmem [#allocation2], 8
        %s567 = scalar_lea.sflag [#allocation3], 1
        %p569 = scmp.lt.u32.totalorder 1, 8
        %p570 = pneg %p569
        // Predicated region
        $region273: #{tpu_custom_call.1} parent=31 // pred_check
          _
        $region274: #{tpu_custom_call.1} parent=31 // pred_check_branch
          %572 = sbr.rel (%p569) target = $region276
        $region275: #{tpu_custom_call.1} parent=31 // pred_region
          %s587 = sand.u32 1, 7
          %p588 = scmp.eq.s32.totalorder %s587, 0
          %p589 = pneg %p588
          // Predicated region
          $region288: #{tpu_custom_call.1} parent=275 // pred_check
            _
          $region289: #{tpu_custom_call.1} parent=275 // pred_check_branch
            %591 = sbr.rel (%p588) target = $region291
          $region290: #{tpu_custom_call.1} parent=275 // pred_region
            %s592 = sand.u32 1, 7
            %s593 = ssub.s32 1, %s592
            %s594 = scalar_lea.vmem %s565, %s593
            %s595 = ssub.s32 1, %s592
            %s596 = scalar_lea.vmem %s566, %s595 [#allocation2]
            %s597 = sshllo.u32 0, %s592
            loop: start=0, step=1, limit=1
            $region292: #{tpu_custom_call.1} parent=290 // loop_pre_header
              _
            $region293: #{tpu_custom_call.1} parent=290 // loop_header
              %s599 = sphi 0, %s603
              %p600 = scmp.ge.s32.totalorder %s599, 1
              %s604 = sphi %s594, %s594
              %s605 = sphi %s596, %s596
            $region294: #{tpu_custom_call.1} parent=290 // loop_header_branch
              %602 = sbr.rel (%p600) target = $region298
            $region295: #{tpu_custom_call.1} parent=290 // loop_body
              %v606 = vld [vmem:[%s604] sm:%s597]
              %607 = vst [vmem:[%s605] sm:%s597] %v606
            $region296: #{tpu_custom_call.1} parent=290 // loop_footer
              %s603 = sadd.s32 1, %s599
            $region297: #{tpu_custom_call.1} parent=290 // loop_footer_branch
              %598 = sbr.rel target = $region293
            $region298: #{tpu_custom_call.1} parent=290 // loop_exit
              _
          $region291: #{tpu_custom_call.1} parent=275 // pred_fallthru
            _
        $region276: #{tpu_custom_call.1} parent=31 // pred_fallthru
          _
        // Predicated region
        $region277: #{tpu_custom_call.1} parent=31 // pred_check
          %p573 = pneg %p569
        $region278: #{tpu_custom_call.1} parent=31 // pred_check_branch
          %575 = sbr.rel (%p573) target = $region280
        $region279: #{tpu_custom_call.1} parent=31 // pred_region
          %s576 = sshllo.u32 0, 1
          loop: start=0, step=1, limit=1
          $region281: #{tpu_custom_call.1} parent=279 // loop_pre_header
            _
          $region282: #{tpu_custom_call.1} parent=279 // loop_header
            %s578 = sphi 0, %s582
            %p579 = scmp.ge.s32.totalorder %s578, 1
            %s583 = sphi %s565, %s565
            %s584 = sphi %s566, %s566
          $region283: #{tpu_custom_call.1} parent=279 // loop_header_branch
            %581 = sbr.rel (%p579) target = $region287
          $region284: #{tpu_custom_call.1} parent=279 // loop_body
            %v585 = vld [vmem:[%s583] sm:%s576]
            %586 = vst [vmem:[%s584] sm:%s576] %v585
          $region285: #{tpu_custom_call.1} parent=279 // loop_footer
            %s582 = sadd.s32 1, %s578
          $region286: #{tpu_custom_call.1} parent=279 // loop_footer_branch
            %577 = sbr.rel target = $region282
          $region287: #{tpu_custom_call.1} parent=279 // loop_exit
            _
        $region280: #{tpu_custom_call.1} parent=31 // pred_fallthru
          _
        // Predicated region
        $region299: #{tpu_custom_call.1} parent=31 // pred_check
          _
        $region300: #{tpu_custom_call.1} parent=31 // pred_check_branch
          %610 = sbr.rel (0) target = $region302
        $region301: #{tpu_custom_call.1} parent=31 // pred_region
          %611 = vsyncadd %s567, 16
        $region302: #{tpu_custom_call.1} parent=31 // pred_fallthru
          _
        %s612 = sadd.s32 %s180, 9
        %s613 = sld [smem:[#allocation5 + %s612]]
        %s614 = scalar_lea.vmem %s2, %s613
        %s615 = scalar_lea.vmem [#allocation2], 9
        %p617 = scmp.lt.u32.totalorder 1, 8
        %p618 = pneg %p617
        // Predicated region
        $region303: #{tpu_custom_call.1} parent=31 // pred_check
          _
        $region304: #{tpu_custom_call.1} parent=31 // pred_check_branch
          %620 = sbr.rel (%p617) target = $region306
        $region305: #{tpu_custom_call.1} parent=31 // pred_region
          %s635 = sand.u32 1, 7
          %p636 = scmp.eq.s32.totalorder %s635, 0
          %p637 = pneg %p636
          // Predicated region
          $region318: #{tpu_custom_call.1} parent=305 // pred_check
            _
          $region319: #{tpu_custom_call.1} parent=305 // pred_check_branch
            %639 = sbr.rel (%p636) target = $region321
          $region320: #{tpu_custom_call.1} parent=305 // pred_region
            %s640 = sand.u32 1, 7
            %s641 = ssub.s32 1, %s640
            %s642 = scalar_lea.vmem %s614, %s641
            %s643 = ssub.s32 1, %s640
            %s644 = scalar_lea.vmem %s615, %s643 [#allocation2]
            %s645 = sshllo.u32 0, %s640
            loop: start=0, step=1, limit=1
            $region322: #{tpu_custom_call.1} parent=320 // loop_pre_header
              _
            $region323: #{tpu_custom_call.1} parent=320 // loop_header
              %s647 = sphi 0, %s651
              %p648 = scmp.ge.s32.totalorder %s647, 1
              %s652 = sphi %s642, %s642
              %s653 = sphi %s644, %s644
            $region324: #{tpu_custom_call.1} parent=320 // loop_header_branch
              %650 = sbr.rel (%p648) target = $region328
            $region325: #{tpu_custom_call.1} parent=320 // loop_body
              %v654 = vld [vmem:[%s652] sm:%s645]
              %655 = vst [vmem:[%s653] sm:%s645] %v654
            $region326: #{tpu_custom_call.1} parent=320 // loop_footer
              %s651 = sadd.s32 1, %s647
            $region327: #{tpu_custom_call.1} parent=320 // loop_footer_branch
              %646 = sbr.rel target = $region323
            $region328: #{tpu_custom_call.1} parent=320 // loop_exit
              _
          $region321: #{tpu_custom_call.1} parent=305 // pred_fallthru
            _
        $region306: #{tpu_custom_call.1} parent=31 // pred_fallthru
          _
        // Predicated region
        $region307: #{tpu_custom_call.1} parent=31 // pred_check
          %p621 = pneg %p617
        $region308: #{tpu_custom_call.1} parent=31 // pred_check_branch
          %623 = sbr.rel (%p621) target = $region310
        $region309: #{tpu_custom_call.1} parent=31 // pred_region
          %s624 = sshllo.u32 0, 1
          loop: start=0, step=1, limit=1
          $region311: #{tpu_custom_call.1} parent=309 // loop_pre_header
            _
          $region312: #{tpu_custom_call.1} parent=309 // loop_header
            %s626 = sphi 0, %s630
            %p627 = scmp.ge.s32.totalorder %s626, 1
            %s631 = sphi %s614, %s614
            %s632 = sphi %s615, %s615
          $region313: #{tpu_custom_call.1} parent=309 // loop_header_branch
            %629 = sbr.rel (%p627) target = $region317
          $region314: #{tpu_custom_call.1} parent=309 // loop_body
            %v633 = vld [vmem:[%s631] sm:%s624]
            %634 = vst [vmem:[%s632] sm:%s624] %v633
          $region315: #{tpu_custom_call.1} parent=309 // loop_footer
            %s630 = sadd.s32 1, %s626
          $region316: #{tpu_custom_call.1} parent=309 // loop_footer_branch
            %625 = sbr.rel target = $region312
          $region317: #{tpu_custom_call.1} parent=309 // loop_exit
            _
        $region310: #{tpu_custom_call.1} parent=31 // pred_fallthru
          _
        // Predicated region
        $region329: #{tpu_custom_call.1} parent=31 // pred_check
          _
        $region330: #{tpu_custom_call.1} parent=31 // pred_check_branch
          %658 = sbr.rel (0) target = $region332
        $region331: #{tpu_custom_call.1} parent=31 // pred_region
          %659 = vsyncadd %s567, 16
        $region332: #{tpu_custom_call.1} parent=31 // pred_fallthru
          _
        %s660 = sadd.s32 %s180, 10
        %s661 = sld [smem:[#allocation5 + %s660]]
        %s662 = scalar_lea.vmem %s2, %s661
        %s663 = scalar_lea.vmem [#allocation2], 10
        %p665 = scmp.lt.u32.totalorder 1, 8
        %p666 = pneg %p665
        // Predicated region
        $region333: #{tpu_custom_call.1} parent=31 // pred_check
          _
        $region334: #{tpu_custom_call.1} parent=31 // pred_check_branch
          %668 = sbr.rel (%p665) target = $region336
        $region335: #{tpu_custom_call.1} parent=31 // pred_region
          %s683 = sand.u32 1, 7
          %p684 = scmp.eq.s32.totalorder %s683, 0
          %p685 = pneg %p684
          // Predicated region
          $region348: #{tpu_custom_call.1} parent=335 // pred_check
            _
          $region349: #{tpu_custom_call.1} parent=335 // pred_check_branch
            %687 = sbr.rel (%p684) target = $region351
          $region350: #{tpu_custom_call.1} parent=335 // pred_region
            %s688 = sand.u32 1, 7
            %s689 = ssub.s32 1, %s688
            %s690 = scalar_lea.vmem %s662, %s689
            %s691 = ssub.s32 1, %s688
            %s692 = scalar_lea.vmem %s663, %s691 [#allocation2]
            %s693 = sshllo.u32 0, %s688
            loop: start=0, step=1, limit=1
            $region352: #{tpu_custom_call.1} parent=350 // loop_pre_header
              _
            $region353: #{tpu_custom_call.1} parent=350 // loop_header
              %s695 = sphi 0, %s699
              %p696 = scmp.ge.s32.totalorder %s695, 1
              %s700 = sphi %s690, %s690
              %s701 = sphi %s692, %s692
            $region354: #{tpu_custom_call.1} parent=350 // loop_header_branch
              %698 = sbr.rel (%p696) target = $region358
            $region355: #{tpu_custom_call.1} parent=350 // loop_body
              %v702 = vld [vmem:[%s700] sm:%s693]
              %703 = vst [vmem:[%s701] sm:%s693] %v702
            $region356: #{tpu_custom_call.1} parent=350 // loop_footer
              %s699 = sadd.s32 1, %s695
            $region357: #{tpu_custom_call.1} parent=350 // loop_footer_branch
              %694 = sbr.rel target = $region353
            $region358: #{tpu_custom_call.1} parent=350 // loop_exit
              _
          $region351: #{tpu_custom_call.1} parent=335 // pred_fallthru
            _
        $region336: #{tpu_custom_call.1} parent=31 // pred_fallthru
          _
        // Predicated region
        $region337: #{tpu_custom_call.1} parent=31 // pred_check
          %p669 = pneg %p665
        $region338: #{tpu_custom_call.1} parent=31 // pred_check_branch
          %671 = sbr.rel (%p669) target = $region340
        $region339: #{tpu_custom_call.1} parent=31 // pred_region
          %s672 = sshllo.u32 0, 1
          loop: start=0, step=1, limit=1
          $region341: #{tpu_custom_call.1} parent=339 // loop_pre_header
            _
          $region342: #{tpu_custom_call.1} parent=339 // loop_header
            %s674 = sphi 0, %s678
            %p675 = scmp.ge.s32.totalorder %s674, 1
            %s679 = sphi %s662, %s662
            %s680 = sphi %s663, %s663
          $region343: #{tpu_custom_call.1} parent=339 // loop_header_branch
            %677 = sbr.rel (%p675) target = $region347
          $region344: #{tpu_custom_call.1} parent=339 // loop_body
            %v681 = vld [vmem:[%s679] sm:%s672]
            %682 = vst [vmem:[%s680] sm:%s672] %v681
          $region345: #{tpu_custom_call.1} parent=339 // loop_footer
            %s678 = sadd.s32 1, %s674
          $region346: #{tpu_custom_call.1} parent=339 // loop_footer_branch
            %673 = sbr.rel target = $region342
          $region347: #{tpu_custom_call.1} parent=339 // loop_exit
            _
        $region340: #{tpu_custom_call.1} parent=31 // pred_fallthru
          _
        // Predicated region
        $region359: #{tpu_custom_call.1} parent=31 // pred_check
          _
        $region360: #{tpu_custom_call.1} parent=31 // pred_check_branch
          %706 = sbr.rel (0) target = $region362
        $region361: #{tpu_custom_call.1} parent=31 // pred_region
          %707 = vsyncadd %s567, 16
        $region362: #{tpu_custom_call.1} parent=31 // pred_fallthru
          _
        %s708 = sadd.s32 %s180, 11
        %s709 = sld [smem:[#allocation5 + %s708]]
        %s710 = scalar_lea.vmem %s2, %s709
        %s711 = scalar_lea.vmem [#allocation2], 11
        %p713 = scmp.lt.u32.totalorder 1, 8
        %p714 = pneg %p713
        // Predicated region
        $region363: #{tpu_custom_call.1} parent=31 // pred_check
          _
        $region364: #{tpu_custom_call.1} parent=31 // pred_check_branch
          %716 = sbr.rel (%p713) target = $region366
        $region365: #{tpu_custom_call.1} parent=31 // pred_region
          %s731 = sand.u32 1, 7
          %p732 = scmp.eq.s32.totalorder %s731, 0
          %p733 = pneg %p732
          // Predicated region
          $region378: #{tpu_custom_call.1} parent=365 // pred_check
            _
          $region379: #{tpu_custom_call.1} parent=365 // pred_check_branch
            %735 = sbr.rel (%p732) target = $region381
          $region380: #{tpu_custom_call.1} parent=365 // pred_region
            %s736 = sand.u32 1, 7
            %s737 = ssub.s32 1, %s736
            %s738 = scalar_lea.vmem %s710, %s737
            %s739 = ssub.s32 1, %s736
            %s740 = scalar_lea.vmem %s711, %s739 [#allocation2]
            %s741 = sshllo.u32 0, %s736
            loop: start=0, step=1, limit=1
            $region382: #{tpu_custom_call.1} parent=380 // loop_pre_header
              _
            $region383: #{tpu_custom_call.1} parent=380 // loop_header
              %s743 = sphi 0, %s747
              %p744 = scmp.ge.s32.totalorder %s743, 1
              %s748 = sphi %s738, %s738
              %s749 = sphi %s740, %s740
            $region384: #{tpu_custom_call.1} parent=380 // loop_header_branch
              %746 = sbr.rel (%p744) target = $region388
            $region385: #{tpu_custom_call.1} parent=380 // loop_body
              %v750 = vld [vmem:[%s748] sm:%s741]
              %751 = vst [vmem:[%s749] sm:%s741] %v750
            $region386: #{tpu_custom_call.1} parent=380 // loop_footer
              %s747 = sadd.s32 1, %s743
            $region387: #{tpu_custom_call.1} parent=380 // loop_footer_branch
              %742 = sbr.rel target = $region383
            $region388: #{tpu_custom_call.1} parent=380 // loop_exit
              _
          $region381: #{tpu_custom_call.1} parent=365 // pred_fallthru
            _
        $region366: #{tpu_custom_call.1} parent=31 // pred_fallthru
          _
        // Predicated region
        $region367: #{tpu_custom_call.1} parent=31 // pred_check
          %p717 = pneg %p713
        $region368: #{tpu_custom_call.1} parent=31 // pred_check_branch
          %719 = sbr.rel (%p717) target = $region370
        $region369: #{tpu_custom_call.1} parent=31 // pred_region
          %s720 = sshllo.u32 0, 1
          loop: start=0, step=1, limit=1
          $region371: #{tpu_custom_call.1} parent=369 // loop_pre_header
            _
          $region372: #{tpu_custom_call.1} parent=369 // loop_header
            %s722 = sphi 0, %s726
            %p723 = scmp.ge.s32.totalorder %s722, 1
            %s727 = sphi %s710, %s710
            %s728 = sphi %s711, %s711
          $region373: #{tpu_custom_call.1} parent=369 // loop_header_branch
            %725 = sbr.rel (%p723) target = $region377
          $region374: #{tpu_custom_call.1} parent=369 // loop_body
            %v729 = vld [vmem:[%s727] sm:%s720]
            %730 = vst [vmem:[%s728] sm:%s720] %v729
          $region375: #{tpu_custom_call.1} parent=369 // loop_footer
            %s726 = sadd.s32 1, %s722
          $region376: #{tpu_custom_call.1} parent=369 // loop_footer_branch
            %721 = sbr.rel target = $region372
          $region377: #{tpu_custom_call.1} parent=369 // loop_exit
            _
        $region370: #{tpu_custom_call.1} parent=31 // pred_fallthru
          _
        // Predicated region
        $region389: #{tpu_custom_call.1} parent=31 // pred_check
          _
        $region390: #{tpu_custom_call.1} parent=31 // pred_check_branch
          %754 = sbr.rel (0) target = $region392
        $region391: #{tpu_custom_call.1} parent=31 // pred_region
          %755 = vsyncadd %s567, 16
        $region392: #{tpu_custom_call.1} parent=31 // pred_fallthru
          _
        %s756 = sadd.s32 %s180, 12
        %s757 = sld [smem:[#allocation5 + %s756]]
        %s758 = scalar_lea.vmem %s2, %s757
        %s759 = scalar_lea.vmem [#allocation2], 12
        %p761 = scmp.lt.u32.totalorder 1, 8
        %p762 = pneg %p761
        // Predicated region
        $region393: #{tpu_custom_call.1} parent=31 // pred_check
          _
        $region394: #{tpu_custom_call.1} parent=31 // pred_check_branch
          %764 = sbr.rel (%p761) target = $region396
        $region395: #{tpu_custom_call.1} parent=31 // pred_region
          %s779 = sand.u32 1, 7
          %p780 = scmp.eq.s32.totalorder %s779, 0
          %p781 = pneg %p780
          // Predicated region
          $region408: #{tpu_custom_call.1} parent=395 // pred_check
            _
          $region409: #{tpu_custom_call.1} parent=395 // pred_check_branch
            %783 = sbr.rel (%p780) target = $region411
          $region410: #{tpu_custom_call.1} parent=395 // pred_region
            %s784 = sand.u32 1, 7
            %s785 = ssub.s32 1, %s784
            %s786 = scalar_lea.vmem %s758, %s785
            %s787 = ssub.s32 1, %s784
            %s788 = scalar_lea.vmem %s759, %s787 [#allocation2]
            %s789 = sshllo.u32 0, %s784
            loop: start=0, step=1, limit=1
            $region412: #{tpu_custom_call.1} parent=410 // loop_pre_header
              _
            $region413: #{tpu_custom_call.1} parent=410 // loop_header
              %s791 = sphi 0, %s795
              %p792 = scmp.ge.s32.totalorder %s791, 1
              %s796 = sphi %s786, %s786
              %s797 = sphi %s788, %s788
            $region414: #{tpu_custom_call.1} parent=410 // loop_header_branch
              %794 = sbr.rel (%p792) target = $region418
            $region415: #{tpu_custom_call.1} parent=410 // loop_body
              %v798 = vld [vmem:[%s796] sm:%s789]
              %799 = vst [vmem:[%s797] sm:%s789] %v798
            $region416: #{tpu_custom_call.1} parent=410 // loop_footer
              %s795 = sadd.s32 1, %s791
            $region417: #{tpu_custom_call.1} parent=410 // loop_footer_branch
              %790 = sbr.rel target = $region413
            $region418: #{tpu_custom_call.1} parent=410 // loop_exit
              _
          $region411: #{tpu_custom_call.1} parent=395 // pred_fallthru
            _
        $region396: #{tpu_custom_call.1} parent=31 // pred_fallthru
          _
        // Predicated region
        $region397: #{tpu_custom_call.1} parent=31 // pred_check
          %p765 = pneg %p761
        $region398: #{tpu_custom_call.1} parent=31 // pred_check_branch
          %767 = sbr.rel (%p765) target = $region400
        $region399: #{tpu_custom_call.1} parent=31 // pred_region
          %s768 = sshllo.u32 0, 1
          loop: start=0, step=1, limit=1
          $region401: #{tpu_custom_call.1} parent=399 // loop_pre_header
            _
          $region402: #{tpu_custom_call.1} parent=399 // loop_header
            %s770 = sphi 0, %s774
            %p771 = scmp.ge.s32.totalorder %s770, 1
            %s775 = sphi %s758, %s758
            %s776 = sphi %s759, %s759
          $region403: #{tpu_custom_call.1} parent=399 // loop_header_branch
            %773 = sbr.rel (%p771) target = $region407
          $region404: #{tpu_custom_call.1} parent=399 // loop_body
            %v777 = vld [vmem:[%s775] sm:%s768]
            %778 = vst [vmem:[%s776] sm:%s768] %v777
          $region405: #{tpu_custom_call.1} parent=399 // loop_footer
            %s774 = sadd.s32 1, %s770
          $region406: #{tpu_custom_call.1} parent=399 // loop_footer_branch
            %769 = sbr.rel target = $region402
          $region407: #{tpu_custom_call.1} parent=399 // loop_exit
            _
        $region400: #{tpu_custom_call.1} parent=31 // pred_fallthru
          _
        // Predicated region
        $region419: #{tpu_custom_call.1} parent=31 // pred_check
          _
        $region420: #{tpu_custom_call.1} parent=31 // pred_check_branch
          %802 = sbr.rel (0) target = $region422
        $region421: #{tpu_custom_call.1} parent=31 // pred_region
          %803 = vsyncadd %s567, 16
        $region422: #{tpu_custom_call.1} parent=31 // pred_fallthru
          _
        %s804 = sadd.s32 %s180, 13
        %s805 = sld [smem:[#allocation5 + %s804]]
        %s806 = scalar_lea.vmem %s2, %s805
        %s807 = scalar_lea.vmem [#allocation2], 13
        %p809 = scmp.lt.u32.totalorder 1, 8
        %p810 = pneg %p809
        // Predicated region
        $region423: #{tpu_custom_call.1} parent=31 // pred_check
          _
        $region424: #{tpu_custom_call.1} parent=31 // pred_check_branch
          %812 = sbr.rel (%p809) target = $region426
        $region425: #{tpu_custom_call.1} parent=31 // pred_region
          %s827 = sand.u32 1, 7
          %p828 = scmp.eq.s32.totalorder %s827, 0
          %p829 = pneg %p828
          // Predicated region
          $region438: #{tpu_custom_call.1} parent=425 // pred_check
            _
          $region439: #{tpu_custom_call.1} parent=425 // pred_check_branch
            %831 = sbr.rel (%p828) target = $region441
          $region440: #{tpu_custom_call.1} parent=425 // pred_region
            %s832 = sand.u32 1, 7
            %s833 = ssub.s32 1, %s832
            %s834 = scalar_lea.vmem %s806, %s833
            %s835 = ssub.s32 1, %s832
            %s836 = scalar_lea.vmem %s807, %s835 [#allocation2]
            %s837 = sshllo.u32 0, %s832
            loop: start=0, step=1, limit=1
            $region442: #{tpu_custom_call.1} parent=440 // loop_pre_header
              _
            $region443: #{tpu_custom_call.1} parent=440 // loop_header
              %s839 = sphi 0, %s843
              %p840 = scmp.ge.s32.totalorder %s839, 1
              %s844 = sphi %s834, %s834
              %s845 = sphi %s836, %s836
            $region444: #{tpu_custom_call.1} parent=440 // loop_header_branch
              %842 = sbr.rel (%p840) target = $region448
            $region445: #{tpu_custom_call.1} parent=440 // loop_body
              %v846 = vld [vmem:[%s844] sm:%s837]
              %847 = vst [vmem:[%s845] sm:%s837] %v846
            $region446: #{tpu_custom_call.1} parent=440 // loop_footer
              %s843 = sadd.s32 1, %s839
            $region447: #{tpu_custom_call.1} parent=440 // loop_footer_branch
              %838 = sbr.rel target = $region443
            $region448: #{tpu_custom_call.1} parent=440 // loop_exit
              _
          $region441: #{tpu_custom_call.1} parent=425 // pred_fallthru
            _
        $region426: #{tpu_custom_call.1} parent=31 // pred_fallthru
          _
        // Predicated region
        $region427: #{tpu_custom_call.1} parent=31 // pred_check
          %p813 = pneg %p809
        $region428: #{tpu_custom_call.1} parent=31 // pred_check_branch
          %815 = sbr.rel (%p813) target = $region430
        $region429: #{tpu_custom_call.1} parent=31 // pred_region
          %s816 = sshllo.u32 0, 1
          loop: start=0, step=1, limit=1
          $region431: #{tpu_custom_call.1} parent=429 // loop_pre_header
            _
          $region432: #{tpu_custom_call.1} parent=429 // loop_header
            %s818 = sphi 0, %s822
            %p819 = scmp.ge.s32.totalorder %s818, 1
            %s823 = sphi %s806, %s806
            %s824 = sphi %s807, %s807
          $region433: #{tpu_custom_call.1} parent=429 // loop_header_branch
            %821 = sbr.rel (%p819) target = $region437
          $region434: #{tpu_custom_call.1} parent=429 // loop_body
            %v825 = vld [vmem:[%s823] sm:%s816]
            %826 = vst [vmem:[%s824] sm:%s816] %v825
          $region435: #{tpu_custom_call.1} parent=429 // loop_footer
            %s822 = sadd.s32 1, %s818
          $region436: #{tpu_custom_call.1} parent=429 // loop_footer_branch
            %817 = sbr.rel target = $region432
          $region437: #{tpu_custom_call.1} parent=429 // loop_exit
            _
        $region430: #{tpu_custom_call.1} parent=31 // pred_fallthru
          _
        // Predicated region
        $region449: #{tpu_custom_call.1} parent=31 // pred_check
          _
        $region450: #{tpu_custom_call.1} parent=31 // pred_check_branch
          %850 = sbr.rel (0) target = $region452
        $region451: #{tpu_custom_call.1} parent=31 // pred_region
          %851 = vsyncadd %s567, 16
        $region452: #{tpu_custom_call.1} parent=31 // pred_fallthru
          _
        %s852 = sadd.s32 %s180, 14
        %s853 = sld [smem:[#allocation5 + %s852]]
        %s854 = scalar_lea.vmem %s2, %s853
        %s855 = scalar_lea.vmem [#allocation2], 14
        %p857 = scmp.lt.u32.totalorder 1, 8
        %p858 = pneg %p857
        // Predicated region
        $region453: #{tpu_custom_call.1} parent=31 // pred_check
          _
        $region454: #{tpu_custom_call.1} parent=31 // pred_check_branch
          %860 = sbr.rel (%p857) target = $region456
        $region455: #{tpu_custom_call.1} parent=31 // pred_region
          %s875 = sand.u32 1, 7
          %p876 = scmp.eq.s32.totalorder %s875, 0
          %p877 = pneg %p876
          // Predicated region
          $region468: #{tpu_custom_call.1} parent=455 // pred_check
            _
          $region469: #{tpu_custom_call.1} parent=455 // pred_check_branch
            %879 = sbr.rel (%p876) target = $region471
          $region470: #{tpu_custom_call.1} parent=455 // pred_region
            %s880 = sand.u32 1, 7
            %s881 = ssub.s32 1, %s880
            %s882 = scalar_lea.vmem %s854, %s881
            %s883 = ssub.s32 1, %s880
            %s884 = scalar_lea.vmem %s855, %s883 [#allocation2]
            %s885 = sshllo.u32 0, %s880
            loop: start=0, step=1, limit=1
            $region472: #{tpu_custom_call.1} parent=470 // loop_pre_header
              _
            $region473: #{tpu_custom_call.1} parent=470 // loop_header
              %s887 = sphi 0, %s891
              %p888 = scmp.ge.s32.totalorder %s887, 1
              %s892 = sphi %s882, %s882
              %s893 = sphi %s884, %s884
            $region474: #{tpu_custom_call.1} parent=470 // loop_header_branch
              %890 = sbr.rel (%p888) target = $region478
            $region475: #{tpu_custom_call.1} parent=470 // loop_body
              %v894 = vld [vmem:[%s892] sm:%s885]
              %895 = vst [vmem:[%s893] sm:%s885] %v894
            $region476: #{tpu_custom_call.1} parent=470 // loop_footer
              %s891 = sadd.s32 1, %s887
            $region477: #{tpu_custom_call.1} parent=470 // loop_footer_branch
              %886 = sbr.rel target = $region473
            $region478: #{tpu_custom_call.1} parent=470 // loop_exit
              _
          $region471: #{tpu_custom_call.1} parent=455 // pred_fallthru
            _
        $region456: #{tpu_custom_call.1} parent=31 // pred_fallthru
          _
        // Predicated region
        $region457: #{tpu_custom_call.1} parent=31 // pred_check
          %p861 = pneg %p857
        $region458: #{tpu_custom_call.1} parent=31 // pred_check_branch
          %863 = sbr.rel (%p861) target = $region460
        $region459: #{tpu_custom_call.1} parent=31 // pred_region
          %s864 = sshllo.u32 0, 1
          loop: start=0, step=1, limit=1
          $region461: #{tpu_custom_call.1} parent=459 // loop_pre_header
            _
          $region462: #{tpu_custom_call.1} parent=459 // loop_header
            %s866 = sphi 0, %s870
            %p867 = scmp.ge.s32.totalorder %s866, 1
            %s871 = sphi %s854, %s854
            %s872 = sphi %s855, %s855
          $region463: #{tpu_custom_call.1} parent=459 // loop_header_branch
            %869 = sbr.rel (%p867) target = $region467
          $region464: #{tpu_custom_call.1} parent=459 // loop_body
            %v873 = vld [vmem:[%s871] sm:%s864]
            %874 = vst [vmem:[%s872] sm:%s864] %v873
          $region465: #{tpu_custom_call.1} parent=459 // loop_footer
            %s870 = sadd.s32 1, %s866
          $region466: #{tpu_custom_call.1} parent=459 // loop_footer_branch
            %865 = sbr.rel target = $region462
          $region467: #{tpu_custom_call.1} parent=459 // loop_exit
            _
        $region460: #{tpu_custom_call.1} parent=31 // pred_fallthru
          _
        // Predicated region
        $region479: #{tpu_custom_call.1} parent=31 // pred_check
          _
        $region480: #{tpu_custom_call.1} parent=31 // pred_check_branch
          %898 = sbr.rel (0) target = $region482
        $region481: #{tpu_custom_call.1} parent=31 // pred_region
          %899 = vsyncadd %s567, 16
        $region482: #{tpu_custom_call.1} parent=31 // pred_fallthru
          _
        %s900 = sadd.s32 %s180, 15
        %s901 = sld [smem:[#allocation5 + %s900]]
        %s902 = scalar_lea.vmem %s2, %s901
        %s903 = scalar_lea.vmem [#allocation2], 15
        %p905 = scmp.lt.u32.totalorder 1, 8
        %p906 = pneg %p905
        // Predicated region
        $region483: #{tpu_custom_call.1} parent=31 // pred_check
          _
        $region484: #{tpu_custom_call.1} parent=31 // pred_check_branch
          %908 = sbr.rel (%p905) target = $region486
        $region485: #{tpu_custom_call.1} parent=31 // pred_region
          %s923 = sand.u32 1, 7
          %p924 = scmp.eq.s32.totalorder %s923, 0
          %p925 = pneg %p924
          // Predicated region
          $region498: #{tpu_custom_call.1} parent=485 // pred_check
            _
          $region499: #{tpu_custom_call.1} parent=485 // pred_check_branch
            %927 = sbr.rel (%p924) target = $region501
          $region500: #{tpu_custom_call.1} parent=485 // pred_region
            %s928 = sand.u32 1, 7
            %s929 = ssub.s32 1, %s928
            %s930 = scalar_lea.vmem %s902, %s929
            %s931 = ssub.s32 1, %s928
            %s932 = scalar_lea.vmem %s903, %s931 [#allocation2]
            %s933 = sshllo.u32 0, %s928
            loop: start=0, step=1, limit=1
            $region502: #{tpu_custom_call.1} parent=500 // loop_pre_header
              _
            $region503: #{tpu_custom_call.1} parent=500 // loop_header
              %s935 = sphi 0, %s939
              %p936 = scmp.ge.s32.totalorder %s935, 1
              %s940 = sphi %s930, %s930
              %s941 = sphi %s932, %s932
            $region504: #{tpu_custom_call.1} parent=500 // loop_header_branch
              %938 = sbr.rel (%p936) target = $region508
            $region505: #{tpu_custom_call.1} parent=500 // loop_body
              %v942 = vld [vmem:[%s940] sm:%s933]
              %943 = vst [vmem:[%s941] sm:%s933] %v942
            $region506: #{tpu_custom_call.1} parent=500 // loop_footer
              %s939 = sadd.s32 1, %s935
            $region507: #{tpu_custom_call.1} parent=500 // loop_footer_branch
              %934 = sbr.rel target = $region503
            $region508: #{tpu_custom_call.1} parent=500 // loop_exit
              _
          $region501: #{tpu_custom_call.1} parent=485 // pred_fallthru
            _
        $region486: #{tpu_custom_call.1} parent=31 // pred_fallthru
          _
        // Predicated region
        $region487: #{tpu_custom_call.1} parent=31 // pred_check
          %p909 = pneg %p905
        $region488: #{tpu_custom_call.1} parent=31 // pred_check_branch
          %911 = sbr.rel (%p909) target = $region490
        $region489: #{tpu_custom_call.1} parent=31 // pred_region
          %s912 = sshllo.u32 0, 1
          loop: start=0, step=1, limit=1
          $region491: #{tpu_custom_call.1} parent=489 // loop_pre_header
            _
          $region492: #{tpu_custom_call.1} parent=489 // loop_header
            %s914 = sphi 0, %s918
            %p915 = scmp.ge.s32.totalorder %s914, 1
            %s919 = sphi %s902, %s902
            %s920 = sphi %s903, %s903
          $region493: #{tpu_custom_call.1} parent=489 // loop_header_branch
            %917 = sbr.rel (%p915) target = $region497
          $region494: #{tpu_custom_call.1} parent=489 // loop_body
            %v921 = vld [vmem:[%s919] sm:%s912]
            %922 = vst [vmem:[%s920] sm:%s912] %v921
          $region495: #{tpu_custom_call.1} parent=489 // loop_footer
            %s918 = sadd.s32 1, %s914
          $region496: #{tpu_custom_call.1} parent=489 // loop_footer_branch
            %913 = sbr.rel target = $region492
          $region497: #{tpu_custom_call.1} parent=489 // loop_exit
            _
        $region490: #{tpu_custom_call.1} parent=31 // pred_fallthru
          _
        // Predicated region
        $region509: #{tpu_custom_call.1} parent=31 // pred_check
          _
        $region510: #{tpu_custom_call.1} parent=31 // pred_check_branch
          %946 = sbr.rel (0) target = $region512
        $region511: #{tpu_custom_call.1} parent=31 // pred_region
          %947 = vsyncadd %s567, 16
        $region512: #{tpu_custom_call.1} parent=31 // pred_fallthru
          _
        %s948 = sadd.s32 %s180, 16
        %s949 = sld [smem:[#allocation5 + %s948]]
        %s950 = scalar_lea.vmem %s2, %s949
        %s951 = scalar_lea.vmem [#allocation2], 16
        %s952 = scalar_lea.sflag [#allocation3], 2
        %p954 = scmp.lt.u32.totalorder 1, 8
        %p955 = pneg %p954
        // Predicated region
        $region513: #{tpu_custom_call.1} parent=31 // pred_check
          _
        $region514: #{tpu_custom_call.1} parent=31 // pred_check_branch
          %957 = sbr.rel (%p954) target = $region516
        $region515: #{tpu_custom_call.1} parent=31 // pred_region
          %s972 = sand.u32 1, 7
          %p973 = scmp.eq.s32.totalorder %s972, 0
          %p974 = pneg %p973
          // Predicated region
          $region528: #{tpu_custom_call.1} parent=515 // pred_check
            _
          $region529: #{tpu_custom_call.1} parent=515 // pred_check_branch
            %976 = sbr.rel (%p973) target = $region531
          $region530: #{tpu_custom_call.1} parent=515 // pred_region
            %s977 = sand.u32 1, 7
            %s978 = ssub.s32 1, %s977
            %s979 = scalar_lea.vmem %s950, %s978
            %s980 = ssub.s32 1, %s977
            %s981 = scalar_lea.vmem %s951, %s980 [#allocation2]
            %s982 = sshllo.u32 0, %s977
            loop: start=0, step=1, limit=1
            $region532: #{tpu_custom_call.1} parent=530 // loop_pre_header
              _
            $region533: #{tpu_custom_call.1} parent=530 // loop_header
              %s984 = sphi 0, %s988
              %p985 = scmp.ge.s32.totalorder %s984, 1
              %s989 = sphi %s979, %s979
              %s990 = sphi %s981, %s981
            $region534: #{tpu_custom_call.1} parent=530 // loop_header_branch
              %987 = sbr.rel (%p985) target = $region538
            $region535: #{tpu_custom_call.1} parent=530 // loop_body
              %v991 = vld [vmem:[%s989] sm:%s982]
              %992 = vst [vmem:[%s990] sm:%s982] %v991
            $region536: #{tpu_custom_call.1} parent=530 // loop_footer
              %s988 = sadd.s32 1, %s984
            $region537: #{tpu_custom_call.1} parent=530 // loop_footer_branch
              %983 = sbr.rel target = $region533
            $region538: #{tpu_custom_call.1} parent=530 // loop_exit
              _
          $region531: #{tpu_custom_call.1} parent=515 // pred_fallthru
            _
        $region516: #{tpu_custom_call.1} parent=31 // pred_fallthru
          _
        // Predicated region
        $region517: #{tpu_custom_call.1} parent=31 // pred_check
          %p958 = pneg %p954
        $region518: #{tpu_custom_call.1} parent=31 // pred_check_branch
          %960 = sbr.rel (%p958) target = $region520
        $region519: #{tpu_custom_call.1} parent=31 // pred_region
          %s961 = sshllo.u32 0, 1
          loop: start=0, step=1, limit=1
          $region521: #{tpu_custom_call.1} parent=519 // loop_pre_header
            _
          $region522: #{tpu_custom_call.1} parent=519 // loop_header
            %s963 = sphi 0, %s967
            %p964 = scmp.ge.s32.totalorder %s963, 1
            %s968 = sphi %s950, %s950
            %s969 = sphi %s951, %s951
          $region523: #{tpu_custom_call.1} parent=519 // loop_header_branch
            %966 = sbr.rel (%p964) target = $region527
          $region524: #{tpu_custom_call.1} parent=519 // loop_body
            %v970 = vld [vmem:[%s968] sm:%s961]
            %971 = vst [vmem:[%s969] sm:%s961] %v970
          $region525: #{tpu_custom_call.1} parent=519 // loop_footer
            %s967 = sadd.s32 1, %s963
          $region526: #{tpu_custom_call.1} parent=519 // loop_footer_branch
            %962 = sbr.rel target = $region522
          $region527: #{tpu_custom_call.1} parent=519 // loop_exit
            _
        $region520: #{tpu_custom_call.1} parent=31 // pred_fallthru
          _
        // Predicated region
        $region539: #{tpu_custom_call.1} parent=31 // pred_check
          _
        $region540: #{tpu_custom_call.1} parent=31 // pred_check_branch
          %995 = sbr.rel (0) target = $region542
        $region541: #{tpu_custom_call.1} parent=31 // pred_region
          %996 = vsyncadd %s952, 16
        $region542: #{tpu_custom_call.1} parent=31 // pred_fallthru
          _
        %s997 = sadd.s32 %s180, 17
        %s998 = sld [smem:[#allocation5 + %s997]]
        %s999 = scalar_lea.vmem %s2, %s998
        %s1000 = scalar_lea.vmem [#allocation2], 17
        %p1002 = scmp.lt.u32.totalorder 1, 8
        %p1003 = pneg %p1002
        // Predicated region
        $region543: #{tpu_custom_call.1} parent=31 // pred_check
          _
        $region544: #{tpu_custom_call.1} parent=31 // pred_check_branch
          %1005 = sbr.rel (%p1002) target = $region546
        $region545: #{tpu_custom_call.1} parent=31 // pred_region
          %s1020 = sand.u32 1, 7
          %p1021 = scmp.eq.s32.totalorder %s1020, 0
          %p1022 = pneg %p1021
          // Predicated region
          $region558: #{tpu_custom_call.1} parent=545 // pred_check
            _
          $region559: #{tpu_custom_call.1} parent=545 // pred_check_branch
            %1024 = sbr.rel (%p1021) target = $region561
          $region560: #{tpu_custom_call.1} parent=545 // pred_region
            %s1025 = sand.u32 1, 7
            %s1026 = ssub.s32 1, %s1025
            %s1027 = scalar_lea.vmem %s999, %s1026
            %s1028 = ssub.s32 1, %s1025
            %s1029 = scalar_lea.vmem %s1000, %s1028 [#allocation2]
            %s1030 = sshllo.u32 0, %s1025
            loop: start=0, step=1, limit=1
            $region562: #{tpu_custom_call.1} parent=560 // loop_pre_header
              _
            $region563: #{tpu_custom_call.1} parent=560 // loop_header
              %s1032 = sphi 0, %s1036
              %p1033 = scmp.ge.s32.totalorder %s1032, 1
              %s1037 = sphi %s1027, %s1027
              %s1038 = sphi %s1029, %s1029
            $region564: #{tpu_custom_call.1} parent=560 // loop_header_branch
              %1035 = sbr.rel (%p1033) target = $region568
            $region565: #{tpu_custom_call.1} parent=560 // loop_body
              %v1039 = vld [vmem:[%s1037] sm:%s1030]
              %1040 = vst [vmem:[%s1038] sm:%s1030] %v1039
            $region566: #{tpu_custom_call.1} parent=560 // loop_footer
              %s1036 = sadd.s32 1, %s1032
            $region567: #{tpu_custom_call.1} parent=560 // loop_footer_branch
              %1031 = sbr.rel target = $region563
            $region568: #{tpu_custom_call.1} parent=560 // loop_exit
              _
          $region561: #{tpu_custom_call.1} parent=545 // pred_fallthru
            _
        $region546: #{tpu_custom_call.1} parent=31 // pred_fallthru
          _
        // Predicated region
        $region547: #{tpu_custom_call.1} parent=31 // pred_check
          %p1006 = pneg %p1002
        $region548: #{tpu_custom_call.1} parent=31 // pred_check_branch
          %1008 = sbr.rel (%p1006) target = $region550
        $region549: #{tpu_custom_call.1} parent=31 // pred_region
          %s1009 = sshllo.u32 0, 1
          loop: start=0, step=1, limit=1
          $region551: #{tpu_custom_call.1} parent=549 // loop_pre_header
            _
          $region552: #{tpu_custom_call.1} parent=549 // loop_header
            %s1011 = sphi 0, %s1015
            %p1012 = scmp.ge.s32.totalorder %s1011, 1
            %s1016 = sphi %s999, %s999
            %s1017 = sphi %s1000, %s1000
          $region553: #{tpu_custom_call.1} parent=549 // loop_header_branch
            %1014 = sbr.rel (%p1012) target = $region557
          $region554: #{tpu_custom_call.1} parent=549 // loop_body
            %v1018 = vld [vmem:[%s1016] sm:%s1009]
            %1019 = vst [vmem:[%s1017] sm:%s1009] %v1018
          $region555: #{tpu_custom_call.1} parent=549 // loop_footer
            %s1015 = sadd.s32 1, %s1011
          $region556: #{tpu_custom_call.1} parent=549 // loop_footer_branch
            %1010 = sbr.rel target = $region552
          $region557: #{tpu_custom_call.1} parent=549 // loop_exit
            _
        $region550: #{tpu_custom_call.1} parent=31 // pred_fallthru
          _
        // Predicated region
        $region569: #{tpu_custom_call.1} parent=31 // pred_check
          _
        $region570: #{tpu_custom_call.1} parent=31 // pred_check_branch
          %1043 = sbr.rel (0) target = $region572
        $region571: #{tpu_custom_call.1} parent=31 // pred_region
          %1044 = vsyncadd %s952, 16
        $region572: #{tpu_custom_call.1} parent=31 // pred_fallthru
          _
        %s1045 = sadd.s32 %s180, 18
        %s1046 = sld [smem:[#allocation5 + %s1045]]
        %s1047 = scalar_lea.vmem %s2, %s1046
        %s1048 = scalar_lea.vmem [#allocation2], 18
        %p1050 = scmp.lt.u32.totalorder 1, 8
        %p1051 = pneg %p1050
        // Predicated region
        $region573: #{tpu_custom_call.1} parent=31 // pred_check
          _
        $region574: #{tpu_custom_call.1} parent=31 // pred_check_branch
          %1053 = sbr.rel (%p1050) target = $region576
        $region575: #{tpu_custom_call.1} parent=31 // pred_region
          %s1068 = sand.u32 1, 7
          %p1069 = scmp.eq.s32.totalorder %s1068, 0
          %p1070 = pneg %p1069
          // Predicated region
          $region588: #{tpu_custom_call.1} parent=575 // pred_check
            _
          $region589: #{tpu_custom_call.1} parent=575 // pred_check_branch
            %1072 = sbr.rel (%p1069) target = $region591
          $region590: #{tpu_custom_call.1} parent=575 // pred_region
            %s1073 = sand.u32 1, 7
            %s1074 = ssub.s32 1, %s1073
            %s1075 = scalar_lea.vmem %s1047, %s1074
            %s1076 = ssub.s32 1, %s1073
            %s1077 = scalar_lea.vmem %s1048, %s1076 [#allocation2]
            %s1078 = sshllo.u32 0, %s1073
            loop: start=0, step=1, limit=1
            $region592: #{tpu_custom_call.1} parent=590 // loop_pre_header
              _
            $region593: #{tpu_custom_call.1} parent=590 // loop_header
              %s1080 = sphi 0, %s1084
              %p1081 = scmp.ge.s32.totalorder %s1080, 1
              %s1085 = sphi %s1075, %s1075
              %s1086 = sphi %s1077, %s1077
            $region594: #{tpu_custom_call.1} parent=590 // loop_header_branch
              %1083 = sbr.rel (%p1081) target = $region598
            $region595: #{tpu_custom_call.1} parent=590 // loop_body
              %v1087 = vld [vmem:[%s1085] sm:%s1078]
              %1088 = vst [vmem:[%s1086] sm:%s1078] %v1087
            $region596: #{tpu_custom_call.1} parent=590 // loop_footer
              %s1084 = sadd.s32 1, %s1080
            $region597: #{tpu_custom_call.1} parent=590 // loop_footer_branch
              %1079 = sbr.rel target = $region593
            $region598: #{tpu_custom_call.1} parent=590 // loop_exit
              _
          $region591: #{tpu_custom_call.1} parent=575 // pred_fallthru
            _
        $region576: #{tpu_custom_call.1} parent=31 // pred_fallthru
          _
        // Predicated region
        $region577: #{tpu_custom_call.1} parent=31 // pred_check
          %p1054 = pneg %p1050
        $region578: #{tpu_custom_call.1} parent=31 // pred_check_branch
          %1056 = sbr.rel (%p1054) target = $region580
        $region579: #{tpu_custom_call.1} parent=31 // pred_region
          %s1057 = sshllo.u32 0, 1
          loop: start=0, step=1, limit=1
          $region581: #{tpu_custom_call.1} parent=579 // loop_pre_header
            _
          $region582: #{tpu_custom_call.1} parent=579 // loop_header
            %s1059 = sphi 0, %s1063
            %p1060 = scmp.ge.s32.totalorder %s1059, 1
            %s1064 = sphi %s1047, %s1047
            %s1065 = sphi %s1048, %s1048
          $region583: #{tpu_custom_call.1} parent=579 // loop_header_branch
            %1062 = sbr.rel (%p1060) target = $region587
          $region584: #{tpu_custom_call.1} parent=579 // loop_body
            %v1066 = vld [vmem:[%s1064] sm:%s1057]
            %1067 = vst [vmem:[%s1065] sm:%s1057] %v1066
          $region585: #{tpu_custom_call.1} parent=579 // loop_footer
            %s1063 = sadd.s32 1, %s1059
          $region586: #{tpu_custom_call.1} parent=579 // loop_footer_branch
            %1058 = sbr.rel target = $region582
          $region587: #{tpu_custom_call.1} parent=579 // loop_exit
            _
        $region580: #{tpu_custom_call.1} parent=31 // pred_fallthru
          _
        // Predicated region
        $region599: #{tpu_custom_call.1} parent=31 // pred_check
          _
        $region600: #{tpu_custom_call.1} parent=31 // pred_check_branch
          %1091 = sbr.rel (0) target = $region602
        $region601: #{tpu_custom_call.1} parent=31 // pred_region
          %1092 = vsyncadd %s952, 16
        $region602: #{tpu_custom_call.1} parent=31 // pred_fallthru
          _
        %s1093 = sadd.s32 %s180, 19
        %s1094 = sld [smem:[#allocation5 + %s1093]]
        %s1095 = scalar_lea.vmem %s2, %s1094
        %s1096 = scalar_lea.vmem [#allocation2], 19
        %p1098 = scmp.lt.u32.totalorder 1, 8
        %p1099 = pneg %p1098
        // Predicated region
        $region603: #{tpu_custom_call.1} parent=31 // pred_check
          _
        $region604: #{tpu_custom_call.1} parent=31 // pred_check_branch
          %1101 = sbr.rel (%p1098) target = $region606
        $region605: #{tpu_custom_call.1} parent=31 // pred_region
          %s1116 = sand.u32 1, 7
          %p1117 = scmp.eq.s32.totalorder %s1116, 0
          %p1118 = pneg %p1117
          // Predicated region
          $region618: #{tpu_custom_call.1} parent=605 // pred_check
            _
          $region619: #{tpu_custom_call.1} parent=605 // pred_check_branch
            %1120 = sbr.rel (%p1117) target = $region621
          $region620: #{tpu_custom_call.1} parent=605 // pred_region
            %s1121 = sand.u32 1, 7
            %s1122 = ssub.s32 1, %s1121
            %s1123 = scalar_lea.vmem %s1095, %s1122
            %s1124 = ssub.s32 1, %s1121
            %s1125 = scalar_lea.vmem %s1096, %s1124 [#allocation2]
            %s1126 = sshllo.u32 0, %s1121
            loop: start=0, step=1, limit=1
            $region622: #{tpu_custom_call.1} parent=620 // loop_pre_header
              _
            $region623: #{tpu_custom_call.1} parent=620 // loop_header
              %s1128 = sphi 0, %s1132
              %p1129 = scmp.ge.s32.totalorder %s1128, 1
              %s1133 = sphi %s1123, %s1123
              %s1134 = sphi %s1125, %s1125
            $region624: #{tpu_custom_call.1} parent=620 // loop_header_branch
              %1131 = sbr.rel (%p1129) target = $region628
            $region625: #{tpu_custom_call.1} parent=620 // loop_body
              %v1135 = vld [vmem:[%s1133] sm:%s1126]
              %1136 = vst [vmem:[%s1134] sm:%s1126] %v1135
            $region626: #{tpu_custom_call.1} parent=620 // loop_footer
              %s1132 = sadd.s32 1, %s1128
            $region627: #{tpu_custom_call.1} parent=620 // loop_footer_branch
              %1127 = sbr.rel target = $region623
            $region628: #{tpu_custom_call.1} parent=620 // loop_exit
              _
          $region621: #{tpu_custom_call.1} parent=605 // pred_fallthru
            _
        $region606: #{tpu_custom_call.1} parent=31 // pred_fallthru
          _
        // Predicated region
        $region607: #{tpu_custom_call.1} parent=31 // pred_check
          %p1102 = pneg %p1098
        $region608: #{tpu_custom_call.1} parent=31 // pred_check_branch
          %1104 = sbr.rel (%p1102) target = $region610
        $region609: #{tpu_custom_call.1} parent=31 // pred_region
          %s1105 = sshllo.u32 0, 1
          loop: start=0, step=1, limit=1
          $region611: #{tpu_custom_call.1} parent=609 // loop_pre_header
            _
          $region612: #{tpu_custom_call.1} parent=609 // loop_header
            %s1107 = sphi 0, %s1111
            %p1108 = scmp.ge.s32.totalorder %s1107, 1
            %s1112 = sphi %s1095, %s1095
            %s1113 = sphi %s1096, %s1096
          $region613: #{tpu_custom_call.1} parent=609 // loop_header_branch
            %1110 = sbr.rel (%p1108) target = $region617
          $region614: #{tpu_custom_call.1} parent=609 // loop_body
            %v1114 = vld [vmem:[%s1112] sm:%s1105]
            %1115 = vst [vmem:[%s1113] sm:%s1105] %v1114
          $region615: #{tpu_custom_call.1} parent=609 // loop_footer
            %s1111 = sadd.s32 1, %s1107
          $region616: #{tpu_custom_call.1} parent=609 // loop_footer_branch
            %1106 = sbr.rel target = $region612
          $region617: #{tpu_custom_call.1} parent=609 // loop_exit
            _
        $region610: #{tpu_custom_call.1} parent=31 // pred_fallthru
          _
        // Predicated region
        $region629: #{tpu_custom_call.1} parent=31 // pred_check
          _
        $region630: #{tpu_custom_call.1} parent=31 // pred_check_branch
          %1139 = sbr.rel (0) target = $region632
        $region631: #{tpu_custom_call.1} parent=31 // pred_region
          %1140 = vsyncadd %s952, 16
        $region632: #{tpu_custom_call.1} parent=31 // pred_fallthru
          _
        %s1141 = sadd.s32 %s180, 20
        %s1142 = sld [smem:[#allocation5 + %s1141]]
        %s1143 = scalar_lea.vmem %s2, %s1142
        %s1144 = scalar_lea.vmem [#allocation2], 20
        %p1146 = scmp.lt.u32.totalorder 1, 8
        %p1147 = pneg %p1146
        // Predicated region
        $region633: #{tpu_custom_call.1} parent=31 // pred_check
          _
        $region634: #{tpu_custom_call.1} parent=31 // pred_check_branch
          %1149 = sbr.rel (%p1146) target = $region636
        $region635: #{tpu_custom_call.1} parent=31 // pred_region
          %s1164 = sand.u32 1, 7
          %p1165 = scmp.eq.s32.totalorder %s1164, 0
          %p1166 = pneg %p1165
          // Predicated region
          $region648: #{tpu_custom_call.1} parent=635 // pred_check
            _
          $region649: #{tpu_custom_call.1} parent=635 // pred_check_branch
            %1168 = sbr.rel (%p1165) target = $region651
          $region650: #{tpu_custom_call.1} parent=635 // pred_region
            %s1169 = sand.u32 1, 7
            %s1170 = ssub.s32 1, %s1169
            %s1171 = scalar_lea.vmem %s1143, %s1170
            %s1172 = ssub.s32 1, %s1169
            %s1173 = scalar_lea.vmem %s1144, %s1172 [#allocation2]
            %s1174 = sshllo.u32 0, %s1169
            loop: start=0, step=1, limit=1
            $region652: #{tpu_custom_call.1} parent=650 // loop_pre_header
              _
            $region653: #{tpu_custom_call.1} parent=650 // loop_header
              %s1176 = sphi 0, %s1180
              %p1177 = scmp.ge.s32.totalorder %s1176, 1
              %s1181 = sphi %s1171, %s1171
              %s1182 = sphi %s1173, %s1173
            $region654: #{tpu_custom_call.1} parent=650 // loop_header_branch
              %1179 = sbr.rel (%p1177) target = $region658
            $region655: #{tpu_custom_call.1} parent=650 // loop_body
              %v1183 = vld [vmem:[%s1181] sm:%s1174]
              %1184 = vst [vmem:[%s1182] sm:%s1174] %v1183
            $region656: #{tpu_custom_call.1} parent=650 // loop_footer
              %s1180 = sadd.s32 1, %s1176
            $region657: #{tpu_custom_call.1} parent=650 // loop_footer_branch
              %1175 = sbr.rel target = $region653
            $region658: #{tpu_custom_call.1} parent=650 // loop_exit
              _
          $region651: #{tpu_custom_call.1} parent=635 // pred_fallthru
            _
        $region636: #{tpu_custom_call.1} parent=31 // pred_fallthru
          _
        // Predicated region
        $region637: #{tpu_custom_call.1} parent=31 // pred_check
          %p1150 = pneg %p1146
        $region638: #{tpu_custom_call.1} parent=31 // pred_check_branch
          %1152 = sbr.rel (%p1150) target = $region640
        $region639: #{tpu_custom_call.1} parent=31 // pred_region
          %s1153 = sshllo.u32 0, 1
          loop: start=0, step=1, limit=1
          $region641: #{tpu_custom_call.1} parent=639 // loop_pre_header
            _
          $region642: #{tpu_custom_call.1} parent=639 // loop_header
            %s1155 = sphi 0, %s1159
            %p1156 = scmp.ge.s32.totalorder %s1155, 1
            %s1160 = sphi %s1143, %s1143
            %s1161 = sphi %s1144, %s1144
          $region643: #{tpu_custom_call.1} parent=639 // loop_header_branch
            %1158 = sbr.rel (%p1156) target = $region647
          $region644: #{tpu_custom_call.1} parent=639 // loop_body
            %v1162 = vld [vmem:[%s1160] sm:%s1153]
            %1163 = vst [vmem:[%s1161] sm:%s1153] %v1162
          $region645: #{tpu_custom_call.1} parent=639 // loop_footer
            %s1159 = sadd.s32 1, %s1155
          $region646: #{tpu_custom_call.1} parent=639 // loop_footer_branch
            %1154 = sbr.rel target = $region642
          $region647: #{tpu_custom_call.1} parent=639 // loop_exit
            _
        $region640: #{tpu_custom_call.1} parent=31 // pred_fallthru
          _
        // Predicated region
        $region659: #{tpu_custom_call.1} parent=31 // pred_check
          _
        $region660: #{tpu_custom_call.1} parent=31 // pred_check_branch
          %1187 = sbr.rel (0) target = $region662
        $region661: #{tpu_custom_call.1} parent=31 // pred_region
          %1188 = vsyncadd %s952, 16
        $region662: #{tpu_custom_call.1} parent=31 // pred_fallthru
          _
        %s1189 = sadd.s32 %s180, 21
        %s1190 = sld [smem:[#allocation5 + %s1189]]
        %s1191 = scalar_lea.vmem %s2, %s1190
        %s1192 = scalar_lea.vmem [#allocation2], 21
        %p1194 = scmp.lt.u32.totalorder 1, 8
        %p1195 = pneg %p1194
        // Predicated region
        $region663: #{tpu_custom_call.1} parent=31 // pred_check
          _
        $region664: #{tpu_custom_call.1} parent=31 // pred_check_branch
          %1197 = sbr.rel (%p1194) target = $region666
        $region665: #{tpu_custom_call.1} parent=31 // pred_region
          %s1212 = sand.u32 1, 7
          %p1213 = scmp.eq.s32.totalorder %s1212, 0
          %p1214 = pneg %p1213
          // Predicated region
          $region678: #{tpu_custom_call.1} parent=665 // pred_check
            _
          $region679: #{tpu_custom_call.1} parent=665 // pred_check_branch
            %1216 = sbr.rel (%p1213) target = $region681
          $region680: #{tpu_custom_call.1} parent=665 // pred_region
            %s1217 = sand.u32 1, 7
            %s1218 = ssub.s32 1, %s1217
            %s1219 = scalar_lea.vmem %s1191, %s1218
            %s1220 = ssub.s32 1, %s1217
            %s1221 = scalar_lea.vmem %s1192, %s1220 [#allocation2]
            %s1222 = sshllo.u32 0, %s1217
            loop: start=0, step=1, limit=1
            $region682: #{tpu_custom_call.1} parent=680 // loop_pre_header
              _
            $region683: #{tpu_custom_call.1} parent=680 // loop_header
              %s1224 = sphi 0, %s1228
              %p1225 = scmp.ge.s32.totalorder %s1224, 1
              %s1229 = sphi %s1219, %s1219
              %s1230 = sphi %s1221, %s1221
            $region684: #{tpu_custom_call.1} parent=680 // loop_header_branch
              %1227 = sbr.rel (%p1225) target = $region688
            $region685: #{tpu_custom_call.1} parent=680 // loop_body
              %v1231 = vld [vmem:[%s1229] sm:%s1222]
              %1232 = vst [vmem:[%s1230] sm:%s1222] %v1231
            $region686: #{tpu_custom_call.1} parent=680 // loop_footer
              %s1228 = sadd.s32 1, %s1224
            $region687: #{tpu_custom_call.1} parent=680 // loop_footer_branch
              %1223 = sbr.rel target = $region683
            $region688: #{tpu_custom_call.1} parent=680 // loop_exit
              _
          $region681: #{tpu_custom_call.1} parent=665 // pred_fallthru
            _
        $region666: #{tpu_custom_call.1} parent=31 // pred_fallthru
          _
        // Predicated region
        $region667: #{tpu_custom_call.1} parent=31 // pred_check
          %p1198 = pneg %p1194
        $region668: #{tpu_custom_call.1} parent=31 // pred_check_branch
          %1200 = sbr.rel (%p1198) target = $region670
        $region669: #{tpu_custom_call.1} parent=31 // pred_region
          %s1201 = sshllo.u32 0, 1
          loop: start=0, step=1, limit=1
          $region671: #{tpu_custom_call.1} parent=669 // loop_pre_header
            _
          $region672: #{tpu_custom_call.1} parent=669 // loop_header
            %s1203 = sphi 0, %s1207
            %p1204 = scmp.ge.s32.totalorder %s1203, 1
            %s1208 = sphi %s1191, %s1191
            %s1209 = sphi %s1192, %s1192
          $region673: #{tpu_custom_call.1} parent=669 // loop_header_branch
            %1206 = sbr.rel (%p1204) target = $region677
          $region674: #{tpu_custom_call.1} parent=669 // loop_body
            %v1210 = vld [vmem:[%s1208] sm:%s1201]
            %1211 = vst [vmem:[%s1209] sm:%s1201] %v1210
          $region675: #{tpu_custom_call.1} parent=669 // loop_footer
            %s1207 = sadd.s32 1, %s1203
          $region676: #{tpu_custom_call.1} parent=669 // loop_footer_branch
            %1202 = sbr.rel target = $region672
          $region677: #{tpu_custom_call.1} parent=669 // loop_exit
            _
        $region670: #{tpu_custom_call.1} parent=31 // pred_fallthru
          _
        // Predicated region
        $region689: #{tpu_custom_call.1} parent=31 // pred_check
          _
        $region690: #{tpu_custom_call.1} parent=31 // pred_check_branch
          %1235 = sbr.rel (0) target = $region692
        $region691: #{tpu_custom_call.1} parent=31 // pred_region
          %1236 = vsyncadd %s952, 16
        $region692: #{tpu_custom_call.1} parent=31 // pred_fallthru
          _
        %s1237 = sadd.s32 %s180, 22
        %s1238 = sld [smem:[#allocation5 + %s1237]]
        %s1239 = scalar_lea.vmem %s2, %s1238
        %s1240 = scalar_lea.vmem [#allocation2], 22
        %p1242 = scmp.lt.u32.totalorder 1, 8
        %p1243 = pneg %p1242
        // Predicated region
        $region693: #{tpu_custom_call.1} parent=31 // pred_check
          _
        $region694: #{tpu_custom_call.1} parent=31 // pred_check_branch
          %1245 = sbr.rel (%p1242) target = $region696
        $region695: #{tpu_custom_call.1} parent=31 // pred_region
          %s1260 = sand.u32 1, 7
          %p1261 = scmp.eq.s32.totalorder %s1260, 0
          %p1262 = pneg %p1261
          // Predicated region
          $region708: #{tpu_custom_call.1} parent=695 // pred_check
            _
          $region709: #{tpu_custom_call.1} parent=695 // pred_check_branch
            %1264 = sbr.rel (%p1261) target = $region711
          $region710: #{tpu_custom_call.1} parent=695 // pred_region
            %s1265 = sand.u32 1, 7
            %s1266 = ssub.s32 1, %s1265
            %s1267 = scalar_lea.vmem %s1239, %s1266
            %s1268 = ssub.s32 1, %s1265
            %s1269 = scalar_lea.vmem %s1240, %s1268 [#allocation2]
            %s1270 = sshllo.u32 0, %s1265
            loop: start=0, step=1, limit=1
            $region712: #{tpu_custom_call.1} parent=710 // loop_pre_header
              _
            $region713: #{tpu_custom_call.1} parent=710 // loop_header
              %s1272 = sphi 0, %s1276
              %p1273 = scmp.ge.s32.totalorder %s1272, 1
              %s1277 = sphi %s1267, %s1267
              %s1278 = sphi %s1269, %s1269
            $region714: #{tpu_custom_call.1} parent=710 // loop_header_branch
              %1275 = sbr.rel (%p1273) target = $region718
            $region715: #{tpu_custom_call.1} parent=710 // loop_body
              %v1279 = vld [vmem:[%s1277] sm:%s1270]
              %1280 = vst [vmem:[%s1278] sm:%s1270] %v1279
            $region716: #{tpu_custom_call.1} parent=710 // loop_footer
              %s1276 = sadd.s32 1, %s1272
            $region717: #{tpu_custom_call.1} parent=710 // loop_footer_branch
              %1271 = sbr.rel target = $region713
            $region718: #{tpu_custom_call.1} parent=710 // loop_exit
              _
          $region711: #{tpu_custom_call.1} parent=695 // pred_fallthru
            _
        $region696: #{tpu_custom_call.1} parent=31 // pred_fallthru
          _
        // Predicated region
        $region697: #{tpu_custom_call.1} parent=31 // pred_check
          %p1246 = pneg %p1242
        $region698: #{tpu_custom_call.1} parent=31 // pred_check_branch
          %1248 = sbr.rel (%p1246) target = $region700
        $region699: #{tpu_custom_call.1} parent=31 // pred_region
          %s1249 = sshllo.u32 0, 1
          loop: start=0, step=1, limit=1
          $region701: #{tpu_custom_call.1} parent=699 // loop_pre_header
            _
          $region702: #{tpu_custom_call.1} parent=699 // loop_header
            %s1251 = sphi 0, %s1255
            %p1252 = scmp.ge.s32.totalorder %s1251, 1
            %s1256 = sphi %s1239, %s1239
            %s1257 = sphi %s1240, %s1240
          $region703: #{tpu_custom_call.1} parent=699 // loop_header_branch
            %1254 = sbr.rel (%p1252) target = $region707
          $region704: #{tpu_custom_call.1} parent=699 // loop_body
            %v1258 = vld [vmem:[%s1256] sm:%s1249]
            %1259 = vst [vmem:[%s1257] sm:%s1249] %v1258
          $region705: #{tpu_custom_call.1} parent=699 // loop_footer
            %s1255 = sadd.s32 1, %s1251
          $region706: #{tpu_custom_call.1} parent=699 // loop_footer_branch
            %1250 = sbr.rel target = $region702
          $region707: #{tpu_custom_call.1} parent=699 // loop_exit
            _
        $region700: #{tpu_custom_call.1} parent=31 // pred_fallthru
          _
        // Predicated region
        $region719: #{tpu_custom_call.1} parent=31 // pred_check
          _
        $region720: #{tpu_custom_call.1} parent=31 // pred_check_branch
          %1283 = sbr.rel (0) target = $region722
        $region721: #{tpu_custom_call.1} parent=31 // pred_region
          %1284 = vsyncadd %s952, 16
        $region722: #{tpu_custom_call.1} parent=31 // pred_fallthru
          _
        %s1285 = sadd.s32 %s180, 23
        %s1286 = sld [smem:[#allocation5 + %s1285]]
        %s1287 = scalar_lea.vmem %s2, %s1286
        %s1288 = scalar_lea.vmem [#allocation2], 23
        %p1290 = scmp.lt.u32.totalorder 1, 8
        %p1291 = pneg %p1290
        // Predicated region
        $region723: #{tpu_custom_call.1} parent=31 // pred_check
          _
        $region724: #{tpu_custom_call.1} parent=31 // pred_check_branch
          %1293 = sbr.rel (%p1290) target = $region726
        $region725: #{tpu_custom_call.1} parent=31 // pred_region
          %s1308 = sand.u32 1, 7
          %p1309 = scmp.eq.s32.totalorder %s1308, 0
          %p1310 = pneg %p1309
          // Predicated region
          $region738: #{tpu_custom_call.1} parent=725 // pred_check
            _
          $region739: #{tpu_custom_call.1} parent=725 // pred_check_branch
            %1312 = sbr.rel (%p1309) target = $region741
          $region740: #{tpu_custom_call.1} parent=725 // pred_region
            %s1313 = sand.u32 1, 7
            %s1314 = ssub.s32 1, %s1313
            %s1315 = scalar_lea.vmem %s1287, %s1314
            %s1316 = ssub.s32 1, %s1313
            %s1317 = scalar_lea.vmem %s1288, %s1316 [#allocation2]
            %s1318 = sshllo.u32 0, %s1313
            loop: start=0, step=1, limit=1
            $region742: #{tpu_custom_call.1} parent=740 // loop_pre_header
              _
            $region743: #{tpu_custom_call.1} parent=740 // loop_header
              %s1320 = sphi 0, %s1324
              %p1321 = scmp.ge.s32.totalorder %s1320, 1
              %s1325 = sphi %s1315, %s1315
              %s1326 = sphi %s1317, %s1317
            $region744: #{tpu_custom_call.1} parent=740 // loop_header_branch
              %1323 = sbr.rel (%p1321) target = $region748
            $region745: #{tpu_custom_call.1} parent=740 // loop_body
              %v1327 = vld [vmem:[%s1325] sm:%s1318]
              %1328 = vst [vmem:[%s1326] sm:%s1318] %v1327
            $region746: #{tpu_custom_call.1} parent=740 // loop_footer
              %s1324 = sadd.s32 1, %s1320
            $region747: #{tpu_custom_call.1} parent=740 // loop_footer_branch
              %1319 = sbr.rel target = $region743
            $region748: #{tpu_custom_call.1} parent=740 // loop_exit
              _
          $region741: #{tpu_custom_call.1} parent=725 // pred_fallthru
            _
        $region726: #{tpu_custom_call.1} parent=31 // pred_fallthru
          _
        // Predicated region
        $region727: #{tpu_custom_call.1} parent=31 // pred_check
          %p1294 = pneg %p1290
        $region728: #{tpu_custom_call.1} parent=31 // pred_check_branch
          %1296 = sbr.rel (%p1294) target = $region730
        $region729: #{tpu_custom_call.1} parent=31 // pred_region
          %s1297 = sshllo.u32 0, 1
          loop: start=0, step=1, limit=1
          $region731: #{tpu_custom_call.1} parent=729 // loop_pre_header
            _
          $region732: #{tpu_custom_call.1} parent=729 // loop_header
            %s1299 = sphi 0, %s1303
            %p1300 = scmp.ge.s32.totalorder %s1299, 1
            %s1304 = sphi %s1287, %s1287
            %s1305 = sphi %s1288, %s1288
          $region733: #{tpu_custom_call.1} parent=729 // loop_header_branch
            %1302 = sbr.rel (%p1300) target = $region737
          $region734: #{tpu_custom_call.1} parent=729 // loop_body
            %v1306 = vld [vmem:[%s1304] sm:%s1297]
            %1307 = vst [vmem:[%s1305] sm:%s1297] %v1306
          $region735: #{tpu_custom_call.1} parent=729 // loop_footer
            %s1303 = sadd.s32 1, %s1299
          $region736: #{tpu_custom_call.1} parent=729 // loop_footer_branch
            %1298 = sbr.rel target = $region732
          $region737: #{tpu_custom_call.1} parent=729 // loop_exit
            _
        $region730: #{tpu_custom_call.1} parent=31 // pred_fallthru
          _
        // Predicated region
        $region749: #{tpu_custom_call.1} parent=31 // pred_check
          _
        $region750: #{tpu_custom_call.1} parent=31 // pred_check_branch
          %1331 = sbr.rel (0) target = $region752
        $region751: #{tpu_custom_call.1} parent=31 // pred_region
          %1332 = vsyncadd %s952, 16
        $region752: #{tpu_custom_call.1} parent=31 // pred_fallthru
          _
        %s1333 = sadd.s32 %s180, 24
        %s1334 = sld [smem:[#allocation5 + %s1333]]
        %s1335 = scalar_lea.vmem %s2, %s1334
        %s1336 = scalar_lea.vmem [#allocation2], 24
        %s1337 = scalar_lea.sflag [#allocation3], 3
        %p1339 = scmp.lt.u32.totalorder 1, 8
        %p1340 = pneg %p1339
        // Predicated region
        $region753: #{tpu_custom_call.1} parent=31 // pred_check
          _
        $region754: #{tpu_custom_call.1} parent=31 // pred_check_branch
          %1342 = sbr.rel (%p1339) target = $region756
        $region755: #{tpu_custom_call.1} parent=31 // pred_region
          %s1357 = sand.u32 1, 7
          %p1358 = scmp.eq.s32.totalorder %s1357, 0
          %p1359 = pneg %p1358
          // Predicated region
          $region768: #{tpu_custom_call.1} parent=755 // pred_check
            _
          $region769: #{tpu_custom_call.1} parent=755 // pred_check_branch
            %1361 = sbr.rel (%p1358) target = $region771
          $region770: #{tpu_custom_call.1} parent=755 // pred_region
            %s1362 = sand.u32 1, 7
            %s1363 = ssub.s32 1, %s1362
            %s1364 = scalar_lea.vmem %s1335, %s1363
            %s1365 = ssub.s32 1, %s1362
            %s1366 = scalar_lea.vmem %s1336, %s1365 [#allocation2]
            %s1367 = sshllo.u32 0, %s1362
            loop: start=0, step=1, limit=1
            $region772: #{tpu_custom_call.1} parent=770 // loop_pre_header
              _
            $region773: #{tpu_custom_call.1} parent=770 // loop_header
              %s1369 = sphi 0, %s1373
              %p1370 = scmp.ge.s32.totalorder %s1369, 1
              %s1374 = sphi %s1364, %s1364
              %s1375 = sphi %s1366, %s1366
            $region774: #{tpu_custom_call.1} parent=770 // loop_header_branch
              %1372 = sbr.rel (%p1370) target = $region778
            $region775: #{tpu_custom_call.1} parent=770 // loop_body
              %v1376 = vld [vmem:[%s1374] sm:%s1367]
              %1377 = vst [vmem:[%s1375] sm:%s1367] %v1376
            $region776: #{tpu_custom_call.1} parent=770 // loop_footer
              %s1373 = sadd.s32 1, %s1369
            $region777: #{tpu_custom_call.1} parent=770 // loop_footer_branch
              %1368 = sbr.rel target = $region773
            $region778: #{tpu_custom_call.1} parent=770 // loop_exit
              _
          $region771: #{tpu_custom_call.1} parent=755 // pred_fallthru
            _
        $region756: #{tpu_custom_call.1} parent=31 // pred_fallthru
          _
        // Predicated region
        $region757: #{tpu_custom_call.1} parent=31 // pred_check
          %p1343 = pneg %p1339
        $region758: #{tpu_custom_call.1} parent=31 // pred_check_branch
          %1345 = sbr.rel (%p1343) target = $region760
        $region759: #{tpu_custom_call.1} parent=31 // pred_region
          %s1346 = sshllo.u32 0, 1
          loop: start=0, step=1, limit=1
          $region761: #{tpu_custom_call.1} parent=759 // loop_pre_header
            _
          $region762: #{tpu_custom_call.1} parent=759 // loop_header
            %s1348 = sphi 0, %s1352
            %p1349 = scmp.ge.s32.totalorder %s1348, 1
            %s1353 = sphi %s1335, %s1335
            %s1354 = sphi %s1336, %s1336
          $region763: #{tpu_custom_call.1} parent=759 // loop_header_branch
            %1351 = sbr.rel (%p1349) target = $region767
          $region764: #{tpu_custom_call.1} parent=759 // loop_body
            %v1355 = vld [vmem:[%s1353] sm:%s1346]
            %1356 = vst [vmem:[%s1354] sm:%s1346] %v1355
          $region765: #{tpu_custom_call.1} parent=759 // loop_footer
            %s1352 = sadd.s32 1, %s1348
          $region766: #{tpu_custom_call.1} parent=759 // loop_footer_branch
            %1347 = sbr.rel target = $region762
          $region767: #{tpu_custom_call.1} parent=759 // loop_exit
            _
        $region760: #{tpu_custom_call.1} parent=31 // pred_fallthru
          _
        // Predicated region
        $region779: #{tpu_custom_call.1} parent=31 // pred_check
          _
        $region780: #{tpu_custom_call.1} parent=31 // pred_check_branch
          %1380 = sbr.rel (0) target = $region782
        $region781: #{tpu_custom_call.1} parent=31 // pred_region
          %1381 = vsyncadd %s1337, 16
        $region782: #{tpu_custom_call.1} parent=31 // pred_fallthru
          _
        %s1382 = sadd.s32 %s180, 25
        %s1383 = sld [smem:[#allocation5 + %s1382]]
        %s1384 = scalar_lea.vmem %s2, %s1383
        %s1385 = scalar_lea.vmem [#allocation2], 25
        %p1387 = scmp.lt.u32.totalorder 1, 8
        %p1388 = pneg %p1387
        // Predicated region
        $region783: #{tpu_custom_call.1} parent=31 // pred_check
          _
        $region784: #{tpu_custom_call.1} parent=31 // pred_check_branch
          %1390 = sbr.rel (%p1387) target = $region786
        $region785: #{tpu_custom_call.1} parent=31 // pred_region
          %s1405 = sand.u32 1, 7
          %p1406 = scmp.eq.s32.totalorder %s1405, 0
          %p1407 = pneg %p1406
          // Predicated region
          $region798: #{tpu_custom_call.1} parent=785 // pred_check
            _
          $region799: #{tpu_custom_call.1} parent=785 // pred_check_branch
            %1409 = sbr.rel (%p1406) target = $region801
          $region800: #{tpu_custom_call.1} parent=785 // pred_region
            %s1410 = sand.u32 1, 7
            %s1411 = ssub.s32 1, %s1410
            %s1412 = scalar_lea.vmem %s1384, %s1411
            %s1413 = ssub.s32 1, %s1410
            %s1414 = scalar_lea.vmem %s1385, %s1413 [#allocation2]
            %s1415 = sshllo.u32 0, %s1410
            loop: start=0, step=1, limit=1
            $region802: #{tpu_custom_call.1} parent=800 // loop_pre_header
              _
            $region803: #{tpu_custom_call.1} parent=800 // loop_header
              %s1417 = sphi 0, %s1421
              %p1418 = scmp.ge.s32.totalorder %s1417, 1
              %s1422 = sphi %s1412, %s1412
              %s1423 = sphi %s1414, %s1414
            $region804: #{tpu_custom_call.1} parent=800 // loop_header_branch
              %1420 = sbr.rel (%p1418) target = $region808
            $region805: #{tpu_custom_call.1} parent=800 // loop_body
              %v1424 = vld [vmem:[%s1422] sm:%s1415]
              %1425 = vst [vmem:[%s1423] sm:%s1415] %v1424
            $region806: #{tpu_custom_call.1} parent=800 // loop_footer
              %s1421 = sadd.s32 1, %s1417
            $region807: #{tpu_custom_call.1} parent=800 // loop_footer_branch
              %1416 = sbr.rel target = $region803
            $region808: #{tpu_custom_call.1} parent=800 // loop_exit
              _
          $region801: #{tpu_custom_call.1} parent=785 // pred_fallthru
            _
        $region786: #{tpu_custom_call.1} parent=31 // pred_fallthru
          _
        // Predicated region
        $region787: #{tpu_custom_call.1} parent=31 // pred_check
          %p1391 = pneg %p1387
        $region788: #{tpu_custom_call.1} parent=31 // pred_check_branch
          %1393 = sbr.rel (%p1391) target = $region790
        $region789: #{tpu_custom_call.1} parent=31 // pred_region
          %s1394 = sshllo.u32 0, 1
          loop: start=0, step=1, limit=1
          $region791: #{tpu_custom_call.1} parent=789 // loop_pre_header
            _
          $region792: #{tpu_custom_call.1} parent=789 // loop_header
            %s1396 = sphi 0, %s1400
            %p1397 = scmp.ge.s32.totalorder %s1396, 1
            %s1401 = sphi %s1384, %s1384
            %s1402 = sphi %s1385, %s1385
          $region793: #{tpu_custom_call.1} parent=789 // loop_header_branch
            %1399 = sbr.rel (%p1397) target = $region797
          $region794: #{tpu_custom_call.1} parent=789 // loop_body
            %v1403 = vld [vmem:[%s1401] sm:%s1394]
            %1404 = vst [vmem:[%s1402] sm:%s1394] %v1403
          $region795: #{tpu_custom_call.1} parent=789 // loop_footer
            %s1400 = sadd.s32 1, %s1396
          $region796: #{tpu_custom_call.1} parent=789 // loop_footer_branch
            %1395 = sbr.rel target = $region792
          $region797: #{tpu_custom_call.1} parent=789 // loop_exit
            _
        $region790: #{tpu_custom_call.1} parent=31 // pred_fallthru
          _
        // Predicated region
        $region809: #{tpu_custom_call.1} parent=31 // pred_check
          _
        $region810: #{tpu_custom_call.1} parent=31 // pred_check_branch
          %1428 = sbr.rel (0) target = $region812
        $region811: #{tpu_custom_call.1} parent=31 // pred_region
          %1429 = vsyncadd %s1337, 16
        $region812: #{tpu_custom_call.1} parent=31 // pred_fallthru
          _
        %s1430 = sadd.s32 %s180, 26
        %s1431 = sld [smem:[#allocation5 + %s1430]]
        %s1432 = scalar_lea.vmem %s2, %s1431
        %s1433 = scalar_lea.vmem [#allocation2], 26
        %p1435 = scmp.lt.u32.totalorder 1, 8
        %p1436 = pneg %p1435
        // Predicated region
        $region813: #{tpu_custom_call.1} parent=31 // pred_check
          _
        $region814: #{tpu_custom_call.1} parent=31 // pred_check_branch
          %1438 = sbr.rel (%p1435) target = $region816
        $region815: #{tpu_custom_call.1} parent=31 // pred_region
          %s1453 = sand.u32 1, 7
          %p1454 = scmp.eq.s32.totalorder %s1453, 0
          %p1455 = pneg %p1454
          // Predicated region
          $region828: #{tpu_custom_call.1} parent=815 // pred_check
            _
          $region829: #{tpu_custom_call.1} parent=815 // pred_check_branch
            %1457 = sbr.rel (%p1454) target = $region831
          $region830: #{tpu_custom_call.1} parent=815 // pred_region
            %s1458 = sand.u32 1, 7
            %s1459 = ssub.s32 1, %s1458
            %s1460 = scalar_lea.vmem %s1432, %s1459
            %s1461 = ssub.s32 1, %s1458
            %s1462 = scalar_lea.vmem %s1433, %s1461 [#allocation2]
            %s1463 = sshllo.u32 0, %s1458
            loop: start=0, step=1, limit=1
            $region832: #{tpu_custom_call.1} parent=830 // loop_pre_header
              _
            $region833: #{tpu_custom_call.1} parent=830 // loop_header
              %s1465 = sphi 0, %s1469
              %p1466 = scmp.ge.s32.totalorder %s1465, 1
              %s1470 = sphi %s1460, %s1460
              %s1471 = sphi %s1462, %s1462
            $region834: #{tpu_custom_call.1} parent=830 // loop_header_branch
              %1468 = sbr.rel (%p1466) target = $region838
            $region835: #{tpu_custom_call.1} parent=830 // loop_body
              %v1472 = vld [vmem:[%s1470] sm:%s1463]
              %1473 = vst [vmem:[%s1471] sm:%s1463] %v1472
            $region836: #{tpu_custom_call.1} parent=830 // loop_footer
              %s1469 = sadd.s32 1, %s1465
            $region837: #{tpu_custom_call.1} parent=830 // loop_footer_branch
              %1464 = sbr.rel target = $region833
            $region838: #{tpu_custom_call.1} parent=830 // loop_exit
              _
          $region831: #{tpu_custom_call.1} parent=815 // pred_fallthru
            _
        $region816: #{tpu_custom_call.1} parent=31 // pred_fallthru
          _
        // Predicated region
        $region817: #{tpu_custom_call.1} parent=31 // pred_check
          %p1439 = pneg %p1435
        $region818: #{tpu_custom_call.1} parent=31 // pred_check_branch
          %1441 = sbr.rel (%p1439) target = $region820
        $region819: #{tpu_custom_call.1} parent=31 // pred_region
          %s1442 = sshllo.u32 0, 1
          loop: start=0, step=1, limit=1
          $region821: #{tpu_custom_call.1} parent=819 // loop_pre_header
            _
          $region822: #{tpu_custom_call.1} parent=819 // loop_header
            %s1444 = sphi 0, %s1448
            %p1445 = scmp.ge.s32.totalorder %s1444, 1
            %s1449 = sphi %s1432, %s1432
            %s1450 = sphi %s1433, %s1433
          $region823: #{tpu_custom_call.1} parent=819 // loop_header_branch
            %1447 = sbr.rel (%p1445) target = $region827
          $region824: #{tpu_custom_call.1} parent=819 // loop_body
            %v1451 = vld [vmem:[%s1449] sm:%s1442]
            %1452 = vst [vmem:[%s1450] sm:%s1442] %v1451
          $region825: #{tpu_custom_call.1} parent=819 // loop_footer
            %s1448 = sadd.s32 1, %s1444
          $region826: #{tpu_custom_call.1} parent=819 // loop_footer_branch
            %1443 = sbr.rel target = $region822
          $region827: #{tpu_custom_call.1} parent=819 // loop_exit
            _
        $region820: #{tpu_custom_call.1} parent=31 // pred_fallthru
          _
        // Predicated region
        $region839: #{tpu_custom_call.1} parent=31 // pred_check
          _
        $region840: #{tpu_custom_call.1} parent=31 // pred_check_branch
          %1476 = sbr.rel (0) target = $region842
        $region841: #{tpu_custom_call.1} parent=31 // pred_region
          %1477 = vsyncadd %s1337, 16
        $region842: #{tpu_custom_call.1} parent=31 // pred_fallthru
          _
        %s1478 = sadd.s32 %s180, 27
        %s1479 = sld [smem:[#allocation5 + %s1478]]
        %s1480 = scalar_lea.vmem %s2, %s1479
        %s1481 = scalar_lea.vmem [#allocation2], 27
        %p1483 = scmp.lt.u32.totalorder 1, 8
        %p1484 = pneg %p1483
        // Predicated region
        $region843: #{tpu_custom_call.1} parent=31 // pred_check
          _
        $region844: #{tpu_custom_call.1} parent=31 // pred_check_branch
          %1486 = sbr.rel (%p1483) target = $region846
        $region845: #{tpu_custom_call.1} parent=31 // pred_region
          %s1501 = sand.u32 1, 7
          %p1502 = scmp.eq.s32.totalorder %s1501, 0
          %p1503 = pneg %p1502
          // Predicated region
          $region858: #{tpu_custom_call.1} parent=845 // pred_check
            _
          $region859: #{tpu_custom_call.1} parent=845 // pred_check_branch
            %1505 = sbr.rel (%p1502) target = $region861
          $region860: #{tpu_custom_call.1} parent=845 // pred_region
            %s1506 = sand.u32 1, 7
            %s1507 = ssub.s32 1, %s1506
            %s1508 = scalar_lea.vmem %s1480, %s1507
            %s1509 = ssub.s32 1, %s1506
            %s1510 = scalar_lea.vmem %s1481, %s1509 [#allocation2]
            %s1511 = sshllo.u32 0, %s1506
            loop: start=0, step=1, limit=1
            $region862: #{tpu_custom_call.1} parent=860 // loop_pre_header
              _
            $region863: #{tpu_custom_call.1} parent=860 // loop_header
              %s1513 = sphi 0, %s1517
              %p1514 = scmp.ge.s32.totalorder %s1513, 1
              %s1518 = sphi %s1508, %s1508
              %s1519 = sphi %s1510, %s1510
            $region864: #{tpu_custom_call.1} parent=860 // loop_header_branch
              %1516 = sbr.rel (%p1514) target = $region868
            $region865: #{tpu_custom_call.1} parent=860 // loop_body
              %v1520 = vld [vmem:[%s1518] sm:%s1511]
              %1521 = vst [vmem:[%s1519] sm:%s1511] %v1520
            $region866: #{tpu_custom_call.1} parent=860 // loop_footer
              %s1517 = sadd.s32 1, %s1513
            $region867: #{tpu_custom_call.1} parent=860 // loop_footer_branch
              %1512 = sbr.rel target = $region863
            $region868: #{tpu_custom_call.1} parent=860 // loop_exit
              _
          $region861: #{tpu_custom_call.1} parent=845 // pred_fallthru
            _
        $region846: #{tpu_custom_call.1} parent=31 // pred_fallthru
          _
        // Predicated region
        $region847: #{tpu_custom_call.1} parent=31 // pred_check
          %p1487 = pneg %p1483
        $region848: #{tpu_custom_call.1} parent=31 // pred_check_branch
          %1489 = sbr.rel (%p1487) target = $region850
        $region849: #{tpu_custom_call.1} parent=31 // pred_region
          %s1490 = sshllo.u32 0, 1
          loop: start=0, step=1, limit=1
          $region851: #{tpu_custom_call.1} parent=849 // loop_pre_header
            _
          $region852: #{tpu_custom_call.1} parent=849 // loop_header
            %s1492 = sphi 0, %s1496
            %p1493 = scmp.ge.s32.totalorder %s1492, 1
            %s1497 = sphi %s1480, %s1480
            %s1498 = sphi %s1481, %s1481
          $region853: #{tpu_custom_call.1} parent=849 // loop_header_branch
            %1495 = sbr.rel (%p1493) target = $region857
          $region854: #{tpu_custom_call.1} parent=849 // loop_body
            %v1499 = vld [vmem:[%s1497] sm:%s1490]
            %1500 = vst [vmem:[%s1498] sm:%s1490] %v1499
          $region855: #{tpu_custom_call.1} parent=849 // loop_footer
            %s1496 = sadd.s32 1, %s1492
          $region856: #{tpu_custom_call.1} parent=849 // loop_footer_branch
            %1491 = sbr.rel target = $region852
          $region857: #{tpu_custom_call.1} parent=849 // loop_exit
            _
        $region850: #{tpu_custom_call.1} parent=31 // pred_fallthru
          _
        // Predicated region
        $region869: #{tpu_custom_call.1} parent=31 // pred_check
          _
        $region870: #{tpu_custom_call.1} parent=31 // pred_check_branch
          %1524 = sbr.rel (0) target = $region872
        $region871: #{tpu_custom_call.1} parent=31 // pred_region
          %1525 = vsyncadd %s1337, 16
        $region872: #{tpu_custom_call.1} parent=31 // pred_fallthru
          _
        %s1526 = sadd.s32 %s180, 28
        %s1527 = sld [smem:[#allocation5 + %s1526]]
        %s1528 = scalar_lea.vmem %s2, %s1527
        %s1529 = scalar_lea.vmem [#allocation2], 28
        %p1531 = scmp.lt.u32.totalorder 1, 8
        %p1532 = pneg %p1531
        // Predicated region
        $region873: #{tpu_custom_call.1} parent=31 // pred_check
          _
        $region874: #{tpu_custom_call.1} parent=31 // pred_check_branch
          %1534 = sbr.rel (%p1531) target = $region876
        $region875: #{tpu_custom_call.1} parent=31 // pred_region
          %s1549 = sand.u32 1, 7
          %p1550 = scmp.eq.s32.totalorder %s1549, 0
          %p1551 = pneg %p1550
          // Predicated region
          $region888: #{tpu_custom_call.1} parent=875 // pred_check
            _
          $region889: #{tpu_custom_call.1} parent=875 // pred_check_branch
            %1553 = sbr.rel (%p1550) target = $region891
          $region890: #{tpu_custom_call.1} parent=875 // pred_region
            %s1554 = sand.u32 1, 7
            %s1555 = ssub.s32 1, %s1554
            %s1556 = scalar_lea.vmem %s1528, %s1555
            %s1557 = ssub.s32 1, %s1554
            %s1558 = scalar_lea.vmem %s1529, %s1557 [#allocation2]
            %s1559 = sshllo.u32 0, %s1554
            loop: start=0, step=1, limit=1
            $region892: #{tpu_custom_call.1} parent=890 // loop_pre_header
              _
            $region893: #{tpu_custom_call.1} parent=890 // loop_header
              %s1561 = sphi 0, %s1565
              %p1562 = scmp.ge.s32.totalorder %s1561, 1
              %s1566 = sphi %s1556, %s1556
              %s1567 = sphi %s1558, %s1558
            $region894: #{tpu_custom_call.1} parent=890 // loop_header_branch
              %1564 = sbr.rel (%p1562) target = $region898
            $region895: #{tpu_custom_call.1} parent=890 // loop_body
              %v1568 = vld [vmem:[%s1566] sm:%s1559]
              %1569 = vst [vmem:[%s1567] sm:%s1559] %v1568
            $region896: #{tpu_custom_call.1} parent=890 // loop_footer
              %s1565 = sadd.s32 1, %s1561
            $region897: #{tpu_custom_call.1} parent=890 // loop_footer_branch
              %1560 = sbr.rel target = $region893
            $region898: #{tpu_custom_call.1} parent=890 // loop_exit
              _
          $region891: #{tpu_custom_call.1} parent=875 // pred_fallthru
            _
        $region876: #{tpu_custom_call.1} parent=31 // pred_fallthru
          _
        // Predicated region
        $region877: #{tpu_custom_call.1} parent=31 // pred_check
          %p1535 = pneg %p1531
        $region878: #{tpu_custom_call.1} parent=31 // pred_check_branch
          %1537 = sbr.rel (%p1535) target = $region880
        $region879: #{tpu_custom_call.1} parent=31 // pred_region
          %s1538 = sshllo.u32 0, 1
          loop: start=0, step=1, limit=1
          $region881: #{tpu_custom_call.1} parent=879 // loop_pre_header
            _
          $region882: #{tpu_custom_call.1} parent=879 // loop_header
            %s1540 = sphi 0, %s1544
            %p1541 = scmp.ge.s32.totalorder %s1540, 1
            %s1545 = sphi %s1528, %s1528
            %s1546 = sphi %s1529, %s1529
          $region883: #{tpu_custom_call.1} parent=879 // loop_header_branch
            %1543 = sbr.rel (%p1541) target = $region887
          $region884: #{tpu_custom_call.1} parent=879 // loop_body
            %v1547 = vld [vmem:[%s1545] sm:%s1538]
            %1548 = vst [vmem:[%s1546] sm:%s1538] %v1547
          $region885: #{tpu_custom_call.1} parent=879 // loop_footer
            %s1544 = sadd.s32 1, %s1540
          $region886: #{tpu_custom_call.1} parent=879 // loop_footer_branch
            %1539 = sbr.rel target = $region882
          $region887: #{tpu_custom_call.1} parent=879 // loop_exit
            _
        $region880: #{tpu_custom_call.1} parent=31 // pred_fallthru
          _
        // Predicated region
        $region899: #{tpu_custom_call.1} parent=31 // pred_check
          _
        $region900: #{tpu_custom_call.1} parent=31 // pred_check_branch
          %1572 = sbr.rel (0) target = $region902
        $region901: #{tpu_custom_call.1} parent=31 // pred_region
          %1573 = vsyncadd %s1337, 16
        $region902: #{tpu_custom_call.1} parent=31 // pred_fallthru
          _
        %s1574 = sadd.s32 %s180, 29
        %s1575 = sld [smem:[#allocation5 + %s1574]]
        %s1576 = scalar_lea.vmem %s2, %s1575
        %s1577 = scalar_lea.vmem [#allocation2], 29
        %p1579 = scmp.lt.u32.totalorder 1, 8
        %p1580 = pneg %p1579
        // Predicated region
        $region903: #{tpu_custom_call.1} parent=31 // pred_check
          _
        $region904: #{tpu_custom_call.1} parent=31 // pred_check_branch
          %1582 = sbr.rel (%p1579) target = $region906
        $region905: #{tpu_custom_call.1} parent=31 // pred_region
          %s1597 = sand.u32 1, 7
          %p1598 = scmp.eq.s32.totalorder %s1597, 0
          %p1599 = pneg %p1598
          // Predicated region
          $region918: #{tpu_custom_call.1} parent=905 // pred_check
            _
          $region919: #{tpu_custom_call.1} parent=905 // pred_check_branch
            %1601 = sbr.rel (%p1598) target = $region921
          $region920: #{tpu_custom_call.1} parent=905 // pred_region
            %s1602 = sand.u32 1, 7
            %s1603 = ssub.s32 1, %s1602
            %s1604 = scalar_lea.vmem %s1576, %s1603
            %s1605 = ssub.s32 1, %s1602
            %s1606 = scalar_lea.vmem %s1577, %s1605 [#allocation2]
            %s1607 = sshllo.u32 0, %s1602
            loop: start=0, step=1, limit=1
            $region922: #{tpu_custom_call.1} parent=920 // loop_pre_header
              _
            $region923: #{tpu_custom_call.1} parent=920 // loop_header
              %s1609 = sphi 0, %s1613
              %p1610 = scmp.ge.s32.totalorder %s1609, 1
              %s1614 = sphi %s1604, %s1604
              %s1615 = sphi %s1606, %s1606
            $region924: #{tpu_custom_call.1} parent=920 // loop_header_branch
              %1612 = sbr.rel (%p1610) target = $region928
            $region925: #{tpu_custom_call.1} parent=920 // loop_body
              %v1616 = vld [vmem:[%s1614] sm:%s1607]
              %1617 = vst [vmem:[%s1615] sm:%s1607] %v1616
            $region926: #{tpu_custom_call.1} parent=920 // loop_footer
              %s1613 = sadd.s32 1, %s1609
            $region927: #{tpu_custom_call.1} parent=920 // loop_footer_branch
              %1608 = sbr.rel target = $region923
            $region928: #{tpu_custom_call.1} parent=920 // loop_exit
              _
          $region921: #{tpu_custom_call.1} parent=905 // pred_fallthru
            _
        $region906: #{tpu_custom_call.1} parent=31 // pred_fallthru
          _
        // Predicated region
        $region907: #{tpu_custom_call.1} parent=31 // pred_check
          %p1583 = pneg %p1579
        $region908: #{tpu_custom_call.1} parent=31 // pred_check_branch
          %1585 = sbr.rel (%p1583) target = $region910
        $region909: #{tpu_custom_call.1} parent=31 // pred_region
          %s1586 = sshllo.u32 0, 1
          loop: start=0, step=1, limit=1
          $region911: #{tpu_custom_call.1} parent=909 // loop_pre_header
            _
          $region912: #{tpu_custom_call.1} parent=909 // loop_header
            %s1588 = sphi 0, %s1592
            %p1589 = scmp.ge.s32.totalorder %s1588, 1
            %s1593 = sphi %s1576, %s1576
            %s1594 = sphi %s1577, %s1577
          $region913: #{tpu_custom_call.1} parent=909 // loop_header_branch
            %1591 = sbr.rel (%p1589) target = $region917
          $region914: #{tpu_custom_call.1} parent=909 // loop_body
            %v1595 = vld [vmem:[%s1593] sm:%s1586]
            %1596 = vst [vmem:[%s1594] sm:%s1586] %v1595
          $region915: #{tpu_custom_call.1} parent=909 // loop_footer
            %s1592 = sadd.s32 1, %s1588
          $region916: #{tpu_custom_call.1} parent=909 // loop_footer_branch
            %1587 = sbr.rel target = $region912
          $region917: #{tpu_custom_call.1} parent=909 // loop_exit
            _
        $region910: #{tpu_custom_call.1} parent=31 // pred_fallthru
          _
        // Predicated region
        $region929: #{tpu_custom_call.1} parent=31 // pred_check
          _
        $region930: #{tpu_custom_call.1} parent=31 // pred_check_branch
          %1620 = sbr.rel (0) target = $region932
        $region931: #{tpu_custom_call.1} parent=31 // pred_region
          %1621 = vsyncadd %s1337, 16
        $region932: #{tpu_custom_call.1} parent=31 // pred_fallthru
          _
        %s1622 = sadd.s32 %s180, 30
        %s1623 = sld [smem:[#allocation5 + %s1622]]
        %s1624 = scalar_lea.vmem %s2, %s1623
        %s1625 = scalar_lea.vmem [#allocation2], 30
        %p1627 = scmp.lt.u32.totalorder 1, 8
        %p1628 = pneg %p1627
        // Predicated region
        $region933: #{tpu_custom_call.1} parent=31 // pred_check
          _
        $region934: #{tpu_custom_call.1} parent=31 // pred_check_branch
          %1630 = sbr.rel (%p1627) target = $region936
        $region935: #{tpu_custom_call.1} parent=31 // pred_region
          %s1645 = sand.u32 1, 7
          %p1646 = scmp.eq.s32.totalorder %s1645, 0
          %p1647 = pneg %p1646
          // Predicated region
          $region948: #{tpu_custom_call.1} parent=935 // pred_check
            _
          $region949: #{tpu_custom_call.1} parent=935 // pred_check_branch
            %1649 = sbr.rel (%p1646) target = $region951
          $region950: #{tpu_custom_call.1} parent=935 // pred_region
            %s1650 = sand.u32 1, 7
            %s1651 = ssub.s32 1, %s1650
            %s1652 = scalar_lea.vmem %s1624, %s1651
            %s1653 = ssub.s32 1, %s1650
            %s1654 = scalar_lea.vmem %s1625, %s1653 [#allocation2]
            %s1655 = sshllo.u32 0, %s1650
            loop: start=0, step=1, limit=1
            $region952: #{tpu_custom_call.1} parent=950 // loop_pre_header
              _
            $region953: #{tpu_custom_call.1} parent=950 // loop_header
              %s1657 = sphi 0, %s1661
              %p1658 = scmp.ge.s32.totalorder %s1657, 1
              %s1662 = sphi %s1652, %s1652
              %s1663 = sphi %s1654, %s1654
            $region954: #{tpu_custom_call.1} parent=950 // loop_header_branch
              %1660 = sbr.rel (%p1658) target = $region958
            $region955: #{tpu_custom_call.1} parent=950 // loop_body
              %v1664 = vld [vmem:[%s1662] sm:%s1655]
              %1665 = vst [vmem:[%s1663] sm:%s1655] %v1664
            $region956: #{tpu_custom_call.1} parent=950 // loop_footer
              %s1661 = sadd.s32 1, %s1657
            $region957: #{tpu_custom_call.1} parent=950 // loop_footer_branch
              %1656 = sbr.rel target = $region953
            $region958: #{tpu_custom_call.1} parent=950 // loop_exit
              _
          $region951: #{tpu_custom_call.1} parent=935 // pred_fallthru
            _
        $region936: #{tpu_custom_call.1} parent=31 // pred_fallthru
          _
        // Predicated region
        $region937: #{tpu_custom_call.1} parent=31 // pred_check
          %p1631 = pneg %p1627
        $region938: #{tpu_custom_call.1} parent=31 // pred_check_branch
          %1633 = sbr.rel (%p1631) target = $region940
        $region939: #{tpu_custom_call.1} parent=31 // pred_region
          %s1634 = sshllo.u32 0, 1
          loop: start=0, step=1, limit=1
          $region941: #{tpu_custom_call.1} parent=939 // loop_pre_header
            _
          $region942: #{tpu_custom_call.1} parent=939 // loop_header
            %s1636 = sphi 0, %s1640
            %p1637 = scmp.ge.s32.totalorder %s1636, 1
            %s1641 = sphi %s1624, %s1624
            %s1642 = sphi %s1625, %s1625
          $region943: #{tpu_custom_call.1} parent=939 // loop_header_branch
            %1639 = sbr.rel (%p1637) target = $region947
          $region944: #{tpu_custom_call.1} parent=939 // loop_body
            %v1643 = vld [vmem:[%s1641] sm:%s1634]
            %1644 = vst [vmem:[%s1642] sm:%s1634] %v1643
          $region945: #{tpu_custom_call.1} parent=939 // loop_footer
            %s1640 = sadd.s32 1, %s1636
          $region946: #{tpu_custom_call.1} parent=939 // loop_footer_branch
            %1635 = sbr.rel target = $region942
          $region947: #{tpu_custom_call.1} parent=939 // loop_exit
            _
        $region940: #{tpu_custom_call.1} parent=31 // pred_fallthru
          _
        // Predicated region
        $region959: #{tpu_custom_call.1} parent=31 // pred_check
          _
        $region960: #{tpu_custom_call.1} parent=31 // pred_check_branch
          %1668 = sbr.rel (0) target = $region962
        $region961: #{tpu_custom_call.1} parent=31 // pred_region
          %1669 = vsyncadd %s1337, 16
        $region962: #{tpu_custom_call.1} parent=31 // pred_fallthru
          _
        %s1670 = sadd.s32 %s180, 31
        %s1671 = sld [smem:[#allocation5 + %s1670]]
        %s1672 = scalar_lea.vmem %s2, %s1671
        %s1673 = scalar_lea.vmem [#allocation2], 31
        %p1675 = scmp.lt.u32.totalorder 1, 8
        %p1676 = pneg %p1675
        // Predicated region
        $region963: #{tpu_custom_call.1} parent=31 // pred_check
          _
        $region964: #{tpu_custom_call.1} parent=31 // pred_check_branch
          %1678 = sbr.rel (%p1675) target = $region966
        $region965: #{tpu_custom_call.1} parent=31 // pred_region
          %s1693 = sand.u32 1, 7
          %p1694 = scmp.eq.s32.totalorder %s1693, 0
          %p1695 = pneg %p1694
          // Predicated region
          $region978: #{tpu_custom_call.1} parent=965 // pred_check
            _
          $region979: #{tpu_custom_call.1} parent=965 // pred_check_branch
            %1697 = sbr.rel (%p1694) target = $region981
          $region980: #{tpu_custom_call.1} parent=965 // pred_region
            %s1698 = sand.u32 1, 7
            %s1699 = ssub.s32 1, %s1698
            %s1700 = scalar_lea.vmem %s1672, %s1699
            %s1701 = ssub.s32 1, %s1698
            %s1702 = scalar_lea.vmem %s1673, %s1701 [#allocation2]
            %s1703 = sshllo.u32 0, %s1698
            loop: start=0, step=1, limit=1
            $region982: #{tpu_custom_call.1} parent=980 // loop_pre_header
              _
            $region983: #{tpu_custom_call.1} parent=980 // loop_header
              %s1705 = sphi 0, %s1709
              %p1706 = scmp.ge.s32.totalorder %s1705, 1
              %s1710 = sphi %s1700, %s1700
              %s1711 = sphi %s1702, %s1702
            $region984: #{tpu_custom_call.1} parent=980 // loop_header_branch
              %1708 = sbr.rel (%p1706) target = $region988
            $region985: #{tpu_custom_call.1} parent=980 // loop_body
              %v1712 = vld [vmem:[%s1710] sm:%s1703]
              %1713 = vst [vmem:[%s1711] sm:%s1703] %v1712
            $region986: #{tpu_custom_call.1} parent=980 // loop_footer
              %s1709 = sadd.s32 1, %s1705
            $region987: #{tpu_custom_call.1} parent=980 // loop_footer_branch
              %1704 = sbr.rel target = $region983
            $region988: #{tpu_custom_call.1} parent=980 // loop_exit
              _
          $region981: #{tpu_custom_call.1} parent=965 // pred_fallthru
            _
        $region966: #{tpu_custom_call.1} parent=31 // pred_fallthru
          _
        // Predicated region
        $region967: #{tpu_custom_call.1} parent=31 // pred_check
          %p1679 = pneg %p1675
        $region968: #{tpu_custom_call.1} parent=31 // pred_check_branch
          %1681 = sbr.rel (%p1679) target = $region970
        $region969: #{tpu_custom_call.1} parent=31 // pred_region
          %s1682 = sshllo.u32 0, 1
          loop: start=0, step=1, limit=1
          $region971: #{tpu_custom_call.1} parent=969 // loop_pre_header
            _
          $region972: #{tpu_custom_call.1} parent=969 // loop_header
            %s1684 = sphi 0, %s1688
            %p1685 = scmp.ge.s32.totalorder %s1684, 1
            %s1689 = sphi %s1672, %s1672
            %s1690 = sphi %s1673, %s1673
          $region973: #{tpu_custom_call.1} parent=969 // loop_header_branch
            %1687 = sbr.rel (%p1685) target = $region977
          $region974: #{tpu_custom_call.1} parent=969 // loop_body
            %v1691 = vld [vmem:[%s1689] sm:%s1682]
            %1692 = vst [vmem:[%s1690] sm:%s1682] %v1691
          $region975: #{tpu_custom_call.1} parent=969 // loop_footer
            %s1688 = sadd.s32 1, %s1684
          $region976: #{tpu_custom_call.1} parent=969 // loop_footer_branch
            %1683 = sbr.rel target = $region972
          $region977: #{tpu_custom_call.1} parent=969 // loop_exit
            _
        $region970: #{tpu_custom_call.1} parent=31 // pred_fallthru
          _
        // Predicated region
        $region989: #{tpu_custom_call.1} parent=31 // pred_check
          _
        $region990: #{tpu_custom_call.1} parent=31 // pred_check_branch
          %1716 = sbr.rel (0) target = $region992
        $region991: #{tpu_custom_call.1} parent=31 // pred_region
          %1717 = vsyncadd %s1337, 16
        $region992: #{tpu_custom_call.1} parent=31 // pred_fallthru
          _
        %v1718 = vld [vmem:[%s3] sm:$0x3]
        %v1719 = vld [vmem:[%s177] sm:$0xff]
        %v1720 = vld [vmem:[%s177 + $0x8] sm:$0xff]
        %v1721 = vld [vmem:[%s177 + $0x10] sm:$0xff]
        %v1722 = vld [vmem:[%s177 + $0x18] sm:$0xff]
        %v1723 = vcvt.s32.f32 %v1719
        %v1724 = vcvt.s32.f32 %v1720
        %v1725 = vcvt.s32.f32 %v1721
        %v1726 = vcvt.s32.f32 %v1722
        %v1728 = vrot.slane %v1718, 7
        %v1730 = vsub.f32 %v1718, %v1728
        %1732 = vset.pattern.permute.xlu0 0
        %1733 = vperm.xlu0 %1732, %v1723
        %v1734 = vpop.permute.xlu0 %1733
        %1737 = vset.pattern.permute.xlu0 0
        %1738 = vperm.xlu0 %1737, %v1724
        %v1739 = vpop.permute.xlu0 %1738
        %1742 = vset.pattern.permute.xlu0 0
        %1743 = vperm.xlu0 %1742, %v1725
        %v1744 = vpop.permute.xlu0 %1743
        %1747 = vset.pattern.permute.xlu0 0
        %1748 = vperm.xlu0 %1747, %v1726
        %v1749 = vpop.permute.xlu0 %1748
        %v1751 = vlaneseq
        %v1752 = vshrl.u32 %v1751, 7
        %v1753 = vsub.s32 1, %v1752
        %v1754 = vrot.slane %v1730, %v1753
        %v1755 = vmul.f32 %v1734, %v1754
        %v1756 = vmul.f32 %v1739, %v1754
        %v1757 = vmul.f32 %v1744, %v1754
        %v1758 = vmul.f32 %v1749, %v1754
        %v1759 = vlaneseq
        %v1760 = vshrl.u32 %v1759, 7
        %v1761 = vsub.s32 0, %v1760
        %v1762 = vrot.slane %v1718, %v1761
        %v1763 = vadd.f32 %v1762, %v1755
        %v1764 = vadd.f32 %v1762, %v1756
        %v1765 = vadd.f32 %v1762, %v1757
        %v1766 = vadd.f32 %v1762, %v1758
        %v1767 = vld [vmem:[%s4] sm:$0x1]
        %v1768 = vld [vmem:[%s4 + $0x1] sm:$0x1]
        %s1769 = smul.u32 8, 1
        %s1770 = sshll.u32 %s1769, 4
        %1771 = dma.done [#allocation3], %s1770
        %v1772 = vld [vmem:[#allocation2] sm:$0xff]
        %v1773 = vadd.f32 %v1772, %v1763
        %1774 = vadd.xlane.f32.xlu0 %v1773
        %v1775 = vpop.xlane.xlu0 %1774
        %v1776 = vmul.f32 %v1775, 0.0078125
        %v1777 = vsub.f32 %v1773, %v1776
        %v1778 = vmul.f32 %v1777, %v1777
        %1779 = vadd.xlane.f32.xlu0 %v1778
        %v1780 = vpop.xlane.xlu0 %1779
        %v1781 = vmul.f32 %v1780, 0.0078125
        %v1782 = vadd.f32 %v1781, 1e-12
        %v1783 = vrsqrt.pop %v1782
        %v1784 = vmul.f32 %v1777, %v1783
        %v1785 = vlaneseq
        %v1786 = vshrl.u32 %v1785, 7
        %v1787 = vsub.s32 0, %v1786
        %v1788 = vrot.slane %v1767, %v1787
        %v1789 = vmul.f32 %v1784, %v1788
        %v1790 = vlaneseq
        %v1791 = vshrl.u32 %v1790, 7
        %v1792 = vsub.s32 0, %v1791
        %v1793 = vrot.slane %v1768, %v1792
        %v1794 = vadd.f32 %v1789, %v1793
        %1795 = vst [vmem:[%s172] sm:$0xff] %v1794
        %s1796 = sshll.u32 %s1769, 4
        %1797 = dma.done %s567, %s1796
        %v1798 = vld [vmem:[#allocation2 + $0x8] sm:$0xff]
        %v1799 = vadd.f32 %v1798, %v1764
        %1800 = vadd.xlane.f32.xlu0 %v1799
        %v1801 = vpop.xlane.xlu0 %1800
        %v1802 = vmul.f32 %v1801, 0.0078125
        %v1803 = vsub.f32 %v1799, %v1802
        %v1804 = vmul.f32 %v1803, %v1803
        %1805 = vadd.xlane.f32.xlu0 %v1804
        %v1806 = vpop.xlane.xlu0 %1805
        %v1807 = vmul.f32 %v1806, 0.0078125
        %v1808 = vadd.f32 %v1807, 1e-12
        %v1809 = vrsqrt.pop %v1808
        %v1810 = vmul.f32 %v1803, %v1809
        %v1811 = vmul.f32 %v1810, %v1788
        %v1812 = vadd.f32 %v1811, %v1793
        %1813 = vst [vmem:[%s172 + $0x8] sm:$0xff] %v1812
        %s1814 = sshll.u32 %s1769, 4
        %1815 = dma.done %s952, %s1814
        %v1816 = vld [vmem:[#allocation2 + $0x10] sm:$0xff]
        %v1817 = vadd.f32 %v1816, %v1765
        %1818 = vadd.xlane.f32.xlu0 %v1817
        %v1819 = vpop.xlane.xlu0 %1818
        %v1820 = vmul.f32 %v1819, 0.0078125
        %v1821 = vsub.f32 %v1817, %v1820
        %v1822 = vmul.f32 %v1821, %v1821
        %1823 = vadd.xlane.f32.xlu0 %v1822
        %v1824 = vpop.xlane.xlu0 %1823
        %v1825 = vmul.f32 %v1824, 0.0078125
        %v1826 = vadd.f32 %v1825, 1e-12
        %v1827 = vrsqrt.pop %v1826
        %v1828 = vmul.f32 %v1821, %v1827
        %v1829 = vmul.f32 %v1828, %v1788
        %v1830 = vadd.f32 %v1829, %v1793
        %1831 = vst [vmem:[%s172 + $0x10] sm:$0xff] %v1830
        %s1832 = sshll.u32 %s1769, 4
        %1833 = dma.done %s1337, %s1832
        %v1834 = vld [vmem:[#allocation2 + $0x18] sm:$0xff]
        %v1835 = vadd.f32 %v1834, %v1766
        %1836 = vadd.xlane.f32.xlu0 %v1835
        %v1837 = vpop.xlane.xlu0 %1836
        %v1838 = vmul.f32 %v1837, 0.0078125
        %v1839 = vsub.f32 %v1835, %v1838
        %v1840 = vmul.f32 %v1839, %v1839
        %1841 = vadd.xlane.f32.xlu0 %v1840
        %v1842 = vpop.xlane.xlu0 %1841
        %v1843 = vmul.f32 %v1842, 0.0078125
        %v1844 = vadd.f32 %v1843, 1e-12
        %v1845 = vrsqrt.pop %v1844
        %v1846 = vmul.f32 %v1839, %v1845
        %v1847 = vmul.f32 %v1846, %v1788
        %v1848 = vadd.f32 %v1847, %v1793
        %1849 = vst [vmem:[%s172 + $0x18] sm:$0xff] %v1848
        %s1850 = sand.u32 %s101, 1
        %s1851 = scalar_lea.sflag [#allocation7], %s1850
        %s1852 = sand.u32 %s101, 1
        %s1853 = smul.addr %s1852, 32
        %s1854 = scalar_lea.vmem [#allocation6], %s1853
        // Predicated region
        $region993: #{tpu_custom_call.1} parent=31 // pred_check
          %p1855 = pneg %p111
        $region994: #{tpu_custom_call.1} parent=31 // pred_check_branch
          %1857 = sbr.rel (%p1855) target = $region996
        $region995: #{tpu_custom_call.1} parent=31 // pred_region
          %s1858 = smul.u32 4, %s25
          %s1860 = ssub.s32 512, 512
          %1861 = vsyncadd %s1851, %s1860
          %s1862 = smul.addr %s1858, 128
          %s1863 = scalar_lea.hbm %s5, %s1862
          %s1864 = sshll.u32 %s1854, 4
          %s1865 = int_to_ptr.vmem [resolvable:$true] %s1864
          %1870 = dma.vmem_to_hbm [thread:$0]  %s1865, 512, %s1863, %s1851, 128, 128, 8
        $region996: #{tpu_custom_call.1} parent=31 // pred_fallthru
          _
      $region32: #{tpu_custom_call.1} parent=5 // pred_fallthru
        _
      %p1871 = scmp.le.s32.totalorder 2, %s20
      // Predicated region
      $region997: #{tpu_custom_call.1} parent=5 // pred_check
        %p1872 = pneg %p1871
      $region998: #{tpu_custom_call.1} parent=5 // pred_check_branch
        %1874 = sbr.rel (%p1872) target = $region1000
      $region999: #{tpu_custom_call.1} parent=5 // pred_region
        %s1875 = ssub.s32 %s20, 2
        // Predicated region
        $region1001: #{tpu_custom_call.1} parent=999 // pred_check
          %p1876 = pneg %p117
        $region1002: #{tpu_custom_call.1} parent=999 // pred_check_branch
          %1878 = sbr.rel (%p1876) target = $region1004
        $region1003: #{tpu_custom_call.1} parent=999 // pred_region
          %s1879 = sand.u32 %s102, 1
          %s1880 = scalar_lea.sflag [#allocation7], %s1879
          %s1881 = sand.u32 %s102, 1
          %s1882 = smul.addr %s1881, 32
          %s1883 = scalar_lea.vmem [#allocation6], %s1882
          %1884 = dma.done %s1880, 512
        $region1004: #{tpu_custom_call.1} parent=999 // pred_fallthru
          _
      $region1000: #{tpu_custom_call.1} parent=5 // pred_fallthru
        _
    $region6: #{tpu_custom_call.1} parent=1 // loop_footer
      %s24 = sadd.s32 1, %s20
    $region7: #{tpu_custom_call.1} parent=1 // loop_footer_branch
      %19 = sbr.rel target = $region3
    $region8: #{tpu_custom_call.1} parent=1 // loop_exit
      _
    %1885 = vsyncpa [#allocation7], 1
    %s1886 = scalar_lea.sflag [#allocation7], 1
    %1887 = vsyncpa %s1886, 1
  %1888 = vsyncmov [#allocation3]
  %s1889 = vpop.sfrf %1888
  %p1890 = scmp.eq.s32.totalorder %s1889, 0
  %p1891 = pneg %p1890
  %1893 = shalt.err (%p1891)
  %s1894 = scalar_lea.sflag [#allocation3], 1
  %1895 = vsyncmov %s1894
  %s1896 = vpop.sfrf %1895
  %p1897 = scmp.eq.s32.totalorder %s1896, 0
  %p1898 = pneg %p1897
  %1900 = shalt.err (%p1898)
  %s1901 = scalar_lea.sflag [#allocation3], 2
  %1902 = vsyncmov %s1901
  %s1903 = vpop.sfrf %1902
  %p1904 = scmp.eq.s32.totalorder %s1903, 0
  %p1905 = pneg %p1904
  %1907 = shalt.err (%p1905)
  %s1908 = scalar_lea.sflag [#allocation3], 3
  %1909 = vsyncmov %s1908
  %s1910 = vpop.sfrf %1909
  %p1911 = scmp.eq.s32.totalorder %s1910, 0
  %p1912 = pneg %p1911
  %1914 = shalt.err (%p1912)

</llo_original>
